<compile_context>
chip_gen: v7x
topology: tpu7x:2x2x1
jax: 0.10.0
libtpu: 0.0.40
codegen_flags: <defaults>
</compile_context>

<pallas_src>
import functools

import jax
import jax.numpy as jnp
from jax.experimental import pallas as pl
from jax.experimental.pallas import tpu as pltpu

NUM_LAYERS = 2
NUM_GRAPHS = 8         # total graphs in the batch
GRAPHS_PER_BLOCK = 4   # B graphs per grid step -> grid = (2,) parallel steps
N_NODES = 128          # nodes per graph (matches 128-wide MXU / sublane tiling)
DIM = 128              # in_dim == out_dim, lane-dense (multiple of 128)


def gin_kernel(x_ref, adj_ref, w1_ref, b1_ref, w2_ref, b2_ref, eps_ref,
               o_ref, *, num_layers):
    """All GIN layers for a block of B graphs; everything VMEM-resident."""
    b, n, d = x_ref.shape

    adj = adj_ref[...]          # (B, N, N) bf16 — MXU operand, no upcast
    w1 = w1_ref[...]            # (D, D) bf16
    w2 = w2_ref[...]            # (D, D) bf16
    b1 = b1_ref[...]            # (1, D) f32 — broadcast folds into the VPU add
    b2 = b2_ref[...]            # (1, D) f32
    eps = eps_ref[0]            # f32 scalar from SMEM

    # Running activations kept in f32; cast to bf16 only at MXU operand time.
    x = x_ref[...].astype(jnp.float32)          # (B, N, D)

    # num_layers is a static Python int -> unrolled at trace time.
    for _ in range(num_layers):
        # Aggregation per graph: agg = adj @ x   (bf16 operands, f32 accum)
        agg = jnp.einsum("bnm,bmd->bnd", adj, x.astype(jnp.bfloat16),
                         preferred_element_type=jnp.float32)
        h = x + eps * agg                                    # (B, N, D) f32

        # MLP stacked across graphs: one long-M matmul per linear layer.
        h_flat = h.reshape(b * n, d).astype(jnp.bfloat16)    # (B*N, D)
        h1 = jnp.dot(h_flat, w1, preferred_element_type=jnp.float32) + b1
        h1 = jnp.maximum(h1, 0.0)
        x_flat = jnp.dot(h1.astype(jnp.bfloat16), w2,
                         preferred_element_type=jnp.float32) + b2
        x = x_flat.reshape(b, n, d)

    o_ref[...] = x.astype(o_ref.dtype)


def gin_forward(x, adj, w1, b1, w2, b2, epsilon, *,
                num_layers=NUM_LAYERS, graphs_per_block=GRAPHS_PER_BLOCK):
    g, n, d = x.shape
    assert g % graphs_per_block == 0, "batch must divide evenly into blocks"
    bsz = graphs_per_block
    grid = (g // bsz,)

    # bf16 MXU operands; biases / epsilon / output stay f32.
    x_bf = x.astype(jnp.bfloat16)
    adj_bf = adj.astype(jnp.bfloat16)
    w1_bf = w1.astype(jnp.bfloat16)
    w2_bf = w2.astype(jnp.bfloat16)
    b1_2d = b1.reshape(1, d).astype(jnp.float32)
    b2_2d = b2.reshape(1, d).astype(jnp.float32)
    eps_1d = epsilon.reshape(1).astype(jnp.float32)

    kernel = functools.partial(gin_kernel, num_layers=num_layers)

    # Advisory cost hint for XLA's scheduler around the custom call.
    flops = 2 * num_layers * g * 3 * n * n * d          # 3 matmuls / graph / layer
    bytes_accessed = (x_bf.size * 2 + adj_bf.size * 2 + w1_bf.size * 2
                      + w2_bf.size * 2 + b1_2d.size * 4 + b2_2d.size * 4
                      + g * n * d * 4)                  # f32 output writeback
    cost = pl.CostEstimate(flops=flops, transcendentals=0,
                           bytes_accessed=bytes_accessed)

    return pl.pallas_call(
        kernel,
        out_shape=jax.ShapeDtypeStruct((g, n, d), jnp.float32),
        grid_spec=pltpu.PrefetchScalarGridSpec(
            num_scalar_prefetch=0,
            grid=grid,
            in_specs=[
                pl.BlockSpec((bsz, n, d), lambda i: (i, 0, 0)),  # x   (per block)
                pl.BlockSpec((bsz, n, n), lambda i: (i, 0, 0)),  # adj (per block)
                pl.BlockSpec((d, d), lambda i: (0, 0)),          # W1  (resident)
                pl.BlockSpec((1, d), lambda i: (0, 0)),          # b1  (resident)
                pl.BlockSpec((d, d), lambda i: (0, 0)),          # W2  (resident)
                pl.BlockSpec((1, d), lambda i: (0, 0)),          # b2  (resident)
                pl.BlockSpec(memory_space=pltpu.MemorySpace.SMEM),  # epsilon
            ],
            out_specs=pl.BlockSpec((bsz, n, d), lambda i: (i, 0, 0)),
        ),
        compiler_params=pltpu.CompilerParams(
            dimension_semantics=("parallel",)),
        cost_estimate=cost,
    )(x_bf, adj_bf, w1_bf, b1_2d, w2_bf, b2_2d, eps_1d)


def gin_reference(x, adj, w1, b1, w2, b2, epsilon, *, num_layers=NUM_LAYERS):
    """Plain-JAX reference mirroring the kernel's bf16-operand / f32-accum math."""
    eps = epsilon[0]
    adj_bf = adj.astype(jnp.bfloat16)
    w1_bf = w1.astype(jnp.bfloat16)
    w2_bf = w2.astype(jnp.bfloat16)
    xf = x.astype(jnp.bfloat16).astype(jnp.float32)
    for _ in range(num_layers):
        agg = jnp.einsum("gnm,gmd->gnd", adj_bf, xf.astype(jnp.bfloat16),
                         preferred_element_type=jnp.float32)
        h = xf + eps * agg
        h1 = jnp.maximum(
            jnp.dot(h.astype(jnp.bfloat16), w1_bf,
                    preferred_element_type=jnp.float32) + b1, 0.0)
        xf = jnp.dot(h1.astype(jnp.bfloat16), w2_bf,
                     preferred_element_type=jnp.float32) + b2
    return xf


if __name__ == "__main__":
    key = jax.random.PRNGKey(0)
    k_x, k_adj, k_w1, k_b1, k_w2, k_b2 = jax.random.split(key, 6)

    x = jax.random.normal(k_x, (NUM_GRAPHS, N_NODES, DIM), dtype=jnp.float32)
    # Symmetric 0/1 adjacency per graph (no self loops required by the module).
    a = (jax.random.uniform(k_adj, (NUM_GRAPHS, N_NODES, N_NODES)) < 0.1)
    a = a.astype(jnp.float32)
    adj = jnp.maximum(a, jnp.swapaxes(a, -1, -2))

    # Parameters (deterministic init). nn.Linear(in, out) stores weight as
    # (out, in); we store the transpose (in, out) so the kernel does x @ W + b.
    bound = 1.0 / jnp.sqrt(DIM)
    w1 = jax.random.uniform(k_w1, (DIM, DIM), minval=-bound, maxval=bound,
                            dtype=jnp.float32)
    b1 = jax.random.uniform(k_b1, (DIM,), minval=-bound, maxval=bound,
                            dtype=jnp.float32)
    w2 = jax.random.uniform(k_w2, (DIM, DIM), minval=-bound, maxval=bound,
                            dtype=jnp.float32)
    b2 = jax.random.uniform(k_b2, (DIM,), minval=-bound, maxval=bound,
                            dtype=jnp.float32)
    # PyTorch __init__ sets epsilon = 0.0; use a nonzero deterministic value so
    # the adjacency-aggregation path is actually exercised numerically.
    epsilon = jnp.array([0.1], dtype=jnp.float32)

    out = gin_forward(x, adj, w1, b1, w2, b2, epsilon)
    out = jax.block_until_ready(out)

    ref = gin_reference(x, adj, w1, b1, w2, b2, epsilon)
    assert out.shape == (NUM_GRAPHS, N_NODES, DIM)
    assert jnp.allclose(out, ref, atol=1e-2, rtol=1e-2), "mismatch vs reference"

    print("KERNEL_OK")
</pallas_src>

<mosaic_0001>
module attributes {stable_mosaic.version = 11 : i64} {
  func.func @gin_kernel(%arg0: i32, %arg1: memref<4x128x128xbf16, #tpu.memory_space<vmem>>, %arg2: memref<4x128x128xbf16, #tpu.memory_space<vmem>>, %arg3: memref<128x128xbf16, #tpu.memory_space<vmem>>, %arg4: memref<1x128xf32, #tpu.memory_space<vmem>>, %arg5: memref<128x128xbf16, #tpu.memory_space<vmem>>, %arg6: memref<1x128xf32, #tpu.memory_space<vmem>>, %arg7: memref<1xf32, #tpu.memory_space<smem>>, %arg8: memref<4x128x128xf32, #tpu.memory_space<vmem>>) attributes {dimension_semantics = [#tpu.dimension_semantics<parallel>], iteration_bounds = array<i64: 2>, scalar_prefetch = 0 : i64, scratch_operands = 0 : i64, tpu.core_type = #tpu.core_type<tc>, window_params = [{transform_indices = @transform_0, window_bounds = array<i64: 4, 128, 128>}, {transform_indices = @transform_1, window_bounds = array<i64: 4, 128, 128>}, {pipeline_mode = #tpu.pipeline_mode<synchronous>, transform_indices = @transform_2, window_bounds = array<i64: 128, 128>}, {pipeline_mode = #tpu.pipeline_mode<synchronous>, transform_indices = @transform_3, window_bounds = array<i64: 1, 128>}, {pipeline_mode = #tpu.pipeline_mode<synchronous>, transform_indices = @transform_4, window_bounds = array<i64: 128, 128>}, {pipeline_mode = #tpu.pipeline_mode<synchronous>, transform_indices = @transform_5, window_bounds = array<i64: 1, 128>}, {transform_indices = @transform_6, window_bounds = array<i64: 1>}, {transform_indices = @transform_7, window_bounds = array<i64: 4, 128, 128>}]} {
    %c0 = arith.constant 0 : index
    %c0_0 = arith.constant 0 : index
    %c0_1 = arith.constant 0 : index
    %0 = vector.load %arg2[%c0, %c0_0, %c0_1] : memref<4x128x128xbf16, #tpu.memory_space<vmem>>, vector<4x128x128xbf16>
    %c0_2 = arith.constant 0 : index
    %c0_3 = arith.constant 0 : index
    %1 = vector.load %arg3[%c0_2, %c0_3] : memref<128x128xbf16, #tpu.memory_space<vmem>>, vector<128x128xbf16>
    %c0_4 = arith.constant 0 : index
    %c0_5 = arith.constant 0 : index
    %2 = vector.load %arg5[%c0_4, %c0_5] : memref<128x128xbf16, #tpu.memory_space<vmem>>, vector<128x128xbf16>
    %c0_6 = arith.constant 0 : index
    %c0_7 = arith.constant 0 : index
    %3 = vector.load %arg4[%c0_6, %c0_7] : memref<1x128xf32, #tpu.memory_space<vmem>>, vector<1x128xf32>
    %c0_8 = arith.constant 0 : index
    %c0_9 = arith.constant 0 : index
    %4 = vector.load %arg6[%c0_8, %c0_9] : memref<1x128xf32, #tpu.memory_space<vmem>>, vector<1x128xf32>
    %c0_10 = arith.constant 0 : index
    %5 = memref.load %arg7[%c0_10] : memref<1xf32, #tpu.memory_space<smem>>
    %c0_11 = arith.constant 0 : index
    %c0_12 = arith.constant 0 : index
    %c0_13 = arith.constant 0 : index
    %6 = vector.load %arg1[%c0_11, %c0_12, %c0_13] : memref<4x128x128xbf16, #tpu.memory_space<vmem>>, vector<4x128x128xbf16>
    %7 = arith.extf %6 : vector<4x128x128xbf16> to vector<4x128x128xf32>
    %8 = arith.truncf %7 : vector<4x128x128xf32> to vector<4x128x128xbf16>
    "tpu.trace_start"() <{level = 10 : i32, message = "bnm,bmd->bnd"}> : () -> ()
    %cst = arith.constant dense<0.000000e+00> : vector<4x128x128xf32>
    %9 = tpu.matmul %0, %8, %cst {dimension_numbers = #tpu.dot_dimension_numbers<[2], [1], [1], [2], [0, 0, 0, 1, 1, 2], [0], [0]>} : vector<4x128x128xbf16>, vector<4x128x128xbf16>, vector<4x128x128xf32> -> vector<4x128x128xf32>
    "tpu.trace_stop"() : () -> ()
    %10 = vector.broadcast %5 : f32 to vector<4x128x128xf32>
    %11 = arith.mulf %10, %9 : vector<4x128x128xf32>
    %12 = arith.addf %7, %11 : vector<4x128x128xf32>
    %13 = vector.shape_cast %12 : vector<4x128x128xf32> to vector<512x128xf32>
    %14 = arith.truncf %13 : vector<512x128xf32> to vector<512x128xbf16>
    %cst_14 = arith.constant dense<0.000000e+00> : vector<512x128xf32>
    %15 = tpu.matmul %14, %1, %cst_14 {dimension_numbers = #tpu.dot_dimension_numbers<[1], [0], [0], [1], [0, 0, 1, 1], [], []>} : vector<512x128xbf16>, vector<128x128xbf16>, vector<512x128xf32> -> vector<512x128xf32>
    %16 = vector.broadcast %3 : vector<1x128xf32> to vector<512x128xf32>
    %17 = arith.addf %15, %16 : vector<512x128xf32>
    %cst_15 = arith.constant 0.000000e+00 : f32
    %18 = vector.broadcast %cst_15 : f32 to vector<512x128xf32>
    %19 = arith.maximumf %17, %18 : vector<512x128xf32>
    %20 = arith.truncf %19 : vector<512x128xf32> to vector<512x128xbf16>
    %cst_16 = arith.constant dense<0.000000e+00> : vector<512x128xf32>
    %21 = tpu.matmul %20, %2, %cst_16 {dimension_numbers = #tpu.dot_dimension_numbers<[1], [0], [0], [1], [0, 0, 1, 1], [], []>} : vector<512x128xbf16>, vector<128x128xbf16>, vector<512x128xf32> -> vector<512x128xf32>
    %22 = vector.broadcast %4 : vector<1x128xf32> to vector<512x128xf32>
    %23 = arith.addf %21, %22 : vector<512x128xf32>
    %24 = vector.shape_cast %23 : vector<512x128xf32> to vector<4x128x128xf32>
    %25 = arith.truncf %24 : vector<4x128x128xf32> to vector<4x128x128xbf16>
    "tpu.trace_start"() <{level = 10 : i32, message = "bnm,bmd->bnd"}> : () -> ()
    %cst_17 = arith.constant dense<0.000000e+00> : vector<4x128x128xf32>
    %26 = tpu.matmul %0, %25, %cst_17 {dimension_numbers = #tpu.dot_dimension_numbers<[2], [1], [1], [2], [0, 0, 0, 1, 1, 2], [0], [0]>} : vector<4x128x128xbf16>, vector<4x128x128xbf16>, vector<4x128x128xf32> -> vector<4x128x128xf32>
    "tpu.trace_stop"() : () -> ()
    %27 = vector.broadcast %5 : f32 to vector<4x128x128xf32>
    %28 = arith.mulf %27, %26 : vector<4x128x128xf32>
    %29 = arith.addf %24, %28 : vector<4x128x128xf32>
    %30 = vector.shape_cast %29 : vector<4x128x128xf32> to vector<512x128xf32>
    %31 = arith.truncf %30 : vector<512x128xf32> to vector<512x128xbf16>
    %cst_18 = arith.constant dense<0.000000e+00> : vector<512x128xf32>
    %32 = tpu.matmul %31, %1, %cst_18 {dimension_numbers = #tpu.dot_dimension_numbers<[1], [0], [0], [1], [0, 0, 1, 1], [], []>} : vector<512x128xbf16>, vector<128x128xbf16>, vector<512x128xf32> -> vector<512x128xf32>
    %33 = vector.broadcast %3 : vector<1x128xf32> to vector<512x128xf32>
    %34 = arith.addf %32, %33 : vector<512x128xf32>
    %cst_19 = arith.constant 0.000000e+00 : f32
    %35 = vector.broadcast %cst_19 : f32 to vector<512x128xf32>
    %36 = arith.maximumf %34, %35 : vector<512x128xf32>
    %37 = arith.truncf %36 : vector<512x128xf32> to vector<512x128xbf16>
    %cst_20 = arith.constant dense<0.000000e+00> : vector<512x128xf32>
    %38 = tpu.matmul %37, %2, %cst_20 {dimension_numbers = #tpu.dot_dimension_numbers<[1], [0], [0], [1], [0, 0, 1, 1], [], []>} : vector<512x128xbf16>, vector<128x128xbf16>, vector<512x128xf32> -> vector<512x128xf32>
    %39 = vector.broadcast %4 : vector<1x128xf32> to vector<512x128xf32>
    %40 = arith.addf %38, %39 : vector<512x128xf32>
    %41 = vector.shape_cast %40 : vector<512x128xf32> to vector<4x128x128xf32>
    %c0_21 = arith.constant 0 : index
    %c0_22 = arith.constant 0 : index
    %c0_23 = arith.constant 0 : index
    %42 = vector.load %arg8[%c0_21, %c0_22, %c0_23] : memref<4x128x128xf32, #tpu.memory_space<vmem>>, vector<4x128x128xf32>
    tpu.vector_store %arg8[%c0_21, %c0_22, %c0_23], %41 {strides = array<i32>} : memref<4x128x128xf32, #tpu.memory_space<vmem>>, vector<4x128x128xf32>,
    return
  }
  func.func @transform_0(%arg0: i32) -> (i32, i32, i32) {
    %c0_i32 = arith.constant 0 : i32
    %c0_i32_0 = arith.constant 0 : i32
    %c0_i32_1 = arith.constant 0 : i32
    return %arg0, %c0_i32, %c0_i32_0 : i32, i32, i32
  }
  func.func @transform_1(%arg0: i32) -> (i32, i32, i32) {
    %c0_i32 = arith.constant 0 : i32
    %c0_i32_0 = arith.constant 0 : i32
    %c0_i32_1 = arith.constant 0 : i32
    return %arg0, %c0_i32, %c0_i32_0 : i32, i32, i32
  }
  func.func @transform_2(%arg0: i32) -> (i32, i32) {
    %c0_i32 = arith.constant 0 : i32
    %c0_i32_0 = arith.constant 0 : i32
    %c0_i32_1 = arith.constant 0 : i32
    return %c0_i32, %c0_i32_0 : i32, i32
  }
  func.func @transform_3(%arg0: i32) -> (i32, i32) {
    %c0_i32 = arith.constant 0 : i32
    %c0_i32_0 = arith.constant 0 : i32
    %c0_i32_1 = arith.constant 0 : i32
    return %c0_i32, %c0_i32_0 : i32, i32
  }
  func.func @transform_4(%arg0: i32) -> (i32, i32) {
    %c0_i32 = arith.constant 0 : i32
    %c0_i32_0 = arith.constant 0 : i32
    %c0_i32_1 = arith.constant 0 : i32
    return %c0_i32, %c0_i32_0 : i32, i32
  }
  func.func @transform_5(%arg0: i32) -> (i32, i32) {
    %c0_i32 = arith.constant 0 : i32
    %c0_i32_0 = arith.constant 0 : i32
    %c0_i32_1 = arith.constant 0 : i32
    return %c0_i32, %c0_i32_0 : i32, i32
  }
  func.func @transform_6(%arg0: i32) -> i32 {
    %c0_i32 = arith.constant 0 : i32
    %c0_i32_0 = arith.constant 0 : i32
    return %c0_i32 : i32
  }
  func.func @transform_7(%arg0: i32) -> (i32, i32, i32) {
    %c0_i32 = arith.constant 0 : i32
    %c0_i32_0 = arith.constant 0 : i32
    %c0_i32_1 = arith.constant 0 : i32
    return %arg0, %c0_i32, %c0_i32_0 : i32, i32, i32
  }
}

</mosaic_0001>

<llo_original>
// kernel: tpu_custom_call.1
$region0: #{tpu_custom_call.1}
  #allocation0 [shape = 'u32[]', space=smem, size = 0x4, offset = 0x4, fixed_abs, tag = 'smem constant byte address 0x4 - core index']
  #allocation1 [shape = 'u32[144,128]{1,0:T(1,128)}', space=vmem, size = 0x12000, scoped, tag = 'internal scratch']
  #allocation2 [shape = 'f32[1]{0:T(128)S(6)}', space=smem, size = 0x200, scoped, tag = 'scoped memory for tpu_custom_call.1']
  %s0 = inlined_call_operand.hbm [shape: bf16[8,128,128], index: 0, kind: input, shape index: {}]
  %s1 = inlined_call_operand.hbm [shape: bf16[8,128,128], index: 1, kind: input, shape index: {}]
  %s2 = inlined_call_operand.hbm [shape: bf16[128,128], index: 2, kind: input, shape index: {}]
  %s3 = inlined_call_operand.vmem [shape: f32[1,128], index: 3, kind: input, shape index: {}]
  %s4 = inlined_call_operand.hbm [shape: bf16[128,128], index: 4, kind: input, shape index: {}]
  %s5 = inlined_call_operand.vmem [shape: f32[1,128], index: 5, kind: input, shape index: {}]
  %s6 = inlined_call_operand.<no memory space> [shape: f32[1], index: 6, kind: input, shape index: {}]
  %s7 = inlined_call_operand.hbm [shape: f32[8,128,128], index: 7, kind: output, shape index: {}]
  %s8 = sld [smem:[#allocation0]]
  $region77: #{tpu_custom_call.1} parent=0
    _
  %s10 = ssub.s32 1, %s8
  %s11 = scalar_select 0, %s10, %s8
  %12 = sst [smem:[#allocation2]] %s6
  $region1: #{tpu_custom_call.1} parent=0
    #allocation3 [shape = 'u8[262144]{0}', space=vmem, size = 0x40000, scoped, tag = 'input window, operand 0']
    #allocation4 [shape = 's32[2]{0}', space=sflag, size = 0x8, scoped, tag = 'scoped memory for tpu_custom_call.1']
    #allocation5 [shape = 's32[2]{0}', space=sflag, size = 0x8, scoped, tag = 'scoped memory for tpu_custom_call.1']
    #allocation6 [shape = 'u8[262144]{0}', space=vmem, size = 0x40000, scoped, tag = 'input window, operand 1']
    #allocation7 [shape = 's32[2]{0}', space=sflag, size = 0x8, scoped, tag = 'scoped memory for tpu_custom_call.1']
    #allocation8 [shape = 'u8[32768]{0}', space=vmem, size = 0x8000, scoped, tag = 'input window, operand 2, single buffered']
    #allocation9 [shape = 'u8[32768]{0}', space=vmem, size = 0x8000, scoped, tag = 'input window, operand 4, single buffered']
    #allocation10 [shape = 's32[1]{0}', space=sflag, size = 0x4, scoped, tag = 'scoped memory for tpu_custom_call.1']
    #allocation11 [shape = 'u8[524288]{0}', space=vmem, size = 0x80000, scoped, tag = 'output window, operand 0']
    %13 = vsyncpa [#allocation4], 0
    %s14 = scalar_lea.sflag [#allocation4], 1
    %15 = vsyncpa %s14, 0
    %16 = vsyncpa [#allocation7], 0
    %s17 = scalar_lea.sflag [#allocation7], 1
    %18 = vsyncpa %s17, 0
    %19 = vsyncpa [#allocation10], 0
    %20 = vsyncpa [#allocation5], 0
    %s21 = scalar_lea.sflag [#allocation5], 1
    %22 = vsyncpa %s21, 0
    loop: start=0, step=1, limit=4
    $region2: #{tpu_custom_call.1} parent=1 // loop_pre_header
      _
    $region3: #{tpu_custom_call.1} parent=1 // loop_header
      %s24 = sphi 0, %s28
      %p25 = scmp.ge.s32.totalorder %s24, 4
      %s34 = sphi 0, %s36
      %s37 = sphi 0, %s34
      %s38 = sphi 0, %s37
      %s54 = sphi 0, %s38
      %s60 = sphi 0, %s62
      %s63 = sphi 0, %s60
      %s64 = sphi 0, %s63
      %s80 = sphi 0, %s64
      %s84 = sphi 0, %s84
      %s86 = sphi 0, %s84
      %s87 = sphi 0, %s86
      %s101 = sphi 0, %s87
      %s105 = sphi 0, %s105
      %s107 = sphi 0, %s105
      %s108 = sphi 0, %s107
      %s122 = sphi 0, %s108
      %s126 = sphi 0, %s126
      %s128 = sphi 0, %s126
      %s129 = sphi 0, %s128
      %s143 = sphi 0, %s129
      %s147 = sphi 0, %s147
      %s149 = sphi 0, %s147
      %s150 = sphi 0, %s149
      %s164 = sphi 0, %s150
      %s168 = sphi 0, %s168
      %s170 = sphi 0, %s168
      %s171 = sphi 0, %s170
      %s185 = sphi 0, %s171
      %s191 = sphi 0, %s193
      %s194 = sphi 0, %s191
      %s195 = sphi 0, %s194
      %s211 = sphi 0, %s195
    $region4: #{tpu_custom_call.1} parent=1 // loop_header_branch
      %27 = sbr.rel (%p25) target = $region8
    $region5: #{tpu_custom_call.1} parent=1 // loop_body
      %s29 = ssub.s32 %s24, 1
      %s30 = ssub.s32 %s24, 2
      %s31 = sadd.s32 %s24, 1
      %s32 = ssub.s32 %s24, %s31
      %p33 = scmp.eq.s32.totalorder %s32, 0
      %s35 = sadd.s32 %s34, 1
      %s36 = scalar_select %p33, %s34, %s35
      %p39 = pneg %p33
      %p40 = scmp.eq.s32.totalorder %s24, 1
      %p41 = por %p39, %p40
      %p42 = scmp.ne.s32.totalorder %s34, %s37
      %p43 = scmp.eq.s32.totalorder %s24, 0
      %p44 = por %p42, %p43
      %p45 = scmp.ne.s32.totalorder %s34, %s37
      %p46 = scmp.eq.s32.totalorder %s29, 1
      %p47 = por %p45, %p46
      %p48 = scmp.ne.s32.totalorder %s37, %s38
      %p49 = scmp.eq.s32.totalorder %s29, 0
      %p50 = por %p48, %p49
      %p51 = scmp.ne.s32.totalorder %s37, %s38
      %p52 = scmp.eq.s32.totalorder %s30, 1
      %p53 = por %p51, %p52
      %p55 = scmp.ne.s32.totalorder %s38, %s54
      %p56 = scmp.eq.s32.totalorder %s30, 0
      %p57 = por %p55, %p56
      %s58 = ssub.s32 %s24, %s31
      %p59 = scmp.eq.s32.totalorder %s58, 0
      %s61 = sadd.s32 %s60, 1
      %s62 = scalar_select %p59, %s60, %s61
      %p65 = pneg %p59
      %p66 = scmp.eq.s32.totalorder %s24, 1
      %p67 = por %p65, %p66
      %p68 = scmp.ne.s32.totalorder %s60, %s63
      %p69 = scmp.eq.s32.totalorder %s24, 0
      %p70 = por %p68, %p69
      %p71 = scmp.ne.s32.totalorder %s60, %s63
      %p72 = scmp.eq.s32.totalorder %s29, 1
      %p73 = por %p71, %p72
      %p74 = scmp.ne.s32.totalorder %s63, %s64
      %p75 = scmp.eq.s32.totalorder %s29, 0
      %p76 = por %p74, %p75
      %p77 = scmp.ne.s32.totalorder %s63, %s64
      %p78 = scmp.eq.s32.totalorder %s30, 1
      %p79 = por %p77, %p78
      %p81 = scmp.ne.s32.totalorder %s64, %s80
      %p82 = scmp.eq.s32.totalorder %s30, 0
      %p83 = por %p81, %p82
      %s85 = sadd.s32 %s84, 1
      %p88 = scmp.eq.s32.totalorder %s24, 1
      %p89 = scmp.ne.s32.totalorder %s84, %s86
      %p90 = scmp.eq.s32.totalorder %s24, 0
      %p91 = por %p89, %p90
      %p92 = scmp.ne.s32.totalorder %s84, %s86
      %p93 = scmp.eq.s32.totalorder %s29, 1
      %p94 = por %p92, %p93
      %p95 = scmp.ne.s32.totalorder %s86, %s87
      %p96 = scmp.eq.s32.totalorder %s29, 0
      %p97 = por %p95, %p96
      %p98 = scmp.ne.s32.totalorder %s86, %s87
      %p99 = scmp.eq.s32.totalorder %s30, 1
      %p100 = por %p98, %p99
      %p102 = scmp.ne.s32.totalorder %s87, %s101
      %p103 = scmp.eq.s32.totalorder %s30, 0
      %p104 = por %p102, %p103
      %s106 = sadd.s32 %s105, 1
      %p109 = scmp.eq.s32.totalorder %s24, 1
      %p110 = scmp.ne.s32.totalorder %s105, %s107
      %p111 = scmp.eq.s32.totalorder %s24, 0
      %p112 = por %p110, %p111
      %p113 = scmp.ne.s32.totalorder %s105, %s107
      %p114 = scmp.eq.s32.totalorder %s29, 1
      %p115 = por %p113, %p114
      %p116 = scmp.ne.s32.totalorder %s107, %s108
      %p117 = scmp.eq.s32.totalorder %s29, 0
      %p118 = por %p116, %p117
      %p119 = scmp.ne.s32.totalorder %s107, %s108
      %p120 = scmp.eq.s32.totalorder %s30, 1
      %p121 = por %p119, %p120
      %p123 = scmp.ne.s32.totalorder %s108, %s122
      %p124 = scmp.eq.s32.totalorder %s30, 0
      %p125 = por %p123, %p124
      %s127 = sadd.s32 %s126, 1
      %p130 = scmp.eq.s32.totalorder %s24, 1
      %p131 = scmp.ne.s32.totalorder %s126, %s128
      %p132 = scmp.eq.s32.totalorder %s24, 0
      %p133 = por %p131, %p132
      %p134 = scmp.ne.s32.totalorder %s126, %s128
      %p135 = scmp.eq.s32.totalorder %s29, 1
      %p136 = por %p134, %p135
      %p137 = scmp.ne.s32.totalorder %s128, %s129
      %p138 = scmp.eq.s32.totalorder %s29, 0
      %p139 = por %p137, %p138
      %p140 = scmp.ne.s32.totalorder %s128, %s129
      %p141 = scmp.eq.s32.totalorder %s30, 1
      %p142 = por %p140, %p141
      %p144 = scmp.ne.s32.totalorder %s129, %s143
      %p145 = scmp.eq.s32.totalorder %s30, 0
      %p146 = por %p144, %p145
      %s148 = sadd.s32 %s147, 1
      %p151 = scmp.eq.s32.totalorder %s24, 1
      %p152 = scmp.ne.s32.totalorder %s147, %s149
      %p153 = scmp.eq.s32.totalorder %s24, 0
      %p154 = por %p152, %p153
      %p155 = scmp.ne.s32.totalorder %s147, %s149
      %p156 = scmp.eq.s32.totalorder %s29, 1
      %p157 = por %p155, %p156
      %p158 = scmp.ne.s32.totalorder %s149, %s150
      %p159 = scmp.eq.s32.totalorder %s29, 0
      %p160 = por %p158, %p159
      %p161 = scmp.ne.s32.totalorder %s149, %s150
      %p162 = scmp.eq.s32.totalorder %s30, 1
      %p163 = por %p161, %p162
      %p165 = scmp.ne.s32.totalorder %s150, %s164
      %p166 = scmp.eq.s32.totalorder %s30, 0
      %p167 = por %p165, %p166
      %s169 = sadd.s32 %s168, 1
      %p172 = scmp.eq.s32.totalorder %s24, 1
      %p173 = scmp.ne.s32.totalorder %s168, %s170
      %p174 = scmp.eq.s32.totalorder %s24, 0
      %p175 = por %p173, %p174
      %p176 = scmp.ne.s32.totalorder %s168, %s170
      %p177 = scmp.eq.s32.totalorder %s29, 1
      %p178 = por %p176, %p177
      %p179 = scmp.ne.s32.totalorder %s170, %s171
      %p180 = scmp.eq.s32.totalorder %s29, 0
      %p181 = por %p179, %p180
      %p182 = scmp.ne.s32.totalorder %s170, %s171
      %p183 = scmp.eq.s32.totalorder %s30, 1
      %p184 = por %p182, %p183
      %p186 = scmp.ne.s32.totalorder %s171, %s185
      %p187 = scmp.eq.s32.totalorder %s30, 0
      %p188 = por %p186, %p187
      %s189 = ssub.s32 %s24, %s31
      %p190 = scmp.eq.s32.totalorder %s189, 0
      %s192 = sadd.s32 %s191, 1
      %s193 = scalar_select %p190, %s191, %s192
      %p196 = pneg %p190
      %p197 = scmp.eq.s32.totalorder %s24, 1
      %p198 = por %p196, %p197
      %p199 = scmp.ne.s32.totalorder %s191, %s194
      %p200 = scmp.eq.s32.totalorder %s24, 0
      %p201 = por %p199, %p200
      %p202 = scmp.ne.s32.totalorder %s191, %s194
      %p203 = scmp.eq.s32.totalorder %s29, 1
      %p204 = por %p202, %p203
      %p205 = scmp.ne.s32.totalorder %s194, %s195
      %p206 = scmp.eq.s32.totalorder %s29, 0
      %p207 = por %p205, %p206
      %p208 = scmp.ne.s32.totalorder %s194, %s195
      %p209 = scmp.eq.s32.totalorder %s30, 1
      %p210 = por %p208, %p209
      %p212 = scmp.ne.s32.totalorder %s195, %s211
      %p213 = scmp.eq.s32.totalorder %s30, 0
      %p214 = por %p212, %p213
      %p215 = scmp.le.s32.totalorder 1, %s24
      %p216 = scmp.lt.s32.totalorder %s24, 3
      %p217 = pnand %p215, %p216
      %p218 = pneg %p217
      // Predicated region
      $region9: #{tpu_custom_call.1} parent=5 // pred_check
        _
      $region10: #{tpu_custom_call.1} parent=5 // pred_check_branch
        %220 = sbr.rel (%p217) target = $region12
      $region11: #{tpu_custom_call.1} parent=5 // pred_region
        %s221 = ssub.s32 %s24, 1
        // Predicated region
        $region13: #{tpu_custom_call.1} parent=11 // pred_check
          %p222 = pneg %p97
        $region14: #{tpu_custom_call.1} parent=11 // pred_check_branch
          %224 = sbr.rel (%p222) target = $region16
        $region15: #{tpu_custom_call.1} parent=11 // pred_region
          %s226 = ssub.s32 1024, 1024
          %227 = vsyncadd [#allocation7], %s226
          %s228 = sshll.u32 [#allocation8], 4
          %s229 = int_to_ptr.vmem [resolvable:$true] %s228
          %234 = dma.hbm_to_vmem [thread:$0]  %s2, 1024, %s229, [#allocation7], 64, 64, 4
        $region16: #{tpu_custom_call.1} parent=11 // pred_fallthru
          _
        // Predicated region
        $region17: #{tpu_custom_call.1} parent=11 // pred_check
          %p235 = pneg %p118
        $region18: #{tpu_custom_call.1} parent=11 // pred_check_branch
          %237 = sbr.rel (%p235) target = $region20
        $region19: #{tpu_custom_call.1} parent=11 // pred_region
          _
        $region20: #{tpu_custom_call.1} parent=11 // pred_fallthru
          _
        // Predicated region
        $region21: #{tpu_custom_call.1} parent=11 // pred_check
          %p238 = pneg %p139
        $region22: #{tpu_custom_call.1} parent=11 // pred_check_branch
          %240 = sbr.rel (%p238) target = $region24
        $region23: #{tpu_custom_call.1} parent=11 // pred_region
          %s242 = ssub.s32 1024, 1024
          %243 = vsyncadd [#allocation10], %s242
          %s244 = sshll.u32 [#allocation9], 4
          %s245 = int_to_ptr.vmem [resolvable:$true] %s244
          %250 = dma.hbm_to_vmem [thread:$0]  %s4, 1024, %s245, [#allocation10], 64, 64, 4
        $region24: #{tpu_custom_call.1} parent=11 // pred_fallthru
          _
        // Predicated region
        $region25: #{tpu_custom_call.1} parent=11 // pred_check
          %p251 = pneg %p160
        $region26: #{tpu_custom_call.1} parent=11 // pred_check_branch
          %253 = sbr.rel (%p251) target = $region28
        $region27: #{tpu_custom_call.1} parent=11 // pred_region
          _
        $region28: #{tpu_custom_call.1} parent=11 // pred_fallthru
          _
        // Predicated region
        $region29: #{tpu_custom_call.1} parent=11 // pred_check
          %p254 = pneg %p181
        $region30: #{tpu_custom_call.1} parent=11 // pred_check_branch
          %256 = sbr.rel (%p254) target = $region32
        $region31: #{tpu_custom_call.1} parent=11 // pred_region
          _
        $region32: #{tpu_custom_call.1} parent=11 // pred_fallthru
          _
      $region12: #{tpu_custom_call.1} parent=5 // pred_fallthru
        _
      %p257 = scmp.lt.s32.totalorder %s24, 2
      // Predicated region
      $region33: #{tpu_custom_call.1} parent=5 // pred_check
        %p258 = pneg %p257
      $region34: #{tpu_custom_call.1} parent=5 // pred_check_branch
        %260 = sbr.rel (%p258) target = $region36
      $region35: #{tpu_custom_call.1} parent=5 // pred_region
        // Predicated region
        $region37: #{tpu_custom_call.1} parent=35 // pred_check
          %p261 = pneg %p44
        $region38: #{tpu_custom_call.1} parent=35 // pred_check_branch
          %263 = sbr.rel (%p261) target = $region40
        $region39: #{tpu_custom_call.1} parent=35 // pred_region
          %s264 = sand.u32 %s34, 1
          %s265 = scalar_lea.sflag [#allocation4], %s264
          %s266 = sand.u32 %s34, 1
          %s267 = smul.addr %s266, 256
          %s268 = scalar_lea.vmem [#allocation3], %s267
          %s269 = smul.u32 4, %s24
          %s271 = ssub.s32 4096, 4096
          %272 = vsyncadd %s265, %s271
          %s273 = smul.addr %s269, 16
          %s274 = smul.addr %s273, 64
          %s275 = scalar_lea.hbm %s0, %s274
          %s276 = sshll.u32 %s268, 4
          %s277 = int_to_ptr.vmem [resolvable:$true] %s276
          %282 = dma.hbm_to_vmem [thread:$0]  %s275, 4096, %s277, %s265, 64, 64, 4
        $region40: #{tpu_custom_call.1} parent=35 // pred_fallthru
          _
        // Predicated region
        $region41: #{tpu_custom_call.1} parent=35 // pred_check
          %p283 = pneg %p70
        $region42: #{tpu_custom_call.1} parent=35 // pred_check_branch
          %285 = sbr.rel (%p283) target = $region44
        $region43: #{tpu_custom_call.1} parent=35 // pred_region
          %s286 = sand.u32 %s24, 1
          %s287 = scalar_lea.sflag [#allocation7], %s286
          %s288 = sand.u32 %s60, 1
          %s289 = smul.addr %s288, 256
          %s290 = scalar_lea.vmem [#allocation6], %s289
          %s291 = smul.u32 4, %s24
          %s293 = ssub.s32 4096, 4096
          %294 = vsyncadd %s287, %s293
          %s295 = smul.addr %s291, 16
          %s296 = smul.addr %s295, 64
          %s297 = scalar_lea.hbm %s1, %s296
          %s298 = sshll.u32 %s290, 4
          %s299 = int_to_ptr.vmem [resolvable:$true] %s298
          %304 = dma.hbm_to_vmem [thread:$0]  %s297, 4096, %s299, %s287, 64, 64, 4
        $region44: #{tpu_custom_call.1} parent=35 // pred_fallthru
          _
      $region36: #{tpu_custom_call.1} parent=5 // pred_fallthru
        _
      %p305 = scmp.le.s32.totalorder 1, %s24
      %p306 = scmp.lt.s32.totalorder %s24, 3
      %p307 = pnand %p305, %p306
      %p308 = pneg %p307
      // Predicated region
      $region45: #{tpu_custom_call.1} parent=5 // pred_check
        _
      $region46: #{tpu_custom_call.1} parent=5 // pred_check_branch
        %310 = sbr.rel (%p307) target = $region48
      $region47: #{tpu_custom_call.1} parent=5 // pred_region
        %s311 = ssub.s32 %s24, 1
        %s312 = sand.u32 %s37, 1
        %s313 = scalar_lea.sflag [#allocation4], %s312
        %s314 = sand.u32 %s37, 1
        %s315 = smul.addr %s314, 256
        %s316 = scalar_lea.vmem [#allocation3], %s315
        // Predicated region
        $region49: #{tpu_custom_call.1} parent=47 // pred_check
          %p317 = pneg %p50
        $region50: #{tpu_custom_call.1} parent=47 // pred_check_branch
          %319 = sbr.rel (%p317) target = $region52
        $region51: #{tpu_custom_call.1} parent=47 // pred_region
          %320 = dma.done %s313, 4096
        $region52: #{tpu_custom_call.1} parent=47 // pred_fallthru
          _
        %s321 = sand.u32 %s29, 1
        %s322 = scalar_lea.sflag [#allocation7], %s321
        %s323 = sand.u32 %s63, 1
        %s324 = smul.addr %s323, 256
        %s325 = scalar_lea.vmem [#allocation6], %s324
        // Predicated region
        $region53: #{tpu_custom_call.1} parent=47 // pred_check
          %p326 = pneg %p76
        $region54: #{tpu_custom_call.1} parent=47 // pred_check_branch
          %328 = sbr.rel (%p326) target = $region56
        $region55: #{tpu_custom_call.1} parent=47 // pred_region
          %329 = dma.done %s322, 4096
        $region56: #{tpu_custom_call.1} parent=47 // pred_fallthru
          _
        // Predicated region
        $region57: #{tpu_custom_call.1} parent=47 // pred_check
          %p330 = pneg %p97
        $region58: #{tpu_custom_call.1} parent=47 // pred_check_branch
          %332 = sbr.rel (%p330) target = $region60
        $region59: #{tpu_custom_call.1} parent=47 // pred_region
          %333 = dma.done [#allocation7], 1024
        $region60: #{tpu_custom_call.1} parent=47 // pred_fallthru
          _
        // Predicated region
        $region61: #{tpu_custom_call.1} parent=47 // pred_check
          %p334 = pneg %p139
        $region62: #{tpu_custom_call.1} parent=47 // pred_check_branch
          %336 = sbr.rel (%p334) target = $region64
        $region63: #{tpu_custom_call.1} parent=47 // pred_region
          %337 = dma.done [#allocation10], 1024
        $region64: #{tpu_custom_call.1} parent=47 // pred_fallthru
          _
        %s338 = sand.u32 %s37, 1
        %s339 = scalar_lea.sflag [#allocation4], %s338
        %s340 = sand.u32 %s37, 1
        %s341 = smul.addr %s340, 256
        %s342 = scalar_lea.vmem [#allocation3], %s341
        %p343 = pneg %p50
        %p344 = pneg %p47
        %s345 = sand.u32 %s29, 1
        %s346 = scalar_lea.sflag [#allocation7], %s345
        %s347 = sand.u32 %s63, 1
        %s348 = smul.addr %s347, 256
        %s349 = scalar_lea.vmem [#allocation6], %s348
        %p350 = pneg %p76
        %p351 = pneg %p73
        %p352 = pneg %p97
        %p353 = pneg %p94
        %p354 = pneg %p118
        %p355 = pneg %p115
        %p356 = pneg %p139
        %p357 = pneg %p136
        %p358 = pneg %p160
        %p359 = pneg %p157
        %p360 = pneg %p181
        %p361 = pneg %p178
        %p362 = pneg %p207
        %p363 = pneg %p204
        %s364 = sand.u32 %s194, 1
        %s365 = scalar_lea.sflag [#allocation5], %s364
        %s366 = sand.u32 %s194, 1
        %s367 = smul.addr %s366, 512
        %s368 = scalar_lea.vmem [#allocation11], %s367
        %s369 = smul.u32 4, %s29
        %s370 = smul.u32 4, %s29
        %s371 = smul.u32 4, %s29
        %v373 = vld [vmem:[%s325] sm:$0xf]
        %v374 = vld [vmem:[%s325 + $0x4] sm:$0xf]
        %v375 = vld [vmem:[%s325 + $0x8] sm:$0xf]
        %v376 = vld [vmem:[%s325 + $0xc] sm:$0xf]
        %v377 = vld [vmem:[%s325 + $0x10] sm:$0xf]
        %v378 = vld [vmem:[%s325 + $0x14] sm:$0xf]
        %v379 = vld [vmem:[%s325 + $0x18] sm:$0xf]
        %v380 = vld [vmem:[%s325 + $0x1c] sm:$0xf]
        %v381 = vld [vmem:[%s325 + $0x20] sm:$0xf]
        %v382 = vld [vmem:[%s325 + $0x24] sm:$0xf]
        %v383 = vld [vmem:[%s325 + $0x28] sm:$0xf]
        %v384 = vld [vmem:[%s325 + $0x2c] sm:$0xf]
        %v385 = vld [vmem:[%s325 + $0x30] sm:$0xf]
        %v386 = vld [vmem:[%s325 + $0x34] sm:$0xf]
        %v387 = vld [vmem:[%s325 + $0x38] sm:$0xf]
        %v388 = vld [vmem:[%s325 + $0x3c] sm:$0xf]
        %v389 = vld [vmem:[%s325 + $0x40] sm:$0xf]
        %v390 = vld [vmem:[%s325 + $0x44] sm:$0xf]
        %v391 = vld [vmem:[%s325 + $0x48] sm:$0xf]
        %v392 = vld [vmem:[%s325 + $0x4c] sm:$0xf]
        %v393 = vld [vmem:[%s325 + $0x50] sm:$0xf]
        %v394 = vld [vmem:[%s325 + $0x54] sm:$0xf]
        %v395 = vld [vmem:[%s325 + $0x58] sm:$0xf]
        %v396 = vld [vmem:[%s325 + $0x5c] sm:$0xf]
        %v397 = vld [vmem:[%s325 + $0x60] sm:$0xf]
        %v398 = vld [vmem:[%s325 + $0x64] sm:$0xf]
        %v399 = vld [vmem:[%s325 + $0x68] sm:$0xf]
        %v400 = vld [vmem:[%s325 + $0x6c] sm:$0xf]
        %v401 = vld [vmem:[%s325 + $0x70] sm:$0xf]
        %v402 = vld [vmem:[%s325 + $0x74] sm:$0xf]
        %v403 = vld [vmem:[%s325 + $0x78] sm:$0xf]
        %v404 = vld [vmem:[%s325 + $0x7c] sm:$0xf]
        %v405 = vld [vmem:[%s325 + $0x80] sm:$0xf]
        %v406 = vld [vmem:[%s325 + $0x84] sm:$0xf]
        %v407 = vld [vmem:[%s325 + $0x88] sm:$0xf]
        %v408 = vld [vmem:[%s325 + $0x8c] sm:$0xf]
        %v409 = vld [vmem:[%s325 + $0x90] sm:$0xf]
        %v410 = vld [vmem:[%s325 + $0x94] sm:$0xf]
        %v411 = vld [vmem:[%s325 + $0x98] sm:$0xf]
        %v412 = vld [vmem:[%s325 + $0x9c] sm:$0xf]
        %v413 = vld [vmem:[%s325 + $0xa0] sm:$0xf]
        %v414 = vld [vmem:[%s325 + $0xa4] sm:$0xf]
        %v415 = vld [vmem:[%s325 + $0xa8] sm:$0xf]
        %v416 = vld [vmem:[%s325 + $0xac] sm:$0xf]
        %v417 = vld [vmem:[%s325 + $0xb0] sm:$0xf]
        %v418 = vld [vmem:[%s325 + $0xb4] sm:$0xf]
        %v419 = vld [vmem:[%s325 + $0xb8] sm:$0xf]
        %v420 = vld [vmem:[%s325 + $0xbc] sm:$0xf]
        %v421 = vld [vmem:[%s325 + $0xc0] sm:$0xf]
        %v422 = vld [vmem:[%s325 + $0xc4] sm:$0xf]
        %v423 = vld [vmem:[%s325 + $0xc8] sm:$0xf]
        %v424 = vld [vmem:[%s325 + $0xcc] sm:$0xf]
        %v425 = vld [vmem:[%s325 + $0xd0] sm:$0xf]
        %v426 = vld [vmem:[%s325 + $0xd4] sm:$0xf]
        %v427 = vld [vmem:[%s325 + $0xd8] sm:$0xf]
        %v428 = vld [vmem:[%s325 + $0xdc] sm:$0xf]
        %v429 = vld [vmem:[%s325 + $0xe0] sm:$0xf]
        %v430 = vld [vmem:[%s325 + $0xe4] sm:$0xf]
        %v431 = vld [vmem:[%s325 + $0xe8] sm:$0xf]
        %v432 = vld [vmem:[%s325 + $0xec] sm:$0xf]
        %v433 = vld [vmem:[%s325 + $0xf0] sm:$0xf]
        %v434 = vld [vmem:[%s325 + $0xf4] sm:$0xf]
        %v435 = vld [vmem:[%s325 + $0xf8] sm:$0xf]
        %v436 = vld [vmem:[%s325 + $0xfc] sm:$0xf]
        %v437 = vld [vmem:[#allocation8] sm:$0xf]
        %v438 = vld [vmem:[#allocation8 + $0x4] sm:$0xf]
        %v439 = vld [vmem:[#allocation8 + $0x8] sm:$0xf]
        %v440 = vld [vmem:[#allocation8 + $0xc] sm:$0xf]
        %v441 = vld [vmem:[#allocation8 + $0x10] sm:$0xf]
        %v442 = vld [vmem:[#allocation8 + $0x14] sm:$0xf]
        %v443 = vld [vmem:[#allocation8 + $0x18] sm:$0xf]
        %v444 = vld [vmem:[#allocation8 + $0x1c] sm:$0xf]
        %v445 = vld [vmem:[#allocation8 + $0x20] sm:$0xf]
        %v446 = vld [vmem:[#allocation8 + $0x24] sm:$0xf]
        %v447 = vld [vmem:[#allocation8 + $0x28] sm:$0xf]
        %v448 = vld [vmem:[#allocation8 + $0x2c] sm:$0xf]
        %v449 = vld [vmem:[#allocation8 + $0x30] sm:$0xf]
        %v450 = vld [vmem:[#allocation8 + $0x34] sm:$0xf]
        %v451 = vld [vmem:[#allocation8 + $0x38] sm:$0xf]
        %v452 = vld [vmem:[#allocation8 + $0x3c] sm:$0xf]
        %v453 = vld [vmem:[#allocation9] sm:$0xf]
        %v454 = vld [vmem:[#allocation9 + $0x4] sm:$0xf]
        %v455 = vld [vmem:[#allocation9 + $0x8] sm:$0xf]
        %v456 = vld [vmem:[#allocation9 + $0xc] sm:$0xf]
        %v457 = vld [vmem:[#allocation9 + $0x10] sm:$0xf]
        %v458 = vld [vmem:[#allocation9 + $0x14] sm:$0xf]
        %v459 = vld [vmem:[#allocation9 + $0x18] sm:$0xf]
        %v460 = vld [vmem:[#allocation9 + $0x1c] sm:$0xf]
        %v461 = vld [vmem:[#allocation9 + $0x20] sm:$0xf]
        %v462 = vld [vmem:[#allocation9 + $0x24] sm:$0xf]
        %v463 = vld [vmem:[#allocation9 + $0x28] sm:$0xf]
        %v464 = vld [vmem:[#allocation9 + $0x2c] sm:$0xf]
        %v465 = vld [vmem:[#allocation9 + $0x30] sm:$0xf]
        %v466 = vld [vmem:[#allocation9 + $0x34] sm:$0xf]
        %v467 = vld [vmem:[#allocation9 + $0x38] sm:$0xf]
        %v468 = vld [vmem:[#allocation9 + $0x3c] sm:$0xf]
        %v469 = vld [vmem:[%s3] sm:$0x1]
        %v470 = vld [vmem:[%s5] sm:$0x1]
        %s471 = sld [smem:[#allocation2]]
        %v472 = vld [vmem:[%s316] sm:$0xf]
        %v473 = vld [vmem:[%s316 + $0x4] sm:$0xf]
        %v474 = vld [vmem:[%s316 + $0x8] sm:$0xf]
        %v475 = vld [vmem:[%s316 + $0xc] sm:$0xf]
        %v476 = vld [vmem:[%s316 + $0x10] sm:$0xf]
        %v477 = vld [vmem:[%s316 + $0x14] sm:$0xf]
        %v478 = vld [vmem:[%s316 + $0x18] sm:$0xf]
        %v479 = vld [vmem:[%s316 + $0x1c] sm:$0xf]
        %v480 = vld [vmem:[%s316 + $0x20] sm:$0xf]
        %v481 = vld [vmem:[%s316 + $0x24] sm:$0xf]
        %v482 = vld [vmem:[%s316 + $0x28] sm:$0xf]
        %v483 = vld [vmem:[%s316 + $0x2c] sm:$0xf]
        %v484 = vld [vmem:[%s316 + $0x30] sm:$0xf]
        %v485 = vld [vmem:[%s316 + $0x34] sm:$0xf]
        %v486 = vld [vmem:[%s316 + $0x38] sm:$0xf]
        %v487 = vld [vmem:[%s316 + $0x3c] sm:$0xf]
        %v488 = vld [vmem:[%s316 + $0x40] sm:$0xf]
        %v489 = vld [vmem:[%s316 + $0x44] sm:$0xf]
        %v490 = vld [vmem:[%s316 + $0x48] sm:$0xf]
        %v491 = vld [vmem:[%s316 + $0x4c] sm:$0xf]
        %v492 = vld [vmem:[%s316 + $0x50] sm:$0xf]
        %v493 = vld [vmem:[%s316 + $0x54] sm:$0xf]
        %v494 = vld [vmem:[%s316 + $0x58] sm:$0xf]
        %v495 = vld [vmem:[%s316 + $0x5c] sm:$0xf]
        %v496 = vld [vmem:[%s316 + $0x60] sm:$0xf]
        %v497 = vld [vmem:[%s316 + $0x64] sm:$0xf]
        %v498 = vld [vmem:[%s316 + $0x68] sm:$0xf]
        %v499 = vld [vmem:[%s316 + $0x6c] sm:$0xf]
        %v500 = vld [vmem:[%s316 + $0x70] sm:$0xf]
        %v501 = vld [vmem:[%s316 + $0x74] sm:$0xf]
        %v502 = vld [vmem:[%s316 + $0x78] sm:$0xf]
        %v503 = vld [vmem:[%s316 + $0x7c] sm:$0xf]
        %v504 = vld [vmem:[%s316 + $0x80] sm:$0xf]
        %v505 = vld [vmem:[%s316 + $0x84] sm:$0xf]
        %v506 = vld [vmem:[%s316 + $0x88] sm:$0xf]
        %v507 = vld [vmem:[%s316 + $0x8c] sm:$0xf]
        %v508 = vld [vmem:[%s316 + $0x90] sm:$0xf]
        %v509 = vld [vmem:[%s316 + $0x94] sm:$0xf]
        %v510 = vld [vmem:[%s316 + $0x98] sm:$0xf]
        %v511 = vld [vmem:[%s316 + $0x9c] sm:$0xf]
        %v512 = vld [vmem:[%s316 + $0xa0] sm:$0xf]
        %v513 = vld [vmem:[%s316 + $0xa4] sm:$0xf]
        %v514 = vld [vmem:[%s316 + $0xa8] sm:$0xf]
        %v515 = vld [vmem:[%s316 + $0xac] sm:$0xf]
        %v516 = vld [vmem:[%s316 + $0xb0] sm:$0xf]
        %v517 = vld [vmem:[%s316 + $0xb4] sm:$0xf]
        %v518 = vld [vmem:[%s316 + $0xb8] sm:$0xf]
        %v519 = vld [vmem:[%s316 + $0xbc] sm:$0xf]
        %v520 = vld [vmem:[%s316 + $0xc0] sm:$0xf]
        %v521 = vld [vmem:[%s316 + $0xc4] sm:$0xf]
        %v522 = vld [vmem:[%s316 + $0xc8] sm:$0xf]
        %v523 = vld [vmem:[%s316 + $0xcc] sm:$0xf]
        %v524 = vld [vmem:[%s316 + $0xd0] sm:$0xf]
        %v525 = vld [vmem:[%s316 + $0xd4] sm:$0xf]
        %v526 = vld [vmem:[%s316 + $0xd8] sm:$0xf]
        %v527 = vld [vmem:[%s316 + $0xdc] sm:$0xf]
        %v528 = vld [vmem:[%s316 + $0xe0] sm:$0xf]
        %v529 = vld [vmem:[%s316 + $0xe4] sm:$0xf]
        %v530 = vld [vmem:[%s316 + $0xe8] sm:$0xf]
        %v531 = vld [vmem:[%s316 + $0xec] sm:$0xf]
        %v532 = vld [vmem:[%s316 + $0xf0] sm:$0xf]
        %v533 = vld [vmem:[%s316 + $0xf4] sm:$0xf]
        %v534 = vld [vmem:[%s316 + $0xf8] sm:$0xf]
        %v535 = vld [vmem:[%s316 + $0xfc] sm:$0xf]
        %v536 = vunpack.c.l.bf16 %v472
        %v537 = vunpack.c.l.bf16 %v473
        %v538 = vunpack.c.l.bf16 %v474
        %v539 = vunpack.c.l.bf16 %v475
        %v540 = vunpack.c.l.bf16 %v476
        %v541 = vunpack.c.l.bf16 %v477
        %v542 = vunpack.c.l.bf16 %v478
        %v543 = vunpack.c.l.bf16 %v479
        %v544 = vunpack.c.l.bf16 %v480
        %v545 = vunpack.c.l.bf16 %v481
        %v546 = vunpack.c.l.bf16 %v482
        %v547 = vunpack.c.l.bf16 %v483
        %v548 = vunpack.c.l.bf16 %v484
        %v549 = vunpack.c.l.bf16 %v485
        %v550 = vunpack.c.l.bf16 %v486
        %v551 = vunpack.c.l.bf16 %v487
        %v552 = vunpack.c.l.bf16 %v488
        %v553 = vunpack.c.l.bf16 %v489
        %v554 = vunpack.c.l.bf16 %v490
        %v555 = vunpack.c.l.bf16 %v491
        %v556 = vunpack.c.l.bf16 %v492
        %v557 = vunpack.c.l.bf16 %v493
        %v558 = vunpack.c.l.bf16 %v494
        %v559 = vunpack.c.l.bf16 %v495
        %v560 = vunpack.c.l.bf16 %v496
        %v561 = vunpack.c.l.bf16 %v497
        %v562 = vunpack.c.l.bf16 %v498
        %v563 = vunpack.c.l.bf16 %v499
        %v564 = vunpack.c.l.bf16 %v500
        %v565 = vunpack.c.l.bf16 %v501
        %v566 = vunpack.c.l.bf16 %v502
        %v567 = vunpack.c.l.bf16 %v503
        %v568 = vunpack.c.l.bf16 %v504
        %v569 = vunpack.c.l.bf16 %v505
        %v570 = vunpack.c.l.bf16 %v506
        %v571 = vunpack.c.l.bf16 %v507
        %v572 = vunpack.c.l.bf16 %v508
        %v573 = vunpack.c.l.bf16 %v509
        %v574 = vunpack.c.l.bf16 %v510
        %v575 = vunpack.c.l.bf16 %v511
        %v576 = vunpack.c.l.bf16 %v512
        %v577 = vunpack.c.l.bf16 %v513
        %v578 = vunpack.c.l.bf16 %v514
        %v579 = vunpack.c.l.bf16 %v515
        %v580 = vunpack.c.l.bf16 %v516
        %v581 = vunpack.c.l.bf16 %v517
        %v582 = vunpack.c.l.bf16 %v518
        %v583 = vunpack.c.l.bf16 %v519
        %v584 = vunpack.c.l.bf16 %v520
        %v585 = vunpack.c.l.bf16 %v521
        %v586 = vunpack.c.l.bf16 %v522
        %v587 = vunpack.c.l.bf16 %v523
        %v588 = vunpack.c.l.bf16 %v524
        %v589 = vunpack.c.l.bf16 %v525
        %v590 = vunpack.c.l.bf16 %v526
        %v591 = vunpack.c.l.bf16 %v527
        %v592 = vunpack.c.l.bf16 %v528
        %v593 = vunpack.c.l.bf16 %v529
        %v594 = vunpack.c.l.bf16 %v530
        %v595 = vunpack.c.l.bf16 %v531
        %v596 = vunpack.c.l.bf16 %v532
        %v597 = vunpack.c.l.bf16 %v533
        %v598 = vunpack.c.l.bf16 %v534
        %v599 = vunpack.c.l.bf16 %v535
        %v616 = vunpack.c.l.b16 %v373
        %v617 = vunpack.c.l.b16 %v374
        %v618 = vunpack.c.l.b16 %v375
        %v619 = vunpack.c.l.b16 %v376
        %v620 = vunpack.c.l.b16 %v377
        %v621 = vunpack.c.l.b16 %v378
        %v622 = vunpack.c.l.b16 %v379
        %v623 = vunpack.c.l.b16 %v380
        %v624 = vunpack.c.l.b16 %v381
        %v625 = vunpack.c.l.b16 %v382
        %v626 = vunpack.c.l.b16 %v383
        %v627 = vunpack.c.l.b16 %v384
        %v628 = vunpack.c.l.b16 %v385
        %v629 = vunpack.c.l.b16 %v386
        %v630 = vunpack.c.l.b16 %v387
        %v631 = vunpack.c.l.b16 %v388
        %v632 = vpack.c.b16 %v617, %v616
        %v633 = vpack.c.b16 %v619, %v618
        %v634 = vpack.c.b16 %v621, %v620
        %v635 = vpack.c.b16 %v623, %v622
        %v636 = vpack.c.b16 %v625, %v624
        %v637 = vpack.c.b16 %v627, %v626
        %v638 = vpack.c.b16 %v629, %v628
        %v639 = vpack.c.b16 %v631, %v630
        %v664 = vunpack.c.l.b16 %v472
        %v665 = vunpack.c.l.b16 %v473
        %v666 = vunpack.c.l.b16 %v474
        %v667 = vunpack.c.l.b16 %v475
        %v668 = vunpack.c.l.b16 %v476
        %v669 = vunpack.c.l.b16 %v477
        %v670 = vunpack.c.l.b16 %v478
        %v671 = vunpack.c.l.b16 %v479
        %v672 = vunpack.c.l.b16 %v480
        %v673 = vunpack.c.l.b16 %v481
        %v674 = vunpack.c.l.b16 %v482
        %v675 = vunpack.c.l.b16 %v483
        %v676 = vunpack.c.l.b16 %v484
        %v677 = vunpack.c.l.b16 %v485
        %v678 = vunpack.c.l.b16 %v486
        %v679 = vunpack.c.l.b16 %v487
        %v680 = vpack.c.b16 %v665, %v664
        %v681 = vpack.c.b16 %v667, %v666
        %v682 = vpack.c.b16 %v669, %v668
        %v683 = vpack.c.b16 %v671, %v670
        %v684 = vpack.c.b16 %v673, %v672
        %v685 = vpack.c.b16 %v675, %v674
        %v686 = vpack.c.b16 %v677, %v676
        %v687 = vpack.c.b16 %v679, %v678
        %696 = vmatprep.subr.bf16.mxu0 0
        %697 = vmatpush1.bf16.msra.mxu0 %v680
        %698 = vmatprep.subr.bf16.mxu0 0
        %699 = vmatpush1.bf16.msra.mxu0 %v681
        %700 = vmatprep.subr.bf16.mxu0 0
        %701 = vmatpush1.bf16.msra.mxu0 %v682
        %702 = vmatprep.subr.bf16.mxu0 0
        %703 = vmatpush1.bf16.msra.mxu0 %v683
        %704 = vmatprep.subr.bf16.mxu0 0
        %705 = vmatpush1.bf16.msra.mxu0 %v684
        %706 = vmatprep.subr.bf16.mxu0 0
        %707 = vmatpush1.bf16.msra.mxu0 %v685
        %708 = vmatprep.subr.bf16.mxu0 0
        %709 = vmatpush1.bf16.msra.mxu0 %v686
        %710 = vmatprep.subr.bf16.mxu0 0
        %711 = vmatpush1.bf16.msra.mxu0 %v687
        %712 = vmatprep.subr.bf16.mxu0 0
        %713 = vmatpush1.bf16.msra.mxu0 0
        %714 = vmatprep.subr.bf16.mxu0 0
        %715 = vmatpush1.bf16.msra.mxu0 0
        %716 = vmatprep.subr.bf16.mxu0 0
        %717 = vmatpush1.bf16.msra.mxu0 0
        %718 = vmatprep.subr.bf16.mxu0 0
        %719 = vmatpush1.bf16.msra.mxu0 0
        %720 = vmatprep.subr.bf16.mxu0 0
        %721 = vmatpush1.bf16.msra.mxu0 0
        %722 = vmatprep.subr.bf16.mxu0 0
        %723 = vmatpush1.bf16.msra.mxu0 0
        %724 = vmatprep.subr.bf16.mxu0 0
        %725 = vmatpush1.bf16.msra.mxu0 0
        %726 = vmatprep.subr.bf16.mxu0 0
        %727 = vmatpush1.bf16.msra.mxu0 0
        %728 = vmatprep.mubr.bf16.mxu0 0
        %729 = vmatmul.mubr.bf16.gmra.mrb[0].mxu0 %v632
        %v730 = vpop.f32.mrb[0].mxu0
        %v731 = vadd.f32 0.0, %v730
        %v732 = vpop.f32.mrb[0].mxu0
        %v733 = vpop.f32.mrb[0].mxu0
        %v734 = vadd.f32 0.0, %v733
        %v735 = vpop.f32.mrb[0].mxu0
        %736 = vmatprep.mubr.bf16.mxu0 0
        %737 = vmatmul.mubr.bf16.gmra.mrb[0].mxu0 %v633
        %v738 = vpop.f32.mrb[0].mxu0
        %v739 = vadd.f32 0.0, %v738
        %v740 = vpop.f32.mrb[0].mxu0
        %v741 = vpop.f32.mrb[0].mxu0
        %v742 = vadd.f32 0.0, %v741
        %v743 = vpop.f32.mrb[0].mxu0
        %744 = vmatprep.mubr.bf16.mxu0 0
        %745 = vmatmul.mubr.bf16.gmra.mrb[0].mxu0 %v634
        %v746 = vpop.f32.mrb[0].mxu0
        %v747 = vadd.f32 0.0, %v746
        %v748 = vpop.f32.mrb[0].mxu0
        %v749 = vpop.f32.mrb[0].mxu0
        %v750 = vadd.f32 0.0, %v749
        %v751 = vpop.f32.mrb[0].mxu0
        %752 = vmatprep.mubr.bf16.mxu0 0
        %753 = vmatmul.mubr.bf16.gmra.mrb[0].mxu0 %v635
        %v754 = vpop.f32.mrb[0].mxu0
        %v755 = vadd.f32 0.0, %v754
        %v756 = vpop.f32.mrb[0].mxu0
        %v757 = vpop.f32.mrb[0].mxu0
        %v758 = vadd.f32 0.0, %v757
        %v759 = vpop.f32.mrb[0].mxu0
        %760 = vmatprep.mubr.bf16.mxu0 0
        %761 = vmatmul.mubr.bf16.gmra.mrb[0].mxu0 %v636
        %v762 = vpop.f32.mrb[0].mxu0
        %v763 = vadd.f32 0.0, %v762
        %v764 = vpop.f32.mrb[0].mxu0
        %v765 = vpop.f32.mrb[0].mxu0
        %v766 = vadd.f32 0.0, %v765
        %v767 = vpop.f32.mrb[0].mxu0
        %768 = vmatprep.mubr.bf16.mxu0 0
        %769 = vmatmul.mubr.bf16.gmra.mrb[0].mxu0 %v637
        %v770 = vpop.f32.mrb[0].mxu0
        %v771 = vadd.f32 0.0, %v770
        %v772 = vpop.f32.mrb[0].mxu0
        %v773 = vpop.f32.mrb[0].mxu0
        %v774 = vadd.f32 0.0, %v773
        %v775 = vpop.f32.mrb[0].mxu0
        %776 = vmatprep.mubr.bf16.mxu0 0
        %777 = vmatmul.mubr.bf16.gmra.mrb[0].mxu0 %v638
        %v778 = vpop.f32.mrb[0].mxu0
        %v779 = vadd.f32 0.0, %v778
        %v780 = vpop.f32.mrb[0].mxu0
        %v781 = vpop.f32.mrb[0].mxu0
        %v782 = vadd.f32 0.0, %v781
        %v783 = vpop.f32.mrb[0].mxu0
        %784 = vmatprep.mubr.bf16.mxu0 0
        %785 = vmatmul.mubr.bf16.gmra.mrb[0].mxu0 %v639
        %v786 = vpop.f32.mrb[0].mxu0
        %v787 = vadd.f32 0.0, %v786
        %v788 = vpop.f32.mrb[0].mxu0
        %v789 = vpop.f32.mrb[0].mxu0
        %v790 = vadd.f32 0.0, %v789
        %v791 = vpop.f32.mrb[0].mxu0
        %792 = vdwg.mxu0
        %v809 = vunpack.c.l.b16 %v389
        %v810 = vunpack.c.l.b16 %v390
        %v811 = vunpack.c.l.b16 %v391
        %v812 = vunpack.c.l.b16 %v392
        %v813 = vunpack.c.l.b16 %v393
        %v814 = vunpack.c.l.b16 %v394
        %v815 = vunpack.c.l.b16 %v395
        %v816 = vunpack.c.l.b16 %v396
        %v817 = vunpack.c.l.b16 %v397
        %v818 = vunpack.c.l.b16 %v398
        %v819 = vunpack.c.l.b16 %v399
        %v820 = vunpack.c.l.b16 %v400
        %v821 = vunpack.c.l.b16 %v401
        %v822 = vunpack.c.l.b16 %v402
        %v823 = vunpack.c.l.b16 %v403
        %v824 = vunpack.c.l.b16 %v404
        %v825 = vpack.c.b16 %v810, %v809
        %v826 = vpack.c.b16 %v812, %v811
        %v827 = vpack.c.b16 %v814, %v813
        %v828 = vpack.c.b16 %v816, %v815
        %v829 = vpack.c.b16 %v818, %v817
        %v830 = vpack.c.b16 %v820, %v819
        %v831 = vpack.c.b16 %v822, %v821
        %v832 = vpack.c.b16 %v824, %v823
        %v857 = vunpack.c.l.b16 %v488
        %v858 = vunpack.c.l.b16 %v489
        %v859 = vunpack.c.l.b16 %v490
        %v860 = vunpack.c.l.b16 %v491
        %v861 = vunpack.c.l.b16 %v492
        %v862 = vunpack.c.l.b16 %v493
        %v863 = vunpack.c.l.b16 %v494
        %v864 = vunpack.c.l.b16 %v495
        %v865 = vunpack.c.l.b16 %v496
        %v866 = vunpack.c.l.b16 %v497
        %v867 = vunpack.c.l.b16 %v498
        %v868 = vunpack.c.l.b16 %v499
        %v869 = vunpack.c.l.b16 %v500
        %v870 = vunpack.c.l.b16 %v501
        %v871 = vunpack.c.l.b16 %v502
        %v872 = vunpack.c.l.b16 %v503
        %v873 = vpack.c.b16 %v858, %v857
        %v874 = vpack.c.b16 %v860, %v859
        %v875 = vpack.c.b16 %v862, %v861
        %v876 = vpack.c.b16 %v864, %v863
        %v877 = vpack.c.b16 %v866, %v865
        %v878 = vpack.c.b16 %v868, %v867
        %v879 = vpack.c.b16 %v870, %v869
        %v880 = vpack.c.b16 %v872, %v871
        %889 = vmatprep.subr.bf16.mxu0 0
        %890 = vmatpush1.bf16.msra.mxu0 %v873
        %891 = vmatprep.subr.bf16.mxu0 0
        %892 = vmatpush1.bf16.msra.mxu0 %v874
        %893 = vmatprep.subr.bf16.mxu0 0
        %894 = vmatpush1.bf16.msra.mxu0 %v875
        %895 = vmatprep.subr.bf16.mxu0 0
        %896 = vmatpush1.bf16.msra.mxu0 %v876
        %897 = vmatprep.subr.bf16.mxu0 0
        %898 = vmatpush1.bf16.msra.mxu0 %v877
        %899 = vmatprep.subr.bf16.mxu0 0
        %900 = vmatpush1.bf16.msra.mxu0 %v878
        %901 = vmatprep.subr.bf16.mxu0 0
        %902 = vmatpush1.bf16.msra.mxu0 %v879
        %903 = vmatprep.subr.bf16.mxu0 0
        %904 = vmatpush1.bf16.msra.mxu0 %v880
        %905 = vmatprep.subr.bf16.mxu0 0
        %906 = vmatpush1.bf16.msra.mxu0 0
        %907 = vmatprep.subr.bf16.mxu0 0
        %908 = vmatpush1.bf16.msra.mxu0 0
        %909 = vmatprep.subr.bf16.mxu0 0
        %910 = vmatpush1.bf16.msra.mxu0 0
        %911 = vmatprep.subr.bf16.mxu0 0
        %912 = vmatpush1.bf16.msra.mxu0 0
        %913 = vmatprep.subr.bf16.mxu0 0
        %914 = vmatpush1.bf16.msra.mxu0 0
        %915 = vmatprep.subr.bf16.mxu0 0
        %916 = vmatpush1.bf16.msra.mxu0 0
        %917 = vmatprep.subr.bf16.mxu0 0
        %918 = vmatpush1.bf16.msra.mxu0 0
        %919 = vmatprep.subr.bf16.mxu0 0
        %920 = vmatpush1.bf16.msra.mxu0 0
        %921 = vmatprep.mubr.bf16.mxu0 0
        %922 = vmatmul.mubr.bf16.gmra.mrb[0].mxu0 %v825
        %v923 = vpop.f32.mrb[0].mxu0
        %v924 = vadd.f32 0.0, %v923
        %v925 = vpop.f32.mrb[0].mxu0
        %v926 = vpop.f32.mrb[0].mxu0
        %v927 = vadd.f32 0.0, %v926
        %v928 = vpop.f32.mrb[0].mxu0
        %929 = vmatprep.mubr.bf16.mxu0 0
        %930 = vmatmul.mubr.bf16.gmra.mrb[0].mxu0 %v826
        %v931 = vpop.f32.mrb[0].mxu0
        %v932 = vadd.f32 0.0, %v931
        %v933 = vpop.f32.mrb[0].mxu0
        %v934 = vpop.f32.mrb[0].mxu0
        %v935 = vadd.f32 0.0, %v934
        %v936 = vpop.f32.mrb[0].mxu0
        %937 = vmatprep.mubr.bf16.mxu0 0
        %938 = vmatmul.mubr.bf16.gmra.mrb[0].mxu0 %v827
        %v939 = vpop.f32.mrb[0].mxu0
        %v940 = vadd.f32 0.0, %v939
        %v941 = vpop.f32.mrb[0].mxu0
        %v942 = vpop.f32.mrb[0].mxu0
        %v943 = vadd.f32 0.0, %v942
        %v944 = vpop.f32.mrb[0].mxu0
        %945 = vmatprep.mubr.bf16.mxu0 0
        %946 = vmatmul.mubr.bf16.gmra.mrb[0].mxu0 %v828
        %v947 = vpop.f32.mrb[0].mxu0
        %v948 = vadd.f32 0.0, %v947
        %v949 = vpop.f32.mrb[0].mxu0
        %v950 = vpop.f32.mrb[0].mxu0
        %v951 = vadd.f32 0.0, %v950
        %v952 = vpop.f32.mrb[0].mxu0
        %953 = vmatprep.mubr.bf16.mxu0 0
        %954 = vmatmul.mubr.bf16.gmra.mrb[0].mxu0 %v829
        %v955 = vpop.f32.mrb[0].mxu0
        %v956 = vadd.f32 0.0, %v955
        %v957 = vpop.f32.mrb[0].mxu0
        %v958 = vpop.f32.mrb[0].mxu0
        %v959 = vadd.f32 0.0, %v958
        %v960 = vpop.f32.mrb[0].mxu0
        %961 = vmatprep.mubr.bf16.mxu0 0
        %962 = vmatmul.mubr.bf16.gmra.mrb[0].mxu0 %v830
        %v963 = vpop.f32.mrb[0].mxu0
        %v964 = vadd.f32 0.0, %v963
        %v965 = vpop.f32.mrb[0].mxu0
        %v966 = vpop.f32.mrb[0].mxu0
        %v967 = vadd.f32 0.0, %v966
        %v968 = vpop.f32.mrb[0].mxu0
        %969 = vmatprep.mubr.bf16.mxu0 0
        %970 = vmatmul.mubr.bf16.gmra.mrb[0].mxu0 %v831
        %v971 = vpop.f32.mrb[0].mxu0
        %v972 = vadd.f32 0.0, %v971
        %v973 = vpop.f32.mrb[0].mxu0
        %v974 = vpop.f32.mrb[0].mxu0
        %v975 = vadd.f32 0.0, %v974
        %v976 = vpop.f32.mrb[0].mxu0
        %977 = vmatprep.mubr.bf16.mxu0 0
        %978 = vmatmul.mubr.bf16.gmra.mrb[0].mxu0 %v832
        %v979 = vpop.f32.mrb[0].mxu0
        %v980 = vadd.f32 0.0, %v979
        %v981 = vpop.f32.mrb[0].mxu0
        %v982 = vpop.f32.mrb[0].mxu0
        %v983 = vadd.f32 0.0, %v982
        %v984 = vpop.f32.mrb[0].mxu0
        %985 = vdwg.mxu0
        %v1002 = vunpack.c.l.b16 %v405
        %v1003 = vunpack.c.l.b16 %v406
        %v1004 = vunpack.c.l.b16 %v407
        %v1005 = vunpack.c.l.b16 %v408
        %v1006 = vunpack.c.l.b16 %v409
        %v1007 = vunpack.c.l.b16 %v410
        %v1008 = vunpack.c.l.b16 %v411
        %v1009 = vunpack.c.l.b16 %v412
        %v1010 = vunpack.c.l.b16 %v413
        %v1011 = vunpack.c.l.b16 %v414
        %v1012 = vunpack.c.l.b16 %v415
        %v1013 = vunpack.c.l.b16 %v416
        %v1014 = vunpack.c.l.b16 %v417
        %v1015 = vunpack.c.l.b16 %v418
        %v1016 = vunpack.c.l.b16 %v419
        %v1017 = vunpack.c.l.b16 %v420
        %v1018 = vpack.c.b16 %v1003, %v1002
        %v1019 = vpack.c.b16 %v1005, %v1004
        %v1020 = vpack.c.b16 %v1007, %v1006
        %v1021 = vpack.c.b16 %v1009, %v1008
        %v1022 = vpack.c.b16 %v1011, %v1010
        %v1023 = vpack.c.b16 %v1013, %v1012
        %v1024 = vpack.c.b16 %v1015, %v1014
        %v1025 = vpack.c.b16 %v1017, %v1016
        %v1050 = vunpack.c.l.b16 %v504
        %v1051 = vunpack.c.l.b16 %v505
        %v1052 = vunpack.c.l.b16 %v506
        %v1053 = vunpack.c.l.b16 %v507
        %v1054 = vunpack.c.l.b16 %v508
        %v1055 = vunpack.c.l.b16 %v509
        %v1056 = vunpack.c.l.b16 %v510
        %v1057 = vunpack.c.l.b16 %v511
        %v1058 = vunpack.c.l.b16 %v512
        %v1059 = vunpack.c.l.b16 %v513
        %v1060 = vunpack.c.l.b16 %v514
        %v1061 = vunpack.c.l.b16 %v515
        %v1062 = vunpack.c.l.b16 %v516
        %v1063 = vunpack.c.l.b16 %v517
        %v1064 = vunpack.c.l.b16 %v518
        %v1065 = vunpack.c.l.b16 %v519
        %v1066 = vpack.c.b16 %v1051, %v1050
        %v1067 = vpack.c.b16 %v1053, %v1052
        %v1068 = vpack.c.b16 %v1055, %v1054
        %v1069 = vpack.c.b16 %v1057, %v1056
        %v1070 = vpack.c.b16 %v1059, %v1058
        %v1071 = vpack.c.b16 %v1061, %v1060
        %v1072 = vpack.c.b16 %v1063, %v1062
        %v1073 = vpack.c.b16 %v1065, %v1064
        %1082 = vmatprep.subr.bf16.mxu0 0
        %1083 = vmatpush1.bf16.msra.mxu0 %v1066
        %1084 = vmatprep.subr.bf16.mxu0 0
        %1085 = vmatpush1.bf16.msra.mxu0 %v1067
        %1086 = vmatprep.subr.bf16.mxu0 0
        %1087 = vmatpush1.bf16.msra.mxu0 %v1068
        %1088 = vmatprep.subr.bf16.mxu0 0
        %1089 = vmatpush1.bf16.msra.mxu0 %v1069
        %1090 = vmatprep.subr.bf16.mxu0 0
        %1091 = vmatpush1.bf16.msra.mxu0 %v1070
        %1092 = vmatprep.subr.bf16.mxu0 0
        %1093 = vmatpush1.bf16.msra.mxu0 %v1071
        %1094 = vmatprep.subr.bf16.mxu0 0
        %1095 = vmatpush1.bf16.msra.mxu0 %v1072
        %1096 = vmatprep.subr.bf16.mxu0 0
        %1097 = vmatpush1.bf16.msra.mxu0 %v1073
        %1098 = vmatprep.subr.bf16.mxu0 0
        %1099 = vmatpush1.bf16.msra.mxu0 0
        %1100 = vmatprep.subr.bf16.mxu0 0
        %1101 = vmatpush1.bf16.msra.mxu0 0
        %1102 = vmatprep.subr.bf16.mxu0 0
        %1103 = vmatpush1.bf16.msra.mxu0 0
        %1104 = vmatprep.subr.bf16.mxu0 0
        %1105 = vmatpush1.bf16.msra.mxu0 0
        %1106 = vmatprep.subr.bf16.mxu0 0
        %1107 = vmatpush1.bf16.msra.mxu0 0
        %1108 = vmatprep.subr.bf16.mxu0 0
        %1109 = vmatpush1.bf16.msra.mxu0 0
        %1110 = vmatprep.subr.bf16.mxu0 0
        %1111 = vmatpush1.bf16.msra.mxu0 0
        %1112 = vmatprep.subr.bf16.mxu0 0
        %1113 = vmatpush1.bf16.msra.mxu0 0
        %1114 = vmatprep.mubr.bf16.mxu0 0
        %1115 = vmatmul.mubr.bf16.gmra.mrb[0].mxu0 %v1018
        %v1116 = vpop.f32.mrb[0].mxu0
        %v1117 = vadd.f32 0.0, %v1116
        %v1118 = vpop.f32.mrb[0].mxu0
        %v1119 = vpop.f32.mrb[0].mxu0
        %v1120 = vadd.f32 0.0, %v1119
        %v1121 = vpop.f32.mrb[0].mxu0
        %1122 = vmatprep.mubr.bf16.mxu0 0
        %1123 = vmatmul.mubr.bf16.gmra.mrb[0].mxu0 %v1019
        %v1124 = vpop.f32.mrb[0].mxu0
        %v1125 = vadd.f32 0.0, %v1124
        %v1126 = vpop.f32.mrb[0].mxu0
        %v1127 = vpop.f32.mrb[0].mxu0
        %v1128 = vadd.f32 0.0, %v1127
        %v1129 = vpop.f32.mrb[0].mxu0
        %1130 = vmatprep.mubr.bf16.mxu0 0
        %1131 = vmatmul.mubr.bf16.gmra.mrb[0].mxu0 %v1020
        %v1132 = vpop.f32.mrb[0].mxu0
        %v1133 = vadd.f32 0.0, %v1132
        %v1134 = vpop.f32.mrb[0].mxu0
        %v1135 = vpop.f32.mrb[0].mxu0
        %v1136 = vadd.f32 0.0, %v1135
        %v1137 = vpop.f32.mrb[0].mxu0
        %1138 = vmatprep.mubr.bf16.mxu0 0
        %1139 = vmatmul.mubr.bf16.gmra.mrb[0].mxu0 %v1021
        %v1140 = vpop.f32.mrb[0].mxu0
        %v1141 = vadd.f32 0.0, %v1140
        %v1142 = vpop.f32.mrb[0].mxu0
        %v1143 = vpop.f32.mrb[0].mxu0
        %v1144 = vadd.f32 0.0, %v1143
        %v1145 = vpop.f32.mrb[0].mxu0
        %1146 = vmatprep.mubr.bf16.mxu0 0
        %1147 = vmatmul.mubr.bf16.gmra.mrb[0].mxu0 %v1022
        %v1148 = vpop.f32.mrb[0].mxu0
        %v1149 = vadd.f32 0.0, %v1148
        %v1150 = vpop.f32.mrb[0].mxu0
        %v1151 = vpop.f32.mrb[0].mxu0
        %v1152 = vadd.f32 0.0, %v1151
        %v1153 = vpop.f32.mrb[0].mxu0
        %1154 = vmatprep.mubr.bf16.mxu0 0
        %1155 = vmatmul.mubr.bf16.gmra.mrb[0].mxu0 %v1023
        %v1156 = vpop.f32.mrb[0].mxu0
        %v1157 = vadd.f32 0.0, %v1156
        %v1158 = vpop.f32.mrb[0].mxu0
        %v1159 = vpop.f32.mrb[0].mxu0
        %v1160 = vadd.f32 0.0, %v1159
        %v1161 = vpop.f32.mrb[0].mxu0
        %1162 = vmatprep.mubr.bf16.mxu0 0
        %1163 = vmatmul.mubr.bf16.gmra.mrb[0].mxu0 %v1024
        %v1164 = vpop.f32.mrb[0].mxu0
        %v1165 = vadd.f32 0.0, %v1164
        %v1166 = vpop.f32.mrb[0].mxu0
        %v1167 = vpop.f32.mrb[0].mxu0
        %v1168 = vadd.f32 0.0, %v1167
        %v1169 = vpop.f32.mrb[0].mxu0
        %1170 = vmatprep.mubr.bf16.mxu0 0
        %1171 = vmatmul.mubr.bf16.gmra.mrb[0].mxu0 %v1025
        %v1172 = vpop.f32.mrb[0].mxu0
        %v1173 = vadd.f32 0.0, %v1172
        %v1174 = vpop.f32.mrb[0].mxu0
        %v1175 = vpop.f32.mrb[0].mxu0
        %v1176 = vadd.f32 0.0, %v1175
        %v1177 = vpop.f32.mrb[0].mxu0
        %1178 = vdwg.mxu0
        %v1195 = vunpack.c.l.b16 %v421
        %v1196 = vunpack.c.l.b16 %v422
        %v1197 = vunpack.c.l.b16 %v423
        %v1198 = vunpack.c.l.b16 %v424
        %v1199 = vunpack.c.l.b16 %v425
        %v1200 = vunpack.c.l.b16 %v426
        %v1201 = vunpack.c.l.b16 %v427
        %v1202 = vunpack.c.l.b16 %v428
        %v1203 = vunpack.c.l.b16 %v429
        %v1204 = vunpack.c.l.b16 %v430
        %v1205 = vunpack.c.l.b16 %v431
        %v1206 = vunpack.c.l.b16 %v432
        %v1207 = vunpack.c.l.b16 %v433
        %v1208 = vunpack.c.l.b16 %v434
        %v1209 = vunpack.c.l.b16 %v435
        %v1210 = vunpack.c.l.b16 %v436
        %v1211 = vpack.c.b16 %v1196, %v1195
        %v1212 = vpack.c.b16 %v1198, %v1197
        %v1213 = vpack.c.b16 %v1200, %v1199
        %v1214 = vpack.c.b16 %v1202, %v1201
        %v1215 = vpack.c.b16 %v1204, %v1203
        %v1216 = vpack.c.b16 %v1206, %v1205
        %v1217 = vpack.c.b16 %v1208, %v1207
        %v1218 = vpack.c.b16 %v1210, %v1209
        %v1243 = vunpack.c.l.b16 %v520
        %v1244 = vunpack.c.l.b16 %v521
        %v1245 = vunpack.c.l.b16 %v522
        %v1246 = vunpack.c.l.b16 %v523
        %v1247 = vunpack.c.l.b16 %v524
        %v1248 = vunpack.c.l.b16 %v525
        %v1249 = vunpack.c.l.b16 %v526
        %v1250 = vunpack.c.l.b16 %v527
        %v1251 = vunpack.c.l.b16 %v528
        %v1252 = vunpack.c.l.b16 %v529
        %v1253 = vunpack.c.l.b16 %v530
        %v1254 = vunpack.c.l.b16 %v531
        %v1255 = vunpack.c.l.b16 %v532
        %v1256 = vunpack.c.l.b16 %v533
        %v1257 = vunpack.c.l.b16 %v534
        %v1258 = vunpack.c.l.b16 %v535
        %v1259 = vpack.c.b16 %v1244, %v1243
        %v1260 = vpack.c.b16 %v1246, %v1245
        %v1261 = vpack.c.b16 %v1248, %v1247
        %v1262 = vpack.c.b16 %v1250, %v1249
        %v1263 = vpack.c.b16 %v1252, %v1251
        %v1264 = vpack.c.b16 %v1254, %v1253
        %v1265 = vpack.c.b16 %v1256, %v1255
        %v1266 = vpack.c.b16 %v1258, %v1257
        %1275 = vmatprep.subr.bf16.mxu0 0
        %1276 = vmatpush1.bf16.msra.mxu0 %v1259
        %1277 = vmatprep.subr.bf16.mxu0 0
        %1278 = vmatpush1.bf16.msra.mxu0 %v1260
        %1279 = vmatprep.subr.bf16.mxu0 0
        %1280 = vmatpush1.bf16.msra.mxu0 %v1261
        %1281 = vmatprep.subr.bf16.mxu0 0
        %1282 = vmatpush1.bf16.msra.mxu0 %v1262
        %1283 = vmatprep.subr.bf16.mxu0 0
        %1284 = vmatpush1.bf16.msra.mxu0 %v1263
        %1285 = vmatprep.subr.bf16.mxu0 0
        %1286 = vmatpush1.bf16.msra.mxu0 %v1264
        %1287 = vmatprep.subr.bf16.mxu0 0
        %1288 = vmatpush1.bf16.msra.mxu0 %v1265
        %1289 = vmatprep.subr.bf16.mxu0 0
        %1290 = vmatpush1.bf16.msra.mxu0 %v1266
        %1291 = vmatprep.subr.bf16.mxu0 0
        %1292 = vmatpush1.bf16.msra.mxu0 0
        %1293 = vmatprep.subr.bf16.mxu0 0
        %1294 = vmatpush1.bf16.msra.mxu0 0
        %1295 = vmatprep.subr.bf16.mxu0 0
        %1296 = vmatpush1.bf16.msra.mxu0 0
        %1297 = vmatprep.subr.bf16.mxu0 0
        %1298 = vmatpush1.bf16.msra.mxu0 0
        %1299 = vmatprep.subr.bf16.mxu0 0
        %1300 = vmatpush1.bf16.msra.mxu0 0
        %1301 = vmatprep.subr.bf16.mxu0 0
        %1302 = vmatpush1.bf16.msra.mxu0 0
        %1303 = vmatprep.subr.bf16.mxu0 0
        %1304 = vmatpush1.bf16.msra.mxu0 0
        %1305 = vmatprep.subr.bf16.mxu0 0
        %1306 = vmatpush1.bf16.msra.mxu0 0
        %1307 = vmatprep.mubr.bf16.mxu0 0
        %1308 = vmatmul.mubr.bf16.gmra.mrb[0].mxu0 %v1211
        %v1309 = vpop.f32.mrb[0].mxu0
        %v1310 = vadd.f32 0.0, %v1309
        %v1311 = vpop.f32.mrb[0].mxu0
        %v1312 = vpop.f32.mrb[0].mxu0
        %v1313 = vadd.f32 0.0, %v1312
        %v1314 = vpop.f32.mrb[0].mxu0
        %1315 = vmatprep.mubr.bf16.mxu0 0
        %1316 = vmatmul.mubr.bf16.gmra.mrb[0].mxu0 %v1212
        %v1317 = vpop.f32.mrb[0].mxu0
        %v1318 = vadd.f32 0.0, %v1317
        %v1319 = vpop.f32.mrb[0].mxu0
        %v1320 = vpop.f32.mrb[0].mxu0
        %v1321 = vadd.f32 0.0, %v1320
        %v1322 = vpop.f32.mrb[0].mxu0
        %1323 = vmatprep.mubr.bf16.mxu0 0
        %1324 = vmatmul.mubr.bf16.gmra.mrb[0].mxu0 %v1213
        %v1325 = vpop.f32.mrb[0].mxu0
        %v1326 = vadd.f32 0.0, %v1325
        %v1327 = vpop.f32.mrb[0].mxu0
        %v1328 = vpop.f32.mrb[0].mxu0
        %v1329 = vadd.f32 0.0, %v1328
        %v1330 = vpop.f32.mrb[0].mxu0
        %1331 = vmatprep.mubr.bf16.mxu0 0
        %1332 = vmatmul.mubr.bf16.gmra.mrb[0].mxu0 %v1214
        %v1333 = vpop.f32.mrb[0].mxu0
        %v1334 = vadd.f32 0.0, %v1333
        %v1335 = vpop.f32.mrb[0].mxu0
        %v1336 = vpop.f32.mrb[0].mxu0
        %v1337 = vadd.f32 0.0, %v1336
        %v1338 = vpop.f32.mrb[0].mxu0
        %1339 = vmatprep.mubr.bf16.mxu0 0
        %1340 = vmatmul.mubr.bf16.gmra.mrb[0].mxu0 %v1215
        %v1341 = vpop.f32.mrb[0].mxu0
        %v1342 = vadd.f32 0.0, %v1341
        %v1343 = vpop.f32.mrb[0].mxu0
        %v1344 = vpop.f32.mrb[0].mxu0
        %v1345 = vadd.f32 0.0, %v1344
        %v1346 = vpop.f32.mrb[0].mxu0
        %1347 = vmatprep.mubr.bf16.mxu0 0
        %1348 = vmatmul.mubr.bf16.gmra.mrb[0].mxu0 %v1216
        %v1349 = vpop.f32.mrb[0].mxu0
        %v1350 = vadd.f32 0.0, %v1349
        %v1351 = vpop.f32.mrb[0].mxu0
        %v1352 = vpop.f32.mrb[0].mxu0
        %v1353 = vadd.f32 0.0, %v1352
        %v1354 = vpop.f32.mrb[0].mxu0
        %1355 = vmatprep.mubr.bf16.mxu0 0
        %1356 = vmatmul.mubr.bf16.gmra.mrb[0].mxu0 %v1217
        %v1357 = vpop.f32.mrb[0].mxu0
        %v1358 = vadd.f32 0.0, %v1357
        %v1359 = vpop.f32.mrb[0].mxu0
        %v1360 = vpop.f32.mrb[0].mxu0
        %v1361 = vadd.f32 0.0, %v1360
        %v1362 = vpop.f32.mrb[0].mxu0
        %1363 = vmatprep.mubr.bf16.mxu0 0
        %1364 = vmatmul.mubr.bf16.gmra.mrb[0].mxu0 %v1218
        %v1365 = vpop.f32.mrb[0].mxu0
        %v1366 = vadd.f32 0.0, %v1365
        %v1367 = vpop.f32.mrb[0].mxu0
        %v1368 = vpop.f32.mrb[0].mxu0
        %v1369 = vadd.f32 0.0, %v1368
        %v1370 = vpop.f32.mrb[0].mxu0
        %1371 = vdwg.mxu0
        %v1372 = vstv %s471
        %v1373 = vmul.f32 %v1372, %v731
        %v1374 = vmul.f32 %v1372, %v734
        %v1375 = vmul.f32 %v1372, %v739
        %v1376 = vmul.f32 %v1372, %v742
        %v1377 = vmul.f32 %v1372, %v747
        %v1378 = vmul.f32 %v1372, %v750
        %v1379 = vmul.f32 %v1372, %v755
        %v1380 = vmul.f32 %v1372, %v758
        %v1381 = vmul.f32 %v1372, %v763
        %v1382 = vmul.f32 %v1372, %v766
        %v1383 = vmul.f32 %v1372, %v771
        %v1384 = vmul.f32 %v1372, %v774
        %v1385 = vmul.f32 %v1372, %v779
        %v1386 = vmul.f32 %v1372, %v782
        %v1387 = vmul.f32 %v1372, %v787
        %v1388 = vmul.f32 %v1372, %v790
        %v1389 = vmul.f32 %v1372, %v924
        %v1390 = vmul.f32 %v1372, %v927
        %v1391 = vmul.f32 %v1372, %v932
        %v1392 = vmul.f32 %v1372, %v935
        %v1393 = vmul.f32 %v1372, %v940
        %v1394 = vmul.f32 %v1372, %v943
        %v1395 = vmul.f32 %v1372, %v948
        %v1396 = vmul.f32 %v1372, %v951
        %v1397 = vmul.f32 %v1372, %v956
        %v1398 = vmul.f32 %v1372, %v959
        %v1399 = vmul.f32 %v1372, %v964
        %v1400 = vmul.f32 %v1372, %v967
        %v1401 = vmul.f32 %v1372, %v972
        %v1402 = vmul.f32 %v1372, %v975
        %v1403 = vmul.f32 %v1372, %v980
        %v1404 = vmul.f32 %v1372, %v983
        %v1405 = vmul.f32 %v1372, %v1117
        %v1406 = vmul.f32 %v1372, %v1120
        %v1407 = vmul.f32 %v1372, %v1125
        %v1408 = vmul.f32 %v1372, %v1128
        %v1409 = vmul.f32 %v1372, %v1133
        %v1410 = vmul.f32 %v1372, %v1136
        %v1411 = vmul.f32 %v1372, %v1141
        %v1412 = vmul.f32 %v1372, %v1144
        %v1413 = vmul.f32 %v1372, %v1149
        %v1414 = vmul.f32 %v1372, %v1152
        %v1415 = vmul.f32 %v1372, %v1157
        %v1416 = vmul.f32 %v1372, %v1160
        %v1417 = vmul.f32 %v1372, %v1165
        %v1418 = vmul.f32 %v1372, %v1168
        %v1419 = vmul.f32 %v1372, %v1173
        %v1420 = vmul.f32 %v1372, %v1176
        %v1421 = vmul.f32 %v1372, %v1310
        %v1422 = vmul.f32 %v1372, %v1313
        %v1423 = vmul.f32 %v1372, %v1318
        %v1424 = vmul.f32 %v1372, %v1321
        %v1425 = vmul.f32 %v1372, %v1326
        %v1426 = vmul.f32 %v1372, %v1329
        %v1427 = vmul.f32 %v1372, %v1334
        %v1428 = vmul.f32 %v1372, %v1337
        %v1429 = vmul.f32 %v1372, %v1342
        %v1430 = vmul.f32 %v1372, %v1345
        %v1431 = vmul.f32 %v1372, %v1350
        %v1432 = vmul.f32 %v1372, %v1353
        %v1433 = vmul.f32 %v1372, %v1358
        %v1434 = vmul.f32 %v1372, %v1361
        %v1435 = vmul.f32 %v1372, %v1366
        %v1436 = vmul.f32 %v1372, %v1369
        %v1437 = vadd.f32 %v536, %v1373
        %v1438 = vadd.f32 %v537, %v1374
        %v1439 = vadd.f32 %v538, %v1375
        %v1440 = vadd.f32 %v539, %v1376
        %v1441 = vadd.f32 %v540, %v1377
        %v1442 = vadd.f32 %v541, %v1378
        %v1443 = vadd.f32 %v542, %v1379
        %v1444 = vadd.f32 %v543, %v1380
        %v1445 = vadd.f32 %v544, %v1381
        %v1446 = vadd.f32 %v545, %v1382
        %v1447 = vadd.f32 %v546, %v1383
        %v1448 = vadd.f32 %v547, %v1384
        %v1449 = vadd.f32 %v548, %v1385
        %v1450 = vadd.f32 %v549, %v1386
        %v1451 = vadd.f32 %v550, %v1387
        %v1452 = vadd.f32 %v551, %v1388
        %v1453 = vadd.f32 %v552, %v1389
        %v1454 = vadd.f32 %v553, %v1390
        %v1455 = vadd.f32 %v554, %v1391
        %v1456 = vadd.f32 %v555, %v1392
        %v1457 = vadd.f32 %v556, %v1393
        %v1458 = vadd.f32 %v557, %v1394
        %v1459 = vadd.f32 %v558, %v1395
        %v1460 = vadd.f32 %v559, %v1396
        %v1461 = vadd.f32 %v560, %v1397
        %v1462 = vadd.f32 %v561, %v1398
        %v1463 = vadd.f32 %v562, %v1399
        %v1464 = vadd.f32 %v563, %v1400
        %v1465 = vadd.f32 %v564, %v1401
        %v1466 = vadd.f32 %v565, %v1402
        %v1467 = vadd.f32 %v566, %v1403
        %v1468 = vadd.f32 %v567, %v1404
        %v1469 = vadd.f32 %v568, %v1405
        %v1470 = vadd.f32 %v569, %v1406
        %v1471 = vadd.f32 %v570, %v1407
        %v1472 = vadd.f32 %v571, %v1408
        %v1473 = vadd.f32 %v572, %v1409
        %v1474 = vadd.f32 %v573, %v1410
        %v1475 = vadd.f32 %v574, %v1411
        %v1476 = vadd.f32 %v575, %v1412
        %v1477 = vadd.f32 %v576, %v1413
        %v1478 = vadd.f32 %v577, %v1414
        %v1479 = vadd.f32 %v578, %v1415
        %v1480 = vadd.f32 %v579, %v1416
        %v1481 = vadd.f32 %v580, %v1417
        %v1482 = vadd.f32 %v581, %v1418
        %v1483 = vadd.f32 %v582, %v1419
        %v1484 = vadd.f32 %v583, %v1420
        %v1485 = vadd.f32 %v584, %v1421
        %v1486 = vadd.f32 %v585, %v1422
        %v1487 = vadd.f32 %v586, %v1423
        %v1488 = vadd.f32 %v587, %v1424
        %v1489 = vadd.f32 %v588, %v1425
        %v1490 = vadd.f32 %v589, %v1426
        %v1491 = vadd.f32 %v590, %v1427
        %v1492 = vadd.f32 %v591, %v1428
        %v1493 = vadd.f32 %v592, %v1429
        %v1494 = vadd.f32 %v593, %v1430
        %v1495 = vadd.f32 %v594, %v1431
        %v1496 = vadd.f32 %v595, %v1432
        %v1497 = vadd.f32 %v596, %v1433
        %v1498 = vadd.f32 %v597, %v1434
        %v1499 = vadd.f32 %v598, %v1435
        %v1500 = vadd.f32 %v599, %v1436
        %v1501 = vpack.c.bf16 %v1438, %v1437
        %v1502 = vpack.c.bf16 %v1440, %v1439
        %v1503 = vpack.c.bf16 %v1442, %v1441
        %v1504 = vpack.c.bf16 %v1444, %v1443
        %v1505 = vpack.c.bf16 %v1446, %v1445
        %v1506 = vpack.c.bf16 %v1448, %v1447
        %v1507 = vpack.c.bf16 %v1450, %v1449
        %v1508 = vpack.c.bf16 %v1452, %v1451
        %v1509 = vpack.c.bf16 %v1454, %v1453
        %v1510 = vpack.c.bf16 %v1456, %v1455
        %v1511 = vpack.c.bf16 %v1458, %v1457
        %v1512 = vpack.c.bf16 %v1460, %v1459
        %v1513 = vpack.c.bf16 %v1462, %v1461
        %v1514 = vpack.c.bf16 %v1464, %v1463
        %v1515 = vpack.c.bf16 %v1466, %v1465
        %v1516 = vpack.c.bf16 %v1468, %v1467
        %v1517 = vpack.c.bf16 %v1470, %v1469
        %v1518 = vpack.c.bf16 %v1472, %v1471
        %v1519 = vpack.c.bf16 %v1474, %v1473
        %v1520 = vpack.c.bf16 %v1476, %v1475
        %v1521 = vpack.c.bf16 %v1478, %v1477
        %v1522 = vpack.c.bf16 %v1480, %v1479
        %v1523 = vpack.c.bf16 %v1482, %v1481
        %v1524 = vpack.c.bf16 %v1484, %v1483
        %v1525 = vpack.c.bf16 %v1486, %v1485
        %v1526 = vpack.c.bf16 %v1488, %v1487
        %v1527 = vpack.c.bf16 %v1490, %v1489
        %v1528 = vpack.c.bf16 %v1492, %v1491
        %v1529 = vpack.c.bf16 %v1494, %v1493
        %v1530 = vpack.c.bf16 %v1496, %v1495
        %v1531 = vpack.c.bf16 %v1498, %v1497
        %v1532 = vpack.c.bf16 %v1500, %v1499
        %v1534 = vlaneseq
        %v1535 = vshrl.u32 %v1534, 7
        %v1536 = vsub.s32 0, %v1535
        %v1537 = vrot.slane %v469, %v1536
        %v1555 = vunpack.c.l.b16 %v437
        %v1556 = vunpack.c.l.b16 %v438
        %v1557 = vunpack.c.l.b16 %v439
        %v1558 = vunpack.c.l.b16 %v440
        %v1559 = vunpack.c.l.b16 %v441
        %v1560 = vunpack.c.l.b16 %v442
        %v1561 = vunpack.c.l.b16 %v443
        %v1562 = vunpack.c.l.b16 %v444
        %v1563 = vunpack.c.l.b16 %v445
        %v1564 = vunpack.c.l.b16 %v446
        %v1565 = vunpack.c.l.b16 %v447
        %v1566 = vunpack.c.l.b16 %v448
        %v1567 = vunpack.c.l.b16 %v449
        %v1568 = vunpack.c.l.b16 %v450
        %v1569 = vunpack.c.l.b16 %v451
        %v1570 = vunpack.c.l.b16 %v452
        %v1571 = vpack.c.b16 %v1556, %v1555
        %v1572 = vpack.c.b16 %v1558, %v1557
        %v1573 = vpack.c.b16 %v1560, %v1559
        %v1574 = vpack.c.b16 %v1562, %v1561
        %v1575 = vpack.c.b16 %v1564, %v1563
        %v1576 = vpack.c.b16 %v1566, %v1565
        %v1577 = vpack.c.b16 %v1568, %v1567
        %v1578 = vpack.c.b16 %v1570, %v1569
        %1587 = vmatprep.subr.bf16.mxu0 0
        %1588 = vmatpush1.bf16.msra.mxu0 %v1571
        %1589 = vmatprep.subr.bf16.mxu0 0
        %1590 = vmatpush1.bf16.msra.mxu0 %v1572
        %1591 = vmatprep.subr.bf16.mxu0 0
        %1592 = vmatpush1.bf16.msra.mxu0 %v1573
        %1593 = vmatprep.subr.bf16.mxu0 0
        %1594 = vmatpush1.bf16.msra.mxu0 %v1574
        %1595 = vmatprep.subr.bf16.mxu0 0
        %1596 = vmatpush1.bf16.msra.mxu0 %v1575
        %1597 = vmatprep.subr.bf16.mxu0 0
        %1598 = vmatpush1.bf16.msra.mxu0 %v1576
        %1599 = vmatprep.subr.bf16.mxu0 0
        %1600 = vmatpush1.bf16.msra.mxu0 %v1577
        %1601 = vmatprep.subr.bf16.mxu0 0
        %1602 = vmatpush1.bf16.msra.mxu0 %v1578
        %1603 = vmatprep.subr.bf16.mxu0 0
        %1604 = vmatpush1.bf16.msra.mxu0 0
        %1605 = vmatprep.subr.bf16.mxu0 0
        %1606 = vmatpush1.bf16.msra.mxu0 0
        %1607 = vmatprep.subr.bf16.mxu0 0
        %1608 = vmatpush1.bf16.msra.mxu0 0
        %1609 = vmatprep.subr.bf16.mxu0 0
        %1610 = vmatpush1.bf16.msra.mxu0 0
        %1611 = vmatprep.subr.bf16.mxu0 0
        %1612 = vmatpush1.bf16.msra.mxu0 0
        %1613 = vmatprep.subr.bf16.mxu0 0
        %1614 = vmatpush1.bf16.msra.mxu0 0
        %1615 = vmatprep.subr.bf16.mxu0 0
        %1616 = vmatpush1.bf16.msra.mxu0 0
        %1617 = vmatprep.subr.bf16.mxu0 0
        %1618 = vmatpush1.bf16.msra.mxu0 0
        %1619 = vmatprep.mubr.bf16.mxu0 0
        %1620 = vmatmul.mubr.bf16.gmra.mrb[0].mxu0 %v1501
        %v1621 = vpop.f32.mrb[0].mxu0
        %v1622 = vadd.f32 %v1537, %v1621
        %v1623 = vpop.f32.mrb[0].mxu0
        %v1624 = vpop.f32.mrb[0].mxu0
        %v1625 = vadd.f32 %v1537, %v1624
        %v1626 = vpop.f32.mrb[0].mxu0
        %1627 = vmatprep.mubr.bf16.mxu0 0
        %1628 = vmatmul.mubr.bf16.gmra.mrb[0].mxu0 %v1502
        %v1629 = vpop.f32.mrb[0].mxu0
        %v1630 = vadd.f32 %v1537, %v1629
        %v1631 = vpop.f32.mrb[0].mxu0
        %v1632 = vpop.f32.mrb[0].mxu0
        %v1633 = vadd.f32 %v1537, %v1632
        %v1634 = vpop.f32.mrb[0].mxu0
        %1635 = vmatprep.mubr.bf16.mxu0 0
        %1636 = vmatmul.mubr.bf16.gmra.mrb[0].mxu0 %v1503
        %v1637 = vpop.f32.mrb[0].mxu0
        %v1638 = vadd.f32 %v1537, %v1637
        %v1639 = vpop.f32.mrb[0].mxu0
        %v1640 = vpop.f32.mrb[0].mxu0
        %v1641 = vadd.f32 %v1537, %v1640
        %v1642 = vpop.f32.mrb[0].mxu0
        %1643 = vmatprep.mubr.bf16.mxu0 0
        %1644 = vmatmul.mubr.bf16.gmra.mrb[0].mxu0 %v1504
        %v1645 = vpop.f32.mrb[0].mxu0
        %v1646 = vadd.f32 %v1537, %v1645
        %v1647 = vpop.f32.mrb[0].mxu0
        %v1648 = vpop.f32.mrb[0].mxu0
        %v1649 = vadd.f32 %v1537, %v1648
        %v1650 = vpop.f32.mrb[0].mxu0
        %1651 = vmatprep.mubr.bf16.mxu0 0
        %1652 = vmatmul.mubr.bf16.gmra.mrb[0].mxu0 %v1505
        %v1653 = vpop.f32.mrb[0].mxu0
        %v1654 = vadd.f32 %v1537, %v1653
        %v1655 = vpop.f32.mrb[0].mxu0
        %v1656 = vpop.f32.mrb[0].mxu0
        %v1657 = vadd.f32 %v1537, %v1656
        %v1658 = vpop.f32.mrb[0].mxu0
        %1659 = vmatprep.mubr.bf16.mxu0 0
        %1660 = vmatmul.mubr.bf16.gmra.mrb[0].mxu0 %v1506
        %v1661 = vpop.f32.mrb[0].mxu0
        %v1662 = vadd.f32 %v1537, %v1661
        %v1663 = vpop.f32.mrb[0].mxu0
        %v1664 = vpop.f32.mrb[0].mxu0
        %v1665 = vadd.f32 %v1537, %v1664
        %v1666 = vpop.f32.mrb[0].mxu0
        %1667 = vmatprep.mubr.bf16.mxu0 0
        %1668 = vmatmul.mubr.bf16.gmra.mrb[0].mxu0 %v1507
        %v1669 = vpop.f32.mrb[0].mxu0
        %v1670 = vadd.f32 %v1537, %v1669
        %v1671 = vpop.f32.mrb[0].mxu0
        %v1672 = vpop.f32.mrb[0].mxu0
        %v1673 = vadd.f32 %v1537, %v1672
        %v1674 = vpop.f32.mrb[0].mxu0
        %1675 = vmatprep.mubr.bf16.mxu0 0
        %1676 = vmatmul.mubr.bf16.gmra.mrb[0].mxu0 %v1508
        %v1677 = vpop.f32.mrb[0].mxu0
        %v1678 = vadd.f32 %v1537, %v1677
        %v1679 = vpop.f32.mrb[0].mxu0
        %v1680 = vpop.f32.mrb[0].mxu0
        %v1681 = vadd.f32 %v1537, %v1680
        %v1682 = vpop.f32.mrb[0].mxu0
        %1683 = vmatprep.mubr.bf16.mxu0 0
        %1684 = vmatmul.mubr.bf16.gmra.mrb[0].mxu0 %v1509
        %v1685 = vpop.f32.mrb[0].mxu0
        %v1686 = vadd.f32 %v1537, %v1685
        %v1687 = vpop.f32.mrb[0].mxu0
        %v1688 = vpop.f32.mrb[0].mxu0
        %v1689 = vadd.f32 %v1537, %v1688
        %v1690 = vpop.f32.mrb[0].mxu0
        %1691 = vmatprep.mubr.bf16.mxu0 0
        %1692 = vmatmul.mubr.bf16.gmra.mrb[0].mxu0 %v1510
        %v1693 = vpop.f32.mrb[0].mxu0
        %v1694 = vadd.f32 %v1537, %v1693
        %v1695 = vpop.f32.mrb[0].mxu0
        %v1696 = vpop.f32.mrb[0].mxu0
        %v1697 = vadd.f32 %v1537, %v1696
        %v1698 = vpop.f32.mrb[0].mxu0
        %1699 = vmatprep.mubr.bf16.mxu0 0
        %1700 = vmatmul.mubr.bf16.gmra.mrb[0].mxu0 %v1511
        %v1701 = vpop.f32.mrb[0].mxu0
        %v1702 = vadd.f32 %v1537, %v1701
        %v1703 = vpop.f32.mrb[0].mxu0
        %v1704 = vpop.f32.mrb[0].mxu0
        %v1705 = vadd.f32 %v1537, %v1704
        %v1706 = vpop.f32.mrb[0].mxu0
        %1707 = vmatprep.mubr.bf16.mxu0 0
        %1708 = vmatmul.mubr.bf16.gmra.mrb[0].mxu0 %v1512
        %v1709 = vpop.f32.mrb[0].mxu0
        %v1710 = vadd.f32 %v1537, %v1709
        %v1711 = vpop.f32.mrb[0].mxu0
        %v1712 = vpop.f32.mrb[0].mxu0
        %v1713 = vadd.f32 %v1537, %v1712
        %v1714 = vpop.f32.mrb[0].mxu0
        %1715 = vmatprep.mubr.bf16.mxu0 0
        %1716 = vmatmul.mubr.bf16.gmra.mrb[0].mxu0 %v1513
        %v1717 = vpop.f32.mrb[0].mxu0
        %v1718 = vadd.f32 %v1537, %v1717
        %v1719 = vpop.f32.mrb[0].mxu0
        %v1720 = vpop.f32.mrb[0].mxu0
        %v1721 = vadd.f32 %v1537, %v1720
        %v1722 = vpop.f32.mrb[0].mxu0
        %1723 = vmatprep.mubr.bf16.mxu0 0
        %1724 = vmatmul.mubr.bf16.gmra.mrb[0].mxu0 %v1514
        %v1725 = vpop.f32.mrb[0].mxu0
        %v1726 = vadd.f32 %v1537, %v1725
        %v1727 = vpop.f32.mrb[0].mxu0
        %v1728 = vpop.f32.mrb[0].mxu0
        %v1729 = vadd.f32 %v1537, %v1728
        %v1730 = vpop.f32.mrb[0].mxu0
        %1731 = vmatprep.mubr.bf16.mxu0 0
        %1732 = vmatmul.mubr.bf16.gmra.mrb[0].mxu0 %v1515
        %v1733 = vpop.f32.mrb[0].mxu0
        %v1734 = vadd.f32 %v1537, %v1733
        %v1735 = vpop.f32.mrb[0].mxu0
        %v1736 = vpop.f32.mrb[0].mxu0
        %v1737 = vadd.f32 %v1537, %v1736
        %v1738 = vpop.f32.mrb[0].mxu0
        %1739 = vmatprep.mubr.bf16.mxu0 0
        %1740 = vmatmul.mubr.bf16.gmra.mrb[0].mxu0 %v1516
        %v1741 = vpop.f32.mrb[0].mxu0
        %v1742 = vadd.f32 %v1537, %v1741
        %v1743 = vpop.f32.mrb[0].mxu0
        %v1744 = vpop.f32.mrb[0].mxu0
        %v1745 = vadd.f32 %v1537, %v1744
        %v1746 = vpop.f32.mrb[0].mxu0
        %1747 = vmatprep.mubr.bf16.mxu0 0
        %1748 = vmatmul.mubr.bf16.gmra.mrb[0].mxu0 %v1517
        %v1749 = vpop.f32.mrb[0].mxu0
        %v1750 = vadd.f32 %v1537, %v1749
        %v1751 = vpop.f32.mrb[0].mxu0
        %v1752 = vpop.f32.mrb[0].mxu0
        %v1753 = vadd.f32 %v1537, %v1752
        %v1754 = vpop.f32.mrb[0].mxu0
        %1755 = vmatprep.mubr.bf16.mxu0 0
        %1756 = vmatmul.mubr.bf16.gmra.mrb[0].mxu0 %v1518
        %v1757 = vpop.f32.mrb[0].mxu0
        %v1758 = vadd.f32 %v1537, %v1757
        %v1759 = vpop.f32.mrb[0].mxu0
        %v1760 = vpop.f32.mrb[0].mxu0
        %v1761 = vadd.f32 %v1537, %v1760
        %v1762 = vpop.f32.mrb[0].mxu0
        %1763 = vmatprep.mubr.bf16.mxu0 0
        %1764 = vmatmul.mubr.bf16.gmra.mrb[0].mxu0 %v1519
        %v1765 = vpop.f32.mrb[0].mxu0
        %v1766 = vadd.f32 %v1537, %v1765
        %v1767 = vpop.f32.mrb[0].mxu0
        %v1768 = vpop.f32.mrb[0].mxu0
        %v1769 = vadd.f32 %v1537, %v1768
        %v1770 = vpop.f32.mrb[0].mxu0
        %1771 = vmatprep.mubr.bf16.mxu0 0
        %1772 = vmatmul.mubr.bf16.gmra.mrb[0].mxu0 %v1520
        %v1773 = vpop.f32.mrb[0].mxu0
        %v1774 = vadd.f32 %v1537, %v1773
        %v1775 = vpop.f32.mrb[0].mxu0
        %v1776 = vpop.f32.mrb[0].mxu0
        %v1777 = vadd.f32 %v1537, %v1776
        %v1778 = vpop.f32.mrb[0].mxu0
        %1779 = vmatprep.mubr.bf16.mxu0 0
        %1780 = vmatmul.mubr.bf16.gmra.mrb[0].mxu0 %v1521
        %v1781 = vpop.f32.mrb[0].mxu0
        %v1782 = vadd.f32 %v1537, %v1781
        %v1783 = vpop.f32.mrb[0].mxu0
        %v1784 = vpop.f32.mrb[0].mxu0
        %v1785 = vadd.f32 %v1537, %v1784
        %v1786 = vpop.f32.mrb[0].mxu0
        %1787 = vmatprep.mubr.bf16.mxu0 0
        %1788 = vmatmul.mubr.bf16.gmra.mrb[0].mxu0 %v1522
        %v1789 = vpop.f32.mrb[0].mxu0
        %v1790 = vadd.f32 %v1537, %v1789
        %v1791 = vpop.f32.mrb[0].mxu0
        %v1792 = vpop.f32.mrb[0].mxu0
        %v1793 = vadd.f32 %v1537, %v1792
        %v1794 = vpop.f32.mrb[0].mxu0
        %1795 = vmatprep.mubr.bf16.mxu0 0
        %1796 = vmatmul.mubr.bf16.gmra.mrb[0].mxu0 %v1523
        %v1797 = vpop.f32.mrb[0].mxu0
        %v1798 = vadd.f32 %v1537, %v1797
        %v1799 = vpop.f32.mrb[0].mxu0
        %v1800 = vpop.f32.mrb[0].mxu0
        %v1801 = vadd.f32 %v1537, %v1800
        %v1802 = vpop.f32.mrb[0].mxu0
        %1803 = vmatprep.mubr.bf16.mxu0 0
        %1804 = vmatmul.mubr.bf16.gmra.mrb[0].mxu0 %v1524
        %v1805 = vpop.f32.mrb[0].mxu0
        %v1806 = vadd.f32 %v1537, %v1805
        %v1807 = vpop.f32.mrb[0].mxu0
        %v1808 = vpop.f32.mrb[0].mxu0
        %v1809 = vadd.f32 %v1537, %v1808
        %v1810 = vpop.f32.mrb[0].mxu0
        %1811 = vmatprep.mubr.bf16.mxu0 0
        %1812 = vmatmul.mubr.bf16.gmra.mrb[0].mxu0 %v1525
        %v1813 = vpop.f32.mrb[0].mxu0
        %v1814 = vadd.f32 %v1537, %v1813
        %v1815 = vpop.f32.mrb[0].mxu0
        %v1816 = vpop.f32.mrb[0].mxu0
        %v1817 = vadd.f32 %v1537, %v1816
        %v1818 = vpop.f32.mrb[0].mxu0
        %1819 = vmatprep.mubr.bf16.mxu0 0
        %1820 = vmatmul.mubr.bf16.gmra.mrb[0].mxu0 %v1526
        %v1821 = vpop.f32.mrb[0].mxu0
        %v1822 = vadd.f32 %v1537, %v1821
        %v1823 = vpop.f32.mrb[0].mxu0
        %v1824 = vpop.f32.mrb[0].mxu0
        %v1825 = vadd.f32 %v1537, %v1824
        %v1826 = vpop.f32.mrb[0].mxu0
        %1827 = vmatprep.mubr.bf16.mxu0 0
        %1828 = vmatmul.mubr.bf16.gmra.mrb[0].mxu0 %v1527
        %v1829 = vpop.f32.mrb[0].mxu0
        %v1830 = vadd.f32 %v1537, %v1829
        %v1831 = vpop.f32.mrb[0].mxu0
        %v1832 = vpop.f32.mrb[0].mxu0
        %v1833 = vadd.f32 %v1537, %v1832
        %v1834 = vpop.f32.mrb[0].mxu0
        %1835 = vmatprep.mubr.bf16.mxu0 0
        %1836 = vmatmul.mubr.bf16.gmra.mrb[0].mxu0 %v1528
        %v1837 = vpop.f32.mrb[0].mxu0
        %v1838 = vadd.f32 %v1537, %v1837
        %v1839 = vpop.f32.mrb[0].mxu0
        %v1840 = vpop.f32.mrb[0].mxu0
        %v1841 = vadd.f32 %v1537, %v1840
        %v1842 = vpop.f32.mrb[0].mxu0
        %1843 = vmatprep.mubr.bf16.mxu0 0
        %1844 = vmatmul.mubr.bf16.gmra.mrb[0].mxu0 %v1529
        %v1845 = vpop.f32.mrb[0].mxu0
        %v1846 = vadd.f32 %v1537, %v1845
        %v1847 = vpop.f32.mrb[0].mxu0
        %v1848 = vpop.f32.mrb[0].mxu0
        %v1849 = vadd.f32 %v1537, %v1848
        %v1850 = vpop.f32.mrb[0].mxu0
        %1851 = vmatprep.mubr.bf16.mxu0 0
        %1852 = vmatmul.mubr.bf16.gmra.mrb[0].mxu0 %v1530
        %v1853 = vpop.f32.mrb[0].mxu0
        %v1854 = vadd.f32 %v1537, %v1853
        %v1855 = vpop.f32.mrb[0].mxu0
        %v1856 = vpop.f32.mrb[0].mxu0
        %v1857 = vadd.f32 %v1537, %v1856
        %v1858 = vpop.f32.mrb[0].mxu0
        %1859 = vmatprep.mubr.bf16.mxu0 0
        %1860 = vmatmul.mubr.bf16.gmra.mrb[0].mxu0 %v1531
        %v1861 = vpop.f32.mrb[0].mxu0
        %v1862 = vadd.f32 %v1537, %v1861
        %v1863 = vpop.f32.mrb[0].mxu0
        %v1864 = vpop.f32.mrb[0].mxu0
        %v1865 = vadd.f32 %v1537, %v1864
        %v1866 = vpop.f32.mrb[0].mxu0
        %1867 = vmatprep.mubr.bf16.mxu0 0
        %1868 = vmatmul.mubr.bf16.gmra.mrb[0].mxu0 %v1532
        %v1869 = vpop.f32.mrb[0].mxu0
        %v1870 = vadd.f32 %v1537, %v1869
        %v1871 = vpop.f32.mrb[0].mxu0
        %v1872 = vpop.f32.mrb[0].mxu0
        %v1873 = vadd.f32 %v1537, %v1872
        %v1874 = vpop.f32.mrb[0].mxu0
        %1875 = vdwg.mxu0
        %v1876 = vmax.f32 %v1622, 0.0
        %v1877 = vmax.f32 %v1625, 0.0
        %v1878 = vmax.f32 %v1630, 0.0
        %v1879 = vmax.f32 %v1633, 0.0
        %v1880 = vmax.f32 %v1638, 0.0
        %v1881 = vmax.f32 %v1641, 0.0
        %v1882 = vmax.f32 %v1646, 0.0
        %v1883 = vmax.f32 %v1649, 0.0
        %v1884 = vmax.f32 %v1654, 0.0
        %v1885 = vmax.f32 %v1657, 0.0
        %v1886 = vmax.f32 %v1662, 0.0
        %v1887 = vmax.f32 %v1665, 0.0
        %v1888 = vmax.f32 %v1670, 0.0
        %v1889 = vmax.f32 %v1673, 0.0
        %v1890 = vmax.f32 %v1678, 0.0
        %v1891 = vmax.f32 %v1681, 0.0
        %v1892 = vmax.f32 %v1686, 0.0
        %v1893 = vmax.f32 %v1689, 0.0
        %v1894 = vmax.f32 %v1694, 0.0
        %v1895 = vmax.f32 %v1697, 0.0
        %v1896 = vmax.f32 %v1702, 0.0
        %v1897 = vmax.f32 %v1705, 0.0
        %v1898 = vmax.f32 %v1710, 0.0
        %v1899 = vmax.f32 %v1713, 0.0
        %v1900 = vmax.f32 %v1718, 0.0
        %v1901 = vmax.f32 %v1721, 0.0
        %v1902 = vmax.f32 %v1726, 0.0
        %v1903 = vmax.f32 %v1729, 0.0
        %v1904 = vmax.f32 %v1734, 0.0
        %v1905 = vmax.f32 %v1737, 0.0
        %v1906 = vmax.f32 %v1742, 0.0
        %v1907 = vmax.f32 %v1745, 0.0
        %v1908 = vmax.f32 %v1750, 0.0
        %v1909 = vmax.f32 %v1753, 0.0
        %v1910 = vmax.f32 %v1758, 0.0
        %v1911 = vmax.f32 %v1761, 0.0
        %v1912 = vmax.f32 %v1766, 0.0
        %v1913 = vmax.f32 %v1769, 0.0
        %v1914 = vmax.f32 %v1774, 0.0
        %v1915 = vmax.f32 %v1777, 0.0
        %v1916 = vmax.f32 %v1782, 0.0
        %v1917 = vmax.f32 %v1785, 0.0
        %v1918 = vmax.f32 %v1790, 0.0
        %v1919 = vmax.f32 %v1793, 0.0
        %v1920 = vmax.f32 %v1798, 0.0
        %v1921 = vmax.f32 %v1801, 0.0
        %v1922 = vmax.f32 %v1806, 0.0
        %v1923 = vmax.f32 %v1809, 0.0
        %v1924 = vmax.f32 %v1814, 0.0
        %v1925 = vmax.f32 %v1817, 0.0
        %v1926 = vmax.f32 %v1822, 0.0
        %v1927 = vmax.f32 %v1825, 0.0
        %v1928 = vmax.f32 %v1830, 0.0
        %v1929 = vmax.f32 %v1833, 0.0
        %v1930 = vmax.f32 %v1838, 0.0
        %v1931 = vmax.f32 %v1841, 0.0
        %v1932 = vmax.f32 %v1846, 0.0
        %v1933 = vmax.f32 %v1849, 0.0
        %v1934 = vmax.f32 %v1854, 0.0
        %v1935 = vmax.f32 %v1857, 0.0
        %v1936 = vmax.f32 %v1862, 0.0
        %v1937 = vmax.f32 %v1865, 0.0
        %v1938 = vmax.f32 %v1870, 0.0
        %v1939 = vmax.f32 %v1873, 0.0
        %v1940 = vpack.c.bf16 %v1877, %v1876
        %v1941 = vpack.c.bf16 %v1879, %v1878
        %v1942 = vpack.c.bf16 %v1881, %v1880
        %v1943 = vpack.c.bf16 %v1883, %v1882
        %v1944 = vpack.c.bf16 %v1885, %v1884
        %v1945 = vpack.c.bf16 %v1887, %v1886
        %v1946 = vpack.c.bf16 %v1889, %v1888
        %v1947 = vpack.c.bf16 %v1891, %v1890
        %v1948 = vpack.c.bf16 %v1893, %v1892
        %v1949 = vpack.c.bf16 %v1895, %v1894
        %v1950 = vpack.c.bf16 %v1897, %v1896
        %v1951 = vpack.c.bf16 %v1899, %v1898
        %v1952 = vpack.c.bf16 %v1901, %v1900
        %v1953 = vpack.c.bf16 %v1903, %v1902
        %v1954 = vpack.c.bf16 %v1905, %v1904
        %v1955 = vpack.c.bf16 %v1907, %v1906
        %v1956 = vpack.c.bf16 %v1909, %v1908
        %v1957 = vpack.c.bf16 %v1911, %v1910
        %v1958 = vpack.c.bf16 %v1913, %v1912
        %v1959 = vpack.c.bf16 %v1915, %v1914
        %v1960 = vpack.c.bf16 %v1917, %v1916
        %v1961 = vpack.c.bf16 %v1919, %v1918
        %v1962 = vpack.c.bf16 %v1921, %v1920
        %v1963 = vpack.c.bf16 %v1923, %v1922
        %v1964 = vpack.c.bf16 %v1925, %v1924
        %v1965 = vpack.c.bf16 %v1927, %v1926
        %v1966 = vpack.c.bf16 %v1929, %v1928
        %v1967 = vpack.c.bf16 %v1931, %v1930
        %v1968 = vpack.c.bf16 %v1933, %v1932
        %v1969 = vpack.c.bf16 %v1935, %v1934
        %v1970 = vpack.c.bf16 %v1937, %v1936
        %v1971 = vpack.c.bf16 %v1939, %v1938
        %v1973 = vlaneseq
        %v1974 = vshrl.u32 %v1973, 7
        %v1975 = vsub.s32 0, %v1974
        %v1976 = vrot.slane %v470, %v1975
        %v1994 = vunpack.c.l.b16 %v453
        %v1995 = vunpack.c.l.b16 %v454
        %v1996 = vunpack.c.l.b16 %v455
        %v1997 = vunpack.c.l.b16 %v456
        %v1998 = vunpack.c.l.b16 %v457
        %v1999 = vunpack.c.l.b16 %v458
        %v2000 = vunpack.c.l.b16 %v459
        %v2001 = vunpack.c.l.b16 %v460
        %v2002 = vunpack.c.l.b16 %v461
        %v2003 = vunpack.c.l.b16 %v462
        %v2004 = vunpack.c.l.b16 %v463
        %v2005 = vunpack.c.l.b16 %v464
        %v2006 = vunpack.c.l.b16 %v465
        %v2007 = vunpack.c.l.b16 %v466
        %v2008 = vunpack.c.l.b16 %v467
        %v2009 = vunpack.c.l.b16 %v468
        %v2010 = vpack.c.b16 %v1995, %v1994
        %v2011 = vpack.c.b16 %v1997, %v1996
        %v2012 = vpack.c.b16 %v1999, %v1998
        %v2013 = vpack.c.b16 %v2001, %v2000
        %v2014 = vpack.c.b16 %v2003, %v2002
        %v2015 = vpack.c.b16 %v2005, %v2004
        %v2016 = vpack.c.b16 %v2007, %v2006
        %v2017 = vpack.c.b16 %v2009, %v2008
        %2026 = vmatprep.subr.bf16.mxu0 0
        %2027 = vmatpush1.bf16.msra.mxu0 %v2010
        %2028 = vmatprep.subr.bf16.mxu0 0
        %2029 = vmatpush1.bf16.msra.mxu0 %v2011
        %2030 = vmatprep.subr.bf16.mxu0 0
        %2031 = vmatpush1.bf16.msra.mxu0 %v2012
        %2032 = vmatprep.subr.bf16.mxu0 0
        %2033 = vmatpush1.bf16.msra.mxu0 %v2013
        %2034 = vmatprep.subr.bf16.mxu0 0
        %2035 = vmatpush1.bf16.msra.mxu0 %v2014
        %2036 = vmatprep.subr.bf16.mxu0 0
        %2037 = vmatpush1.bf16.msra.mxu0 %v2015
        %2038 = vmatprep.subr.bf16.mxu0 0
        %2039 = vmatpush1.bf16.msra.mxu0 %v2016
        %2040 = vmatprep.subr.bf16.mxu0 0
        %2041 = vmatpush1.bf16.msra.mxu0 %v2017
        %2042 = vmatprep.subr.bf16.mxu0 0
        %2043 = vmatpush1.bf16.msra.mxu0 0
        %2044 = vmatprep.subr.bf16.mxu0 0
        %2045 = vmatpush1.bf16.msra.mxu0 0
        %2046 = vmatprep.subr.bf16.mxu0 0
        %2047 = vmatpush1.bf16.msra.mxu0 0
        %2048 = vmatprep.subr.bf16.mxu0 0
        %2049 = vmatpush1.bf16.msra.mxu0 0
        %2050 = vmatprep.subr.bf16.mxu0 0
        %2051 = vmatpush1.bf16.msra.mxu0 0
        %2052 = vmatprep.subr.bf16.mxu0 0
        %2053 = vmatpush1.bf16.msra.mxu0 0
        %2054 = vmatprep.subr.bf16.mxu0 0
        %2055 = vmatpush1.bf16.msra.mxu0 0
        %2056 = vmatprep.subr.bf16.mxu0 0
        %2057 = vmatpush1.bf16.msra.mxu0 0
        %2058 = vmatprep.mubr.bf16.mxu0 0
        %2059 = vmatmul.mubr.bf16.gmra.mrb[0].mxu0 %v1940
        %v2060 = vpop.f32.mrb[0].mxu0
        %v2061 = vadd.f32 %v1976, %v2060
        %v2062 = vpop.f32.mrb[0].mxu0
        %v2063 = vpop.f32.mrb[0].mxu0
        %v2064 = vadd.f32 %v1976, %v2063
        %v2065 = vpop.f32.mrb[0].mxu0
        %2066 = vmatprep.mubr.bf16.mxu0 0
        %2067 = vmatmul.mubr.bf16.gmra.mrb[0].mxu0 %v1941
        %v2068 = vpop.f32.mrb[0].mxu0
        %v2069 = vadd.f32 %v1976, %v2068
        %v2070 = vpop.f32.mrb[0].mxu0
        %v2071 = vpop.f32.mrb[0].mxu0
        %v2072 = vadd.f32 %v1976, %v2071
        %v2073 = vpop.f32.mrb[0].mxu0
        %2074 = vmatprep.mubr.bf16.mxu0 0
        %2075 = vmatmul.mubr.bf16.gmra.mrb[0].mxu0 %v1942
        %v2076 = vpop.f32.mrb[0].mxu0
        %v2077 = vadd.f32 %v1976, %v2076
        %v2078 = vpop.f32.mrb[0].mxu0
        %v2079 = vpop.f32.mrb[0].mxu0
        %v2080 = vadd.f32 %v1976, %v2079
        %v2081 = vpop.f32.mrb[0].mxu0
        %2082 = vmatprep.mubr.bf16.mxu0 0
        %2083 = vmatmul.mubr.bf16.gmra.mrb[0].mxu0 %v1943
        %v2084 = vpop.f32.mrb[0].mxu0
        %v2085 = vadd.f32 %v1976, %v2084
        %v2086 = vpop.f32.mrb[0].mxu0
        %v2087 = vpop.f32.mrb[0].mxu0
        %v2088 = vadd.f32 %v1976, %v2087
        %v2089 = vpop.f32.mrb[0].mxu0
        %2090 = vmatprep.mubr.bf16.mxu0 0
        %2091 = vmatmul.mubr.bf16.gmra.mrb[0].mxu0 %v1944
        %v2092 = vpop.f32.mrb[0].mxu0
        %v2093 = vadd.f32 %v1976, %v2092
        %v2094 = vpop.f32.mrb[0].mxu0
        %v2095 = vpop.f32.mrb[0].mxu0
        %v2096 = vadd.f32 %v1976, %v2095
        %v2097 = vpop.f32.mrb[0].mxu0
        %2098 = vmatprep.mubr.bf16.mxu0 0
        %2099 = vmatmul.mubr.bf16.gmra.mrb[0].mxu0 %v1945
        %v2100 = vpop.f32.mrb[0].mxu0
        %v2101 = vadd.f32 %v1976, %v2100
        %v2102 = vpop.f32.mrb[0].mxu0
        %v2103 = vpop.f32.mrb[0].mxu0
        %v2104 = vadd.f32 %v1976, %v2103
        %v2105 = vpop.f32.mrb[0].mxu0
        %2106 = vmatprep.mubr.bf16.mxu0 0
        %2107 = vmatmul.mubr.bf16.gmra.mrb[0].mxu0 %v1946
        %v2108 = vpop.f32.mrb[0].mxu0
        %v2109 = vadd.f32 %v1976, %v2108
        %v2110 = vpop.f32.mrb[0].mxu0
        %v2111 = vpop.f32.mrb[0].mxu0
        %v2112 = vadd.f32 %v1976, %v2111
        %v2113 = vpop.f32.mrb[0].mxu0
        %2114 = vmatprep.mubr.bf16.mxu0 0
        %2115 = vmatmul.mubr.bf16.gmra.mrb[0].mxu0 %v1947
        %v2116 = vpop.f32.mrb[0].mxu0
        %v2117 = vadd.f32 %v1976, %v2116
        %v2118 = vpop.f32.mrb[0].mxu0
        %v2119 = vpop.f32.mrb[0].mxu0
        %v2120 = vadd.f32 %v1976, %v2119
        %v2121 = vpop.f32.mrb[0].mxu0
        %2122 = vmatprep.mubr.bf16.mxu0 0
        %2123 = vmatmul.mubr.bf16.gmra.mrb[0].mxu0 %v1948
        %v2124 = vpop.f32.mrb[0].mxu0
        %v2125 = vadd.f32 %v1976, %v2124
        %v2126 = vpop.f32.mrb[0].mxu0
        %v2127 = vpop.f32.mrb[0].mxu0
        %v2128 = vadd.f32 %v1976, %v2127
        %v2129 = vpop.f32.mrb[0].mxu0
        %2130 = vmatprep.mubr.bf16.mxu0 0
        %2131 = vmatmul.mubr.bf16.gmra.mrb[0].mxu0 %v1949
        %v2132 = vpop.f32.mrb[0].mxu0
        %v2133 = vadd.f32 %v1976, %v2132
        %v2134 = vpop.f32.mrb[0].mxu0
        %v2135 = vpop.f32.mrb[0].mxu0
        %v2136 = vadd.f32 %v1976, %v2135
        %v2137 = vpop.f32.mrb[0].mxu0
        %2138 = vmatprep.mubr.bf16.mxu0 0
        %2139 = vmatmul.mubr.bf16.gmra.mrb[0].mxu0 %v1950
        %v2140 = vpop.f32.mrb[0].mxu0
        %v2141 = vadd.f32 %v1976, %v2140
        %v2142 = vpop.f32.mrb[0].mxu0
        %v2143 = vpop.f32.mrb[0].mxu0
        %v2144 = vadd.f32 %v1976, %v2143
        %v2145 = vpop.f32.mrb[0].mxu0
        %2146 = vmatprep.mubr.bf16.mxu0 0
        %2147 = vmatmul.mubr.bf16.gmra.mrb[0].mxu0 %v1951
        %v2148 = vpop.f32.mrb[0].mxu0
        %v2149 = vadd.f32 %v1976, %v2148
        %v2150 = vpop.f32.mrb[0].mxu0
        %v2151 = vpop.f32.mrb[0].mxu0
        %v2152 = vadd.f32 %v1976, %v2151
        %v2153 = vpop.f32.mrb[0].mxu0
        %2154 = vmatprep.mubr.bf16.mxu0 0
        %2155 = vmatmul.mubr.bf16.gmra.mrb[0].mxu0 %v1952
        %v2156 = vpop.f32.mrb[0].mxu0
        %v2157 = vadd.f32 %v1976, %v2156
        %v2158 = vpop.f32.mrb[0].mxu0
        %v2159 = vpop.f32.mrb[0].mxu0
        %v2160 = vadd.f32 %v1976, %v2159
        %v2161 = vpop.f32.mrb[0].mxu0
        %2162 = vmatprep.mubr.bf16.mxu0 0
        %2163 = vmatmul.mubr.bf16.gmra.mrb[0].mxu0 %v1953
        %v2164 = vpop.f32.mrb[0].mxu0
        %v2165 = vadd.f32 %v1976, %v2164
        %v2166 = vpop.f32.mrb[0].mxu0
        %v2167 = vpop.f32.mrb[0].mxu0
        %v2168 = vadd.f32 %v1976, %v2167
        %v2169 = vpop.f32.mrb[0].mxu0
        %2170 = vmatprep.mubr.bf16.mxu0 0
        %2171 = vmatmul.mubr.bf16.gmra.mrb[0].mxu0 %v1954
        %v2172 = vpop.f32.mrb[0].mxu0
        %v2173 = vadd.f32 %v1976, %v2172
        %v2174 = vpop.f32.mrb[0].mxu0
        %v2175 = vpop.f32.mrb[0].mxu0
        %v2176 = vadd.f32 %v1976, %v2175
        %v2177 = vpop.f32.mrb[0].mxu0
        %2178 = vmatprep.mubr.bf16.mxu0 0
        %2179 = vmatmul.mubr.bf16.gmra.mrb[0].mxu0 %v1955
        %v2180 = vpop.f32.mrb[0].mxu0
        %v2181 = vadd.f32 %v1976, %v2180
        %v2182 = vpop.f32.mrb[0].mxu0
        %v2183 = vpop.f32.mrb[0].mxu0
        %v2184 = vadd.f32 %v1976, %v2183
        %v2185 = vpop.f32.mrb[0].mxu0
        %2186 = vmatprep.mubr.bf16.mxu0 0
        %2187 = vmatmul.mubr.bf16.gmra.mrb[0].mxu0 %v1956
        %v2188 = vpop.f32.mrb[0].mxu0
        %v2189 = vadd.f32 %v1976, %v2188
        %v2190 = vpop.f32.mrb[0].mxu0
        %v2191 = vpop.f32.mrb[0].mxu0
        %v2192 = vadd.f32 %v1976, %v2191
        %v2193 = vpop.f32.mrb[0].mxu0
        %2194 = vmatprep.mubr.bf16.mxu0 0
        %2195 = vmatmul.mubr.bf16.gmra.mrb[0].mxu0 %v1957
        %v2196 = vpop.f32.mrb[0].mxu0
        %v2197 = vadd.f32 %v1976, %v2196
        %v2198 = vpop.f32.mrb[0].mxu0
        %v2199 = vpop.f32.mrb[0].mxu0
        %v2200 = vadd.f32 %v1976, %v2199
        %v2201 = vpop.f32.mrb[0].mxu0
        %2202 = vmatprep.mubr.bf16.mxu0 0
        %2203 = vmatmul.mubr.bf16.gmra.mrb[0].mxu0 %v1958
        %v2204 = vpop.f32.mrb[0].mxu0
        %v2205 = vadd.f32 %v1976, %v2204
        %v2206 = vpop.f32.mrb[0].mxu0
        %v2207 = vpop.f32.mrb[0].mxu0
        %v2208 = vadd.f32 %v1976, %v2207
        %v2209 = vpop.f32.mrb[0].mxu0
        %2210 = vmatprep.mubr.bf16.mxu0 0
        %2211 = vmatmul.mubr.bf16.gmra.mrb[0].mxu0 %v1959
        %v2212 = vpop.f32.mrb[0].mxu0
        %v2213 = vadd.f32 %v1976, %v2212
        %v2214 = vpop.f32.mrb[0].mxu0
        %v2215 = vpop.f32.mrb[0].mxu0
        %v2216 = vadd.f32 %v1976, %v2215
        %v2217 = vpop.f32.mrb[0].mxu0
        %2218 = vmatprep.mubr.bf16.mxu0 0
        %2219 = vmatmul.mubr.bf16.gmra.mrb[0].mxu0 %v1960
        %v2220 = vpop.f32.mrb[0].mxu0
        %v2221 = vadd.f32 %v1976, %v2220
        %v2222 = vpop.f32.mrb[0].mxu0
        %v2223 = vpop.f32.mrb[0].mxu0
        %v2224 = vadd.f32 %v1976, %v2223
        %v2225 = vpop.f32.mrb[0].mxu0
        %2226 = vmatprep.mubr.bf16.mxu0 0
        %2227 = vmatmul.mubr.bf16.gmra.mrb[0].mxu0 %v1961
        %v2228 = vpop.f32.mrb[0].mxu0
        %v2229 = vadd.f32 %v1976, %v2228
        %v2230 = vpop.f32.mrb[0].mxu0
        %v2231 = vpop.f32.mrb[0].mxu0
        %v2232 = vadd.f32 %v1976, %v2231
        %v2233 = vpop.f32.mrb[0].mxu0
        %2234 = vmatprep.mubr.bf16.mxu0 0
        %2235 = vmatmul.mubr.bf16.gmra.mrb[0].mxu0 %v1962
        %v2236 = vpop.f32.mrb[0].mxu0
        %v2237 = vadd.f32 %v1976, %v2236
        %v2238 = vpop.f32.mrb[0].mxu0
        %v2239 = vpop.f32.mrb[0].mxu0
        %v2240 = vadd.f32 %v1976, %v2239
        %v2241 = vpop.f32.mrb[0].mxu0
        %2242 = vmatprep.mubr.bf16.mxu0 0
        %2243 = vmatmul.mubr.bf16.gmra.mrb[0].mxu0 %v1963
        %v2244 = vpop.f32.mrb[0].mxu0
        %v2245 = vadd.f32 %v1976, %v2244
        %v2246 = vpop.f32.mrb[0].mxu0
        %v2247 = vpop.f32.mrb[0].mxu0
        %v2248 = vadd.f32 %v1976, %v2247
        %v2249 = vpop.f32.mrb[0].mxu0
        %2250 = vmatprep.mubr.bf16.mxu0 0
        %2251 = vmatmul.mubr.bf16.gmra.mrb[0].mxu0 %v1964
        %v2252 = vpop.f32.mrb[0].mxu0
        %v2253 = vadd.f32 %v1976, %v2252
        %v2254 = vpop.f32.mrb[0].mxu0
        %v2255 = vpop.f32.mrb[0].mxu0
        %v2256 = vadd.f32 %v1976, %v2255
        %v2257 = vpop.f32.mrb[0].mxu0
        %2258 = vmatprep.mubr.bf16.mxu0 0
        %2259 = vmatmul.mubr.bf16.gmra.mrb[0].mxu0 %v1965
        %v2260 = vpop.f32.mrb[0].mxu0
        %v2261 = vadd.f32 %v1976, %v2260
        %v2262 = vpop.f32.mrb[0].mxu0
        %v2263 = vpop.f32.mrb[0].mxu0
        %v2264 = vadd.f32 %v1976, %v2263
        %v2265 = vpop.f32.mrb[0].mxu0
        %2266 = vmatprep.mubr.bf16.mxu0 0
        %2267 = vmatmul.mubr.bf16.gmra.mrb[0].mxu0 %v1966
        %v2268 = vpop.f32.mrb[0].mxu0
        %v2269 = vadd.f32 %v1976, %v2268
        %v2270 = vpop.f32.mrb[0].mxu0
        %v2271 = vpop.f32.mrb[0].mxu0
        %v2272 = vadd.f32 %v1976, %v2271
        %v2273 = vpop.f32.mrb[0].mxu0
        %2274 = vmatprep.mubr.bf16.mxu0 0
        %2275 = vmatmul.mubr.bf16.gmra.mrb[0].mxu0 %v1967
        %v2276 = vpop.f32.mrb[0].mxu0
        %v2277 = vadd.f32 %v1976, %v2276
        %v2278 = vpop.f32.mrb[0].mxu0
        %v2279 = vpop.f32.mrb[0].mxu0
        %v2280 = vadd.f32 %v1976, %v2279
        %v2281 = vpop.f32.mrb[0].mxu0
        %2282 = vmatprep.mubr.bf16.mxu0 0
        %2283 = vmatmul.mubr.bf16.gmra.mrb[0].mxu0 %v1968
        %v2284 = vpop.f32.mrb[0].mxu0
        %v2285 = vadd.f32 %v1976, %v2284
        %v2286 = vpop.f32.mrb[0].mxu0
        %v2287 = vpop.f32.mrb[0].mxu0
        %v2288 = vadd.f32 %v1976, %v2287
        %v2289 = vpop.f32.mrb[0].mxu0
        %2290 = vmatprep.mubr.bf16.mxu0 0
        %2291 = vmatmul.mubr.bf16.gmra.mrb[0].mxu0 %v1969
        %v2292 = vpop.f32.mrb[0].mxu0
        %v2293 = vadd.f32 %v1976, %v2292
        %v2294 = vpop.f32.mrb[0].mxu0
        %v2295 = vpop.f32.mrb[0].mxu0
        %v2296 = vadd.f32 %v1976, %v2295
        %v2297 = vpop.f32.mrb[0].mxu0
        %2298 = vmatprep.mubr.bf16.mxu0 0
        %2299 = vmatmul.mubr.bf16.gmra.mrb[0].mxu0 %v1970
        %v2300 = vpop.f32.mrb[0].mxu0
        %v2301 = vadd.f32 %v1976, %v2300
        %v2302 = vpop.f32.mrb[0].mxu0
        %v2303 = vpop.f32.mrb[0].mxu0
        %v2304 = vadd.f32 %v1976, %v2303
        %v2305 = vpop.f32.mrb[0].mxu0
        %2306 = vmatprep.mubr.bf16.mxu0 0
        %2307 = vmatmul.mubr.bf16.gmra.mrb[0].mxu0 %v1971
        %v2308 = vpop.f32.mrb[0].mxu0
        %v2309 = vadd.f32 %v1976, %v2308
        %v2310 = vpop.f32.mrb[0].mxu0
        %v2311 = vpop.f32.mrb[0].mxu0
        %v2312 = vadd.f32 %v1976, %v2311
        %v2313 = vpop.f32.mrb[0].mxu0
        %2314 = vdwg.mxu0
        %v2315 = vpack.c.bf16 %v2064, %v2061
        %v2316 = vpack.c.bf16 %v2072, %v2069
        %v2317 = vpack.c.bf16 %v2080, %v2077
        %v2318 = vpack.c.bf16 %v2088, %v2085
        %v2319 = vpack.c.bf16 %v2096, %v2093
        %v2320 = vpack.c.bf16 %v2104, %v2101
        %v2321 = vpack.c.bf16 %v2112, %v2109
        %v2322 = vpack.c.bf16 %v2120, %v2117
        %v2323 = vpack.c.bf16 %v2128, %v2125
        %v2324 = vpack.c.bf16 %v2136, %v2133
        %v2325 = vpack.c.bf16 %v2144, %v2141
        %v2326 = vpack.c.bf16 %v2152, %v2149
        %v2327 = vpack.c.bf16 %v2160, %v2157
        %v2328 = vpack.c.bf16 %v2168, %v2165
        %v2329 = vpack.c.bf16 %v2176, %v2173
        %v2330 = vpack.c.bf16 %v2184, %v2181
        %v2331 = vpack.c.bf16 %v2192, %v2189
        %v2332 = vpack.c.bf16 %v2200, %v2197
        %v2333 = vpack.c.bf16 %v2208, %v2205
        %v2334 = vpack.c.bf16 %v2216, %v2213
        %v2335 = vpack.c.bf16 %v2224, %v2221
        %v2336 = vpack.c.bf16 %v2232, %v2229
        %v2337 = vpack.c.bf16 %v2240, %v2237
        %v2338 = vpack.c.bf16 %v2248, %v2245
        %v2339 = vpack.c.bf16 %v2256, %v2253
        %v2340 = vpack.c.bf16 %v2264, %v2261
        %v2341 = vpack.c.bf16 %v2272, %v2269
        %v2342 = vpack.c.bf16 %v2280, %v2277
        %v2343 = vpack.c.bf16 %v2288, %v2285
        %v2344 = vpack.c.bf16 %v2296, %v2293
        %v2345 = vpack.c.bf16 %v2304, %v2301
        %v2346 = vpack.c.bf16 %v2312, %v2309
        %2347 = vmatprep.subr.bf16.mxu0 0
        %2348 = vmatpush1.bf16.msra.mxu0 %v2315
        %2349 = vmatprep.subr.bf16.mxu0 0
        %2350 = vmatpush1.bf16.msra.mxu0 %v2316
        %2351 = vmatprep.subr.bf16.mxu0 0
        %2352 = vmatpush1.bf16.msra.mxu0 %v2317
        %2353 = vmatprep.subr.bf16.mxu0 0
        %2354 = vmatpush1.bf16.msra.mxu0 %v2318
        %2355 = vmatprep.subr.bf16.mxu0 0
        %2356 = vmatpush1.bf16.msra.mxu0 %v2319
        %2357 = vmatprep.subr.bf16.mxu0 0
        %2358 = vmatpush1.bf16.msra.mxu0 %v2320
        %2359 = vmatprep.subr.bf16.mxu0 0
        %2360 = vmatpush1.bf16.msra.mxu0 %v2321
        %2361 = vmatprep.subr.bf16.mxu0 0
        %2362 = vmatpush1.bf16.msra.mxu0 %v2322
        %2363 = vmatprep.subr.bf16.mxu0 0
        %2364 = vmatpush1.bf16.msra.mxu0 0
        %2365 = vmatprep.subr.bf16.mxu0 0
        %2366 = vmatpush1.bf16.msra.mxu0 0
        %2367 = vmatprep.subr.bf16.mxu0 0
        %2368 = vmatpush1.bf16.msra.mxu0 0
        %2369 = vmatprep.subr.bf16.mxu0 0
        %2370 = vmatpush1.bf16.msra.mxu0 0
        %2371 = vmatprep.subr.bf16.mxu0 0
        %2372 = vmatpush1.bf16.msra.mxu0 0
        %2373 = vmatprep.subr.bf16.mxu0 0
        %2374 = vmatpush1.bf16.msra.mxu0 0
        %2375 = vmatprep.subr.bf16.mxu0 0
        %2376 = vmatpush1.bf16.msra.mxu0 0
        %2377 = vmatprep.subr.bf16.mxu0 0
        %2378 = vmatpush1.bf16.msra.mxu0 0
        %2379 = vmatprep.mubr.bf16.mxu0 0
        %2380 = vmatmul.mubr.bf16.gmra.mrb[0].mxu0 %v632
        %v2381 = vpop.f32.mrb[0].mxu0
        %v2382 = vadd.f32 0.0, %v2381
        %v2383 = vpop.f32.mrb[0].mxu0
        %v2384 = vpop.f32.mrb[0].mxu0
        %v2385 = vadd.f32 0.0, %v2384
        %v2386 = vpop.f32.mrb[0].mxu0
        %2387 = vmatprep.mubr.bf16.mxu0 0
        %2388 = vmatmul.mubr.bf16.gmra.mrb[0].mxu0 %v633
        %v2389 = vpop.f32.mrb[0].mxu0
        %v2390 = vadd.f32 0.0, %v2389
        %v2391 = vpop.f32.mrb[0].mxu0
        %v2392 = vpop.f32.mrb[0].mxu0
        %v2393 = vadd.f32 0.0, %v2392
        %v2394 = vpop.f32.mrb[0].mxu0
        %2395 = vmatprep.mubr.bf16.mxu0 0
        %2396 = vmatmul.mubr.bf16.gmra.mrb[0].mxu0 %v634
        %v2397 = vpop.f32.mrb[0].mxu0
        %v2398 = vadd.f32 0.0, %v2397
        %v2399 = vpop.f32.mrb[0].mxu0
        %v2400 = vpop.f32.mrb[0].mxu0
        %v2401 = vadd.f32 0.0, %v2400
        %v2402 = vpop.f32.mrb[0].mxu0
        %2403 = vmatprep.mubr.bf16.mxu0 0
        %2404 = vmatmul.mubr.bf16.gmra.mrb[0].mxu0 %v635
        %v2405 = vpop.f32.mrb[0].mxu0
        %v2406 = vadd.f32 0.0, %v2405
        %v2407 = vpop.f32.mrb[0].mxu0
        %v2408 = vpop.f32.mrb[0].mxu0
        %v2409 = vadd.f32 0.0, %v2408
        %v2410 = vpop.f32.mrb[0].mxu0
        %2411 = vmatprep.mubr.bf16.mxu0 0
        %2412 = vmatmul.mubr.bf16.gmra.mrb[0].mxu0 %v636
        %v2413 = vpop.f32.mrb[0].mxu0
        %v2414 = vadd.f32 0.0, %v2413
        %v2415 = vpop.f32.mrb[0].mxu0
        %v2416 = vpop.f32.mrb[0].mxu0
        %v2417 = vadd.f32 0.0, %v2416
        %v2418 = vpop.f32.mrb[0].mxu0
        %2419 = vmatprep.mubr.bf16.mxu0 0
        %2420 = vmatmul.mubr.bf16.gmra.mrb[0].mxu0 %v637
        %v2421 = vpop.f32.mrb[0].mxu0
        %v2422 = vadd.f32 0.0, %v2421
        %v2423 = vpop.f32.mrb[0].mxu0
        %v2424 = vpop.f32.mrb[0].mxu0
        %v2425 = vadd.f32 0.0, %v2424
        %v2426 = vpop.f32.mrb[0].mxu0
        %2427 = vmatprep.mubr.bf16.mxu0 0
        %2428 = vmatmul.mubr.bf16.gmra.mrb[0].mxu0 %v638
        %v2429 = vpop.f32.mrb[0].mxu0
        %v2430 = vadd.f32 0.0, %v2429
        %v2431 = vpop.f32.mrb[0].mxu0
        %v2432 = vpop.f32.mrb[0].mxu0
        %v2433 = vadd.f32 0.0, %v2432
        %v2434 = vpop.f32.mrb[0].mxu0
        %2435 = vmatprep.mubr.bf16.mxu0 0
        %2436 = vmatmul.mubr.bf16.gmra.mrb[0].mxu0 %v639
        %v2437 = vpop.f32.mrb[0].mxu0
        %v2438 = vadd.f32 0.0, %v2437
        %v2439 = vpop.f32.mrb[0].mxu0
        %v2440 = vpop.f32.mrb[0].mxu0
        %v2441 = vadd.f32 0.0, %v2440
        %v2442 = vpop.f32.mrb[0].mxu0
        %2443 = vdwg.mxu0
        %2444 = vmatprep.subr.bf16.mxu0 0
        %2445 = vmatpush1.bf16.msra.mxu0 %v2323
        %2446 = vmatprep.subr.bf16.mxu0 0
        %2447 = vmatpush1.bf16.msra.mxu0 %v2324
        %2448 = vmatprep.subr.bf16.mxu0 0
        %2449 = vmatpush1.bf16.msra.mxu0 %v2325
        %2450 = vmatprep.subr.bf16.mxu0 0
        %2451 = vmatpush1.bf16.msra.mxu0 %v2326
        %2452 = vmatprep.subr.bf16.mxu0 0
        %2453 = vmatpush1.bf16.msra.mxu0 %v2327
        %2454 = vmatprep.subr.bf16.mxu0 0
        %2455 = vmatpush1.bf16.msra.mxu0 %v2328
        %2456 = vmatprep.subr.bf16.mxu0 0
        %2457 = vmatpush1.bf16.msra.mxu0 %v2329
        %2458 = vmatprep.subr.bf16.mxu0 0
        %2459 = vmatpush1.bf16.msra.mxu0 %v2330
        %2460 = vmatprep.subr.bf16.mxu0 0
        %2461 = vmatpush1.bf16.msra.mxu0 0
        %2462 = vmatprep.subr.bf16.mxu0 0
        %2463 = vmatpush1.bf16.msra.mxu0 0
        %2464 = vmatprep.subr.bf16.mxu0 0
        %2465 = vmatpush1.bf16.msra.mxu0 0
        %2466 = vmatprep.subr.bf16.mxu0 0
        %2467 = vmatpush1.bf16.msra.mxu0 0
        %2468 = vmatprep.subr.bf16.mxu0 0
        %2469 = vmatpush1.bf16.msra.mxu0 0
        %2470 = vmatprep.subr.bf16.mxu0 0
        %2471 = vmatpush1.bf16.msra.mxu0 0
        %2472 = vmatprep.subr.bf16.mxu0 0
        %2473 = vmatpush1.bf16.msra.mxu0 0
        %2474 = vmatprep.subr.bf16.mxu0 0
        %2475 = vmatpush1.bf16.msra.mxu0 0
        %2476 = vmatprep.mubr.bf16.mxu0 0
        %2477 = vmatmul.mubr.bf16.gmra.mrb[0].mxu0 %v825
        %v2478 = vpop.f32.mrb[0].mxu0
        %v2479 = vadd.f32 0.0, %v2478
        %v2480 = vpop.f32.mrb[0].mxu0
        %v2481 = vpop.f32.mrb[0].mxu0
        %v2482 = vadd.f32 0.0, %v2481
        %v2483 = vpop.f32.mrb[0].mxu0
        %2484 = vmatprep.mubr.bf16.mxu0 0
        %2485 = vmatmul.mubr.bf16.gmra.mrb[0].mxu0 %v826
        %v2486 = vpop.f32.mrb[0].mxu0
        %v2487 = vadd.f32 0.0, %v2486
        %v2488 = vpop.f32.mrb[0].mxu0
        %v2489 = vpop.f32.mrb[0].mxu0
        %v2490 = vadd.f32 0.0, %v2489
        %v2491 = vpop.f32.mrb[0].mxu0
        %2492 = vmatprep.mubr.bf16.mxu0 0
        %2493 = vmatmul.mubr.bf16.gmra.mrb[0].mxu0 %v827
        %v2494 = vpop.f32.mrb[0].mxu0
        %v2495 = vadd.f32 0.0, %v2494
        %v2496 = vpop.f32.mrb[0].mxu0
        %v2497 = vpop.f32.mrb[0].mxu0
        %v2498 = vadd.f32 0.0, %v2497
        %v2499 = vpop.f32.mrb[0].mxu0
        %2500 = vmatprep.mubr.bf16.mxu0 0
        %2501 = vmatmul.mubr.bf16.gmra.mrb[0].mxu0 %v828
        %v2502 = vpop.f32.mrb[0].mxu0
        %v2503 = vadd.f32 0.0, %v2502
        %v2504 = vpop.f32.mrb[0].mxu0
        %v2505 = vpop.f32.mrb[0].mxu0
        %v2506 = vadd.f32 0.0, %v2505
        %v2507 = vpop.f32.mrb[0].mxu0
        %2508 = vmatprep.mubr.bf16.mxu0 0
        %2509 = vmatmul.mubr.bf16.gmra.mrb[0].mxu0 %v829
        %v2510 = vpop.f32.mrb[0].mxu0
        %v2511 = vadd.f32 0.0, %v2510
        %v2512 = vpop.f32.mrb[0].mxu0
        %v2513 = vpop.f32.mrb[0].mxu0
        %v2514 = vadd.f32 0.0, %v2513
        %v2515 = vpop.f32.mrb[0].mxu0
        %2516 = vmatprep.mubr.bf16.mxu0 0
        %2517 = vmatmul.mubr.bf16.gmra.mrb[0].mxu0 %v830
        %v2518 = vpop.f32.mrb[0].mxu0
        %v2519 = vadd.f32 0.0, %v2518
        %v2520 = vpop.f32.mrb[0].mxu0
        %v2521 = vpop.f32.mrb[0].mxu0
        %v2522 = vadd.f32 0.0, %v2521
        %v2523 = vpop.f32.mrb[0].mxu0
        %2524 = vmatprep.mubr.bf16.mxu0 0
        %2525 = vmatmul.mubr.bf16.gmra.mrb[0].mxu0 %v831
        %v2526 = vpop.f32.mrb[0].mxu0
        %v2527 = vadd.f32 0.0, %v2526
        %v2528 = vpop.f32.mrb[0].mxu0
        %v2529 = vpop.f32.mrb[0].mxu0
        %v2530 = vadd.f32 0.0, %v2529
        %v2531 = vpop.f32.mrb[0].mxu0
        %2532 = vmatprep.mubr.bf16.mxu0 0
        %2533 = vmatmul.mubr.bf16.gmra.mrb[0].mxu0 %v832
        %v2534 = vpop.f32.mrb[0].mxu0
        %v2535 = vadd.f32 0.0, %v2534
        %v2536 = vpop.f32.mrb[0].mxu0
        %v2537 = vpop.f32.mrb[0].mxu0
        %v2538 = vadd.f32 0.0, %v2537
        %v2539 = vpop.f32.mrb[0].mxu0
        %2540 = vdwg.mxu0
        %2541 = vmatprep.subr.bf16.mxu0 0
        %2542 = vmatpush1.bf16.msra.mxu0 %v2331
        %2543 = vmatprep.subr.bf16.mxu0 0
        %2544 = vmatpush1.bf16.msra.mxu0 %v2332
        %2545 = vmatprep.subr.bf16.mxu0 0
        %2546 = vmatpush1.bf16.msra.mxu0 %v2333
        %2547 = vmatprep.subr.bf16.mxu0 0
        %2548 = vmatpush1.bf16.msra.mxu0 %v2334
        %2549 = vmatprep.subr.bf16.mxu0 0
        %2550 = vmatpush1.bf16.msra.mxu0 %v2335
        %2551 = vmatprep.subr.bf16.mxu0 0
        %2552 = vmatpush1.bf16.msra.mxu0 %v2336
        %2553 = vmatprep.subr.bf16.mxu0 0
        %2554 = vmatpush1.bf16.msra.mxu0 %v2337
        %2555 = vmatprep.subr.bf16.mxu0 0
        %2556 = vmatpush1.bf16.msra.mxu0 %v2338
        %2557 = vmatprep.subr.bf16.mxu0 0
        %2558 = vmatpush1.bf16.msra.mxu0 0
        %2559 = vmatprep.subr.bf16.mxu0 0
        %2560 = vmatpush1.bf16.msra.mxu0 0
        %2561 = vmatprep.subr.bf16.mxu0 0
        %2562 = vmatpush1.bf16.msra.mxu0 0
        %2563 = vmatprep.subr.bf16.mxu0 0
        %2564 = vmatpush1.bf16.msra.mxu0 0
        %2565 = vmatprep.subr.bf16.mxu0 0
        %2566 = vmatpush1.bf16.msra.mxu0 0
        %2567 = vmatprep.subr.bf16.mxu0 0
        %2568 = vmatpush1.bf16.msra.mxu0 0
        %2569 = vmatprep.subr.bf16.mxu0 0
        %2570 = vmatpush1.bf16.msra.mxu0 0
        %2571 = vmatprep.subr.bf16.mxu0 0
        %2572 = vmatpush1.bf16.msra.mxu0 0
        %2573 = vmatprep.mubr.bf16.mxu0 0
        %2574 = vmatmul.mubr.bf16.gmra.mrb[0].mxu0 %v1018
        %v2575 = vpop.f32.mrb[0].mxu0
        %v2576 = vadd.f32 0.0, %v2575
        %v2577 = vpop.f32.mrb[0].mxu0
        %v2578 = vpop.f32.mrb[0].mxu0
        %v2579 = vadd.f32 0.0, %v2578
        %v2580 = vpop.f32.mrb[0].mxu0
        %2581 = vmatprep.mubr.bf16.mxu0 0
        %2582 = vmatmul.mubr.bf16.gmra.mrb[0].mxu0 %v1019
        %v2583 = vpop.f32.mrb[0].mxu0
        %v2584 = vadd.f32 0.0, %v2583
        %v2585 = vpop.f32.mrb[0].mxu0
        %v2586 = vpop.f32.mrb[0].mxu0
        %v2587 = vadd.f32 0.0, %v2586
        %v2588 = vpop.f32.mrb[0].mxu0
        %2589 = vmatprep.mubr.bf16.mxu0 0
        %2590 = vmatmul.mubr.bf16.gmra.mrb[0].mxu0 %v1020
        %v2591 = vpop.f32.mrb[0].mxu0
        %v2592 = vadd.f32 0.0, %v2591
        %v2593 = vpop.f32.mrb[0].mxu0
        %v2594 = vpop.f32.mrb[0].mxu0
        %v2595 = vadd.f32 0.0, %v2594
        %v2596 = vpop.f32.mrb[0].mxu0
        %2597 = vmatprep.mubr.bf16.mxu0 0
        %2598 = vmatmul.mubr.bf16.gmra.mrb[0].mxu0 %v1021
        %v2599 = vpop.f32.mrb[0].mxu0
        %v2600 = vadd.f32 0.0, %v2599
        %v2601 = vpop.f32.mrb[0].mxu0
        %v2602 = vpop.f32.mrb[0].mxu0
        %v2603 = vadd.f32 0.0, %v2602
        %v2604 = vpop.f32.mrb[0].mxu0
        %2605 = vmatprep.mubr.bf16.mxu0 0
        %2606 = vmatmul.mubr.bf16.gmra.mrb[0].mxu0 %v1022
        %v2607 = vpop.f32.mrb[0].mxu0
        %v2608 = vadd.f32 0.0, %v2607
        %v2609 = vpop.f32.mrb[0].mxu0
        %v2610 = vpop.f32.mrb[0].mxu0
        %v2611 = vadd.f32 0.0, %v2610
        %v2612 = vpop.f32.mrb[0].mxu0
        %2613 = vmatprep.mubr.bf16.mxu0 0
        %2614 = vmatmul.mubr.bf16.gmra.mrb[0].mxu0 %v1023
        %v2615 = vpop.f32.mrb[0].mxu0
        %v2616 = vadd.f32 0.0, %v2615
        %v2617 = vpop.f32.mrb[0].mxu0
        %v2618 = vpop.f32.mrb[0].mxu0
        %v2619 = vadd.f32 0.0, %v2618
        %v2620 = vpop.f32.mrb[0].mxu0
        %2621 = vmatprep.mubr.bf16.mxu0 0
        %2622 = vmatmul.mubr.bf16.gmra.mrb[0].mxu0 %v1024
        %v2623 = vpop.f32.mrb[0].mxu0
        %v2624 = vadd.f32 0.0, %v2623
        %v2625 = vpop.f32.mrb[0].mxu0
        %v2626 = vpop.f32.mrb[0].mxu0
        %v2627 = vadd.f32 0.0, %v2626
        %v2628 = vpop.f32.mrb[0].mxu0
        %2629 = vmatprep.mubr.bf16.mxu0 0
        %2630 = vmatmul.mubr.bf16.gmra.mrb[0].mxu0 %v1025
        %v2631 = vpop.f32.mrb[0].mxu0
        %v2632 = vadd.f32 0.0, %v2631
        %v2633 = vpop.f32.mrb[0].mxu0
        %v2634 = vpop.f32.mrb[0].mxu0
        %v2635 = vadd.f32 0.0, %v2634
        %v2636 = vpop.f32.mrb[0].mxu0
        %2637 = vdwg.mxu0
        %2638 = vmatprep.subr.bf16.mxu0 0
        %2639 = vmatpush1.bf16.msra.mxu0 %v2339
        %2640 = vmatprep.subr.bf16.mxu0 0
        %2641 = vmatpush1.bf16.msra.mxu0 %v2340
        %2642 = vmatprep.subr.bf16.mxu0 0
        %2643 = vmatpush1.bf16.msra.mxu0 %v2341
        %2644 = vmatprep.subr.bf16.mxu0 0
        %2645 = vmatpush1.bf16.msra.mxu0 %v2342
        %2646 = vmatprep.subr.bf16.mxu0 0
        %2647 = vmatpush1.bf16.msra.mxu0 %v2343
        %2648 = vmatprep.subr.bf16.mxu0 0
        %2649 = vmatpush1.bf16.msra.mxu0 %v2344
        %2650 = vmatprep.subr.bf16.mxu0 0
        %2651 = vmatpush1.bf16.msra.mxu0 %v2345
        %2652 = vmatprep.subr.bf16.mxu0 0
        %2653 = vmatpush1.bf16.msra.mxu0 %v2346
        %2654 = vmatprep.subr.bf16.mxu0 0
        %2655 = vmatpush1.bf16.msra.mxu0 0
        %2656 = vmatprep.subr.bf16.mxu0 0
        %2657 = vmatpush1.bf16.msra.mxu0 0
        %2658 = vmatprep.subr.bf16.mxu0 0
        %2659 = vmatpush1.bf16.msra.mxu0 0
        %2660 = vmatprep.subr.bf16.mxu0 0
        %2661 = vmatpush1.bf16.msra.mxu0 0
        %2662 = vmatprep.subr.bf16.mxu0 0
        %2663 = vmatpush1.bf16.msra.mxu0 0
        %2664 = vmatprep.subr.bf16.mxu0 0
        %2665 = vmatpush1.bf16.msra.mxu0 0
        %2666 = vmatprep.subr.bf16.mxu0 0
        %2667 = vmatpush1.bf16.msra.mxu0 0
        %2668 = vmatprep.subr.bf16.mxu0 0
        %2669 = vmatpush1.bf16.msra.mxu0 0
        %2670 = vmatprep.mubr.bf16.mxu0 0
        %2671 = vmatmul.mubr.bf16.gmra.mrb[0].mxu0 %v1211
        %v2672 = vpop.f32.mrb[0].mxu0
        %v2673 = vadd.f32 0.0, %v2672
        %v2674 = vpop.f32.mrb[0].mxu0
        %v2675 = vpop.f32.mrb[0].mxu0
        %v2676 = vadd.f32 0.0, %v2675
        %v2677 = vpop.f32.mrb[0].mxu0
        %2678 = vmatprep.mubr.bf16.mxu0 0
        %2679 = vmatmul.mubr.bf16.gmra.mrb[0].mxu0 %v1212
        %v2680 = vpop.f32.mrb[0].mxu0
        %v2681 = vadd.f32 0.0, %v2680
        %v2682 = vpop.f32.mrb[0].mxu0
        %v2683 = vpop.f32.mrb[0].mxu0
        %v2684 = vadd.f32 0.0, %v2683
        %v2685 = vpop.f32.mrb[0].mxu0
        %2686 = vmatprep.mubr.bf16.mxu0 0
        %2687 = vmatmul.mubr.bf16.gmra.mrb[0].mxu0 %v1213
        %v2688 = vpop.f32.mrb[0].mxu0
        %v2689 = vadd.f32 0.0, %v2688
        %v2690 = vpop.f32.mrb[0].mxu0
        %v2691 = vpop.f32.mrb[0].mxu0
        %v2692 = vadd.f32 0.0, %v2691
        %v2693 = vpop.f32.mrb[0].mxu0
        %2694 = vmatprep.mubr.bf16.mxu0 0
        %2695 = vmatmul.mubr.bf16.gmra.mrb[0].mxu0 %v1214
        %v2696 = vpop.f32.mrb[0].mxu0
        %v2697 = vadd.f32 0.0, %v2696
        %v2698 = vpop.f32.mrb[0].mxu0
        %v2699 = vpop.f32.mrb[0].mxu0
        %v2700 = vadd.f32 0.0, %v2699
        %v2701 = vpop.f32.mrb[0].mxu0
        %2702 = vmatprep.mubr.bf16.mxu0 0
        %2703 = vmatmul.mubr.bf16.gmra.mrb[0].mxu0 %v1215
        %v2704 = vpop.f32.mrb[0].mxu0
        %v2705 = vadd.f32 0.0, %v2704
        %v2706 = vpop.f32.mrb[0].mxu0
        %v2707 = vpop.f32.mrb[0].mxu0
        %v2708 = vadd.f32 0.0, %v2707
        %v2709 = vpop.f32.mrb[0].mxu0
        %2710 = vmatprep.mubr.bf16.mxu0 0
        %2711 = vmatmul.mubr.bf16.gmra.mrb[0].mxu0 %v1216
        %v2712 = vpop.f32.mrb[0].mxu0
        %v2713 = vadd.f32 0.0, %v2712
        %v2714 = vpop.f32.mrb[0].mxu0
        %v2715 = vpop.f32.mrb[0].mxu0
        %v2716 = vadd.f32 0.0, %v2715
        %v2717 = vpop.f32.mrb[0].mxu0
        %2718 = vmatprep.mubr.bf16.mxu0 0
        %2719 = vmatmul.mubr.bf16.gmra.mrb[0].mxu0 %v1217
        %v2720 = vpop.f32.mrb[0].mxu0
        %v2721 = vadd.f32 0.0, %v2720
        %v2722 = vpop.f32.mrb[0].mxu0
        %v2723 = vpop.f32.mrb[0].mxu0
        %v2724 = vadd.f32 0.0, %v2723
        %v2725 = vpop.f32.mrb[0].mxu0
        %2726 = vmatprep.mubr.bf16.mxu0 0
        %2727 = vmatmul.mubr.bf16.gmra.mrb[0].mxu0 %v1218
        %v2728 = vpop.f32.mrb[0].mxu0
        %v2729 = vadd.f32 0.0, %v2728
        %v2730 = vpop.f32.mrb[0].mxu0
        %v2731 = vpop.f32.mrb[0].mxu0
        %v2732 = vadd.f32 0.0, %v2731
        %v2733 = vpop.f32.mrb[0].mxu0
        %2734 = vdwg.mxu0
        %v2735 = vmul.f32 %v1372, %v2382
        %v2736 = vmul.f32 %v1372, %v2385
        %v2737 = vmul.f32 %v1372, %v2390
        %v2738 = vmul.f32 %v1372, %v2393
        %v2739 = vmul.f32 %v1372, %v2398
        %v2740 = vmul.f32 %v1372, %v2401
        %v2741 = vmul.f32 %v1372, %v2406
        %v2742 = vmul.f32 %v1372, %v2409
        %v2743 = vmul.f32 %v1372, %v2414
        %v2744 = vmul.f32 %v1372, %v2417
        %v2745 = vmul.f32 %v1372, %v2422
        %v2746 = vmul.f32 %v1372, %v2425
        %v2747 = vmul.f32 %v1372, %v2430
        %v2748 = vmul.f32 %v1372, %v2433
        %v2749 = vmul.f32 %v1372, %v2438
        %v2750 = vmul.f32 %v1372, %v2441
        %v2751 = vmul.f32 %v1372, %v2479
        %v2752 = vmul.f32 %v1372, %v2482
        %v2753 = vmul.f32 %v1372, %v2487
        %v2754 = vmul.f32 %v1372, %v2490
        %v2755 = vmul.f32 %v1372, %v2495
        %v2756 = vmul.f32 %v1372, %v2498
        %v2757 = vmul.f32 %v1372, %v2503
        %v2758 = vmul.f32 %v1372, %v2506
        %v2759 = vmul.f32 %v1372, %v2511
        %v2760 = vmul.f32 %v1372, %v2514
        %v2761 = vmul.f32 %v1372, %v2519
        %v2762 = vmul.f32 %v1372, %v2522
        %v2763 = vmul.f32 %v1372, %v2527
        %v2764 = vmul.f32 %v1372, %v2530
        %v2765 = vmul.f32 %v1372, %v2535
        %v2766 = vmul.f32 %v1372, %v2538
        %v2767 = vmul.f32 %v1372, %v2576
        %v2768 = vmul.f32 %v1372, %v2579
        %v2769 = vmul.f32 %v1372, %v2584
        %v2770 = vmul.f32 %v1372, %v2587
        %v2771 = vmul.f32 %v1372, %v2592
        %v2772 = vmul.f32 %v1372, %v2595
        %v2773 = vmul.f32 %v1372, %v2600
        %v2774 = vmul.f32 %v1372, %v2603
        %v2775 = vmul.f32 %v1372, %v2608
        %v2776 = vmul.f32 %v1372, %v2611
        %v2777 = vmul.f32 %v1372, %v2616
        %v2778 = vmul.f32 %v1372, %v2619
        %v2779 = vmul.f32 %v1372, %v2624
        %v2780 = vmul.f32 %v1372, %v2627
        %v2781 = vmul.f32 %v1372, %v2632
        %v2782 = vmul.f32 %v1372, %v2635
        %v2783 = vmul.f32 %v1372, %v2673
        %v2784 = vmul.f32 %v1372, %v2676
        %v2785 = vmul.f32 %v1372, %v2681
        %v2786 = vmul.f32 %v1372, %v2684
        %v2787 = vmul.f32 %v1372, %v2689
        %v2788 = vmul.f32 %v1372, %v2692
        %v2789 = vmul.f32 %v1372, %v2697
        %v2790 = vmul.f32 %v1372, %v2700
        %v2791 = vmul.f32 %v1372, %v2705
        %v2792 = vmul.f32 %v1372, %v2708
        %v2793 = vmul.f32 %v1372, %v2713
        %v2794 = vmul.f32 %v1372, %v2716
        %v2795 = vmul.f32 %v1372, %v2721
        %v2796 = vmul.f32 %v1372, %v2724
        %v2797 = vmul.f32 %v1372, %v2729
        %v2798 = vmul.f32 %v1372, %v2732
        %v2799 = vadd.f32 %v2061, %v2735
        %v2800 = vadd.f32 %v2064, %v2736
        %v2801 = vadd.f32 %v2069, %v2737
        %v2802 = vadd.f32 %v2072, %v2738
        %v2803 = vadd.f32 %v2077, %v2739
        %v2804 = vadd.f32 %v2080, %v2740
        %v2805 = vadd.f32 %v2085, %v2741
        %v2806 = vadd.f32 %v2088, %v2742
        %v2807 = vadd.f32 %v2093, %v2743
        %v2808 = vadd.f32 %v2096, %v2744
        %v2809 = vadd.f32 %v2101, %v2745
        %v2810 = vadd.f32 %v2104, %v2746
        %v2811 = vadd.f32 %v2109, %v2747
        %v2812 = vadd.f32 %v2112, %v2748
        %v2813 = vadd.f32 %v2117, %v2749
        %v2814 = vadd.f32 %v2120, %v2750
        %v2815 = vadd.f32 %v2125, %v2751
        %v2816 = vadd.f32 %v2128, %v2752
        %v2817 = vadd.f32 %v2133, %v2753
        %v2818 = vadd.f32 %v2136, %v2754
        %v2819 = vadd.f32 %v2141, %v2755
        %v2820 = vadd.f32 %v2144, %v2756
        %v2821 = vadd.f32 %v2149, %v2757
        %v2822 = vadd.f32 %v2152, %v2758
        %v2823 = vadd.f32 %v2157, %v2759
        %v2824 = vadd.f32 %v2160, %v2760
        %v2825 = vadd.f32 %v2165, %v2761
        %v2826 = vadd.f32 %v2168, %v2762
        %v2827 = vadd.f32 %v2173, %v2763
        %v2828 = vadd.f32 %v2176, %v2764
        %v2829 = vadd.f32 %v2181, %v2765
        %v2830 = vadd.f32 %v2184, %v2766
        %v2831 = vadd.f32 %v2189, %v2767
        %v2832 = vadd.f32 %v2192, %v2768
        %v2833 = vadd.f32 %v2197, %v2769
        %v2834 = vadd.f32 %v2200, %v2770
        %v2835 = vadd.f32 %v2205, %v2771
        %v2836 = vadd.f32 %v2208, %v2772
        %v2837 = vadd.f32 %v2213, %v2773
        %v2838 = vadd.f32 %v2216, %v2774
        %v2839 = vadd.f32 %v2221, %v2775
        %v2840 = vadd.f32 %v2224, %v2776
        %v2841 = vadd.f32 %v2229, %v2777
        %v2842 = vadd.f32 %v2232, %v2778
        %v2843 = vadd.f32 %v2237, %v2779
        %v2844 = vadd.f32 %v2240, %v2780
        %v2845 = vadd.f32 %v2245, %v2781
        %v2846 = vadd.f32 %v2248, %v2782
        %v2847 = vadd.f32 %v2253, %v2783
        %v2848 = vadd.f32 %v2256, %v2784
        %v2849 = vadd.f32 %v2261, %v2785
        %v2850 = vadd.f32 %v2264, %v2786
        %v2851 = vadd.f32 %v2269, %v2787
        %v2852 = vadd.f32 %v2272, %v2788
        %v2853 = vadd.f32 %v2277, %v2789
        %v2854 = vadd.f32 %v2280, %v2790
        %v2855 = vadd.f32 %v2285, %v2791
        %v2856 = vadd.f32 %v2288, %v2792
        %v2857 = vadd.f32 %v2293, %v2793
        %v2858 = vadd.f32 %v2296, %v2794
        %v2859 = vadd.f32 %v2301, %v2795
        %v2860 = vadd.f32 %v2304, %v2796
        %v2861 = vadd.f32 %v2309, %v2797
        %v2862 = vadd.f32 %v2312, %v2798
        %v2863 = vpack.c.bf16 %v2800, %v2799
        %v2864 = vpack.c.bf16 %v2802, %v2801
        %v2865 = vpack.c.bf16 %v2804, %v2803
        %v2866 = vpack.c.bf16 %v2806, %v2805
        %v2867 = vpack.c.bf16 %v2808, %v2807
        %v2868 = vpack.c.bf16 %v2810, %v2809
        %v2869 = vpack.c.bf16 %v2812, %v2811
        %v2870 = vpack.c.bf16 %v2814, %v2813
        %v2871 = vpack.c.bf16 %v2816, %v2815
        %v2872 = vpack.c.bf16 %v2818, %v2817
        %v2873 = vpack.c.bf16 %v2820, %v2819
        %v2874 = vpack.c.bf16 %v2822, %v2821
        %v2875 = vpack.c.bf16 %v2824, %v2823
        %v2876 = vpack.c.bf16 %v2826, %v2825
        %v2877 = vpack.c.bf16 %v2828, %v2827
        %v2878 = vpack.c.bf16 %v2830, %v2829
        %v2879 = vpack.c.bf16 %v2832, %v2831
        %v2880 = vpack.c.bf16 %v2834, %v2833
        %v2881 = vpack.c.bf16 %v2836, %v2835
        %v2882 = vpack.c.bf16 %v2838, %v2837
        %v2883 = vpack.c.bf16 %v2840, %v2839
        %v2884 = vpack.c.bf16 %v2842, %v2841
        %v2885 = vpack.c.bf16 %v2844, %v2843
        %v2886 = vpack.c.bf16 %v2846, %v2845
        %v2887 = vpack.c.bf16 %v2848, %v2847
        %v2888 = vpack.c.bf16 %v2850, %v2849
        %v2889 = vpack.c.bf16 %v2852, %v2851
        %v2890 = vpack.c.bf16 %v2854, %v2853
        %v2891 = vpack.c.bf16 %v2856, %v2855
        %v2892 = vpack.c.bf16 %v2858, %v2857
        %v2893 = vpack.c.bf16 %v2860, %v2859
        %v2894 = vpack.c.bf16 %v2862, %v2861
        %2895 = vmatprep.subr.bf16.mxu0 0
        %2896 = vmatpush1.bf16.msra.mxu0 %v1571
        %2897 = vmatprep.subr.bf16.mxu0 0
        %2898 = vmatpush1.bf16.msra.mxu0 %v1572
        %2899 = vmatprep.subr.bf16.mxu0 0
        %2900 = vmatpush1.bf16.msra.mxu0 %v1573
        %2901 = vmatprep.subr.bf16.mxu0 0
        %2902 = vmatpush1.bf16.msra.mxu0 %v1574
        %2903 = vmatprep.subr.bf16.mxu0 0
        %2904 = vmatpush1.bf16.msra.mxu0 %v1575
        %2905 = vmatprep.subr.bf16.mxu0 0
        %2906 = vmatpush1.bf16.msra.mxu0 %v1576
        %2907 = vmatprep.subr.bf16.mxu0 0
        %2908 = vmatpush1.bf16.msra.mxu0 %v1577
        %2909 = vmatprep.subr.bf16.mxu0 0
        %2910 = vmatpush1.bf16.msra.mxu0 %v1578
        %2911 = vmatprep.subr.bf16.mxu0 0
        %2912 = vmatpush1.bf16.msra.mxu0 0
        %2913 = vmatprep.subr.bf16.mxu0 0
        %2914 = vmatpush1.bf16.msra.mxu0 0
        %2915 = vmatprep.subr.bf16.mxu0 0
        %2916 = vmatpush1.bf16.msra.mxu0 0
        %2917 = vmatprep.subr.bf16.mxu0 0
        %2918 = vmatpush1.bf16.msra.mxu0 0
        %2919 = vmatprep.subr.bf16.mxu0 0
        %2920 = vmatpush1.bf16.msra.mxu0 0
        %2921 = vmatprep.subr.bf16.mxu0 0
        %2922 = vmatpush1.bf16.msra.mxu0 0
        %2923 = vmatprep.subr.bf16.mxu0 0
        %2924 = vmatpush1.bf16.msra.mxu0 0
        %2925 = vmatprep.subr.bf16.mxu0 0
        %2926 = vmatpush1.bf16.msra.mxu0 0
        %2927 = vmatprep.mubr.bf16.mxu0 0
        %2928 = vmatmul.mubr.bf16.gmra.mrb[0].mxu0 %v2863
        %v2929 = vpop.f32.mrb[0].mxu0
        %v2930 = vadd.f32 %v1537, %v2929
        %v2931 = vpop.f32.mrb[0].mxu0
        %v2932 = vpop.f32.mrb[0].mxu0
        %v2933 = vadd.f32 %v1537, %v2932
        %v2934 = vpop.f32.mrb[0].mxu0
        %2935 = vmatprep.mubr.bf16.mxu0 0
        %2936 = vmatmul.mubr.bf16.gmra.mrb[0].mxu0 %v2864
        %v2937 = vpop.f32.mrb[0].mxu0
        %v2938 = vadd.f32 %v1537, %v2937
        %v2939 = vpop.f32.mrb[0].mxu0
        %v2940 = vpop.f32.mrb[0].mxu0
        %v2941 = vadd.f32 %v1537, %v2940
        %v2942 = vpop.f32.mrb[0].mxu0
        %2943 = vmatprep.mubr.bf16.mxu0 0
        %2944 = vmatmul.mubr.bf16.gmra.mrb[0].mxu0 %v2865
        %v2945 = vpop.f32.mrb[0].mxu0
        %v2946 = vadd.f32 %v1537, %v2945
        %v2947 = vpop.f32.mrb[0].mxu0
        %v2948 = vpop.f32.mrb[0].mxu0
        %v2949 = vadd.f32 %v1537, %v2948
        %v2950 = vpop.f32.mrb[0].mxu0
        %2951 = vmatprep.mubr.bf16.mxu0 0
        %2952 = vmatmul.mubr.bf16.gmra.mrb[0].mxu0 %v2866
        %v2953 = vpop.f32.mrb[0].mxu0
        %v2954 = vadd.f32 %v1537, %v2953
        %v2955 = vpop.f32.mrb[0].mxu0
        %v2956 = vpop.f32.mrb[0].mxu0
        %v2957 = vadd.f32 %v1537, %v2956
        %v2958 = vpop.f32.mrb[0].mxu0
        %2959 = vmatprep.mubr.bf16.mxu0 0
        %2960 = vmatmul.mubr.bf16.gmra.mrb[0].mxu0 %v2867
        %v2961 = vpop.f32.mrb[0].mxu0
        %v2962 = vadd.f32 %v1537, %v2961
        %v2963 = vpop.f32.mrb[0].mxu0
        %v2964 = vpop.f32.mrb[0].mxu0
        %v2965 = vadd.f32 %v1537, %v2964
        %v2966 = vpop.f32.mrb[0].mxu0
        %2967 = vmatprep.mubr.bf16.mxu0 0
        %2968 = vmatmul.mubr.bf16.gmra.mrb[0].mxu0 %v2868
        %v2969 = vpop.f32.mrb[0].mxu0
        %v2970 = vadd.f32 %v1537, %v2969
        %v2971 = vpop.f32.mrb[0].mxu0
        %v2972 = vpop.f32.mrb[0].mxu0
        %v2973 = vadd.f32 %v1537, %v2972
        %v2974 = vpop.f32.mrb[0].mxu0
        %2975 = vmatprep.mubr.bf16.mxu0 0
        %2976 = vmatmul.mubr.bf16.gmra.mrb[0].mxu0 %v2869
        %v2977 = vpop.f32.mrb[0].mxu0
        %v2978 = vadd.f32 %v1537, %v2977
        %v2979 = vpop.f32.mrb[0].mxu0
        %v2980 = vpop.f32.mrb[0].mxu0
        %v2981 = vadd.f32 %v1537, %v2980
        %v2982 = vpop.f32.mrb[0].mxu0
        %2983 = vmatprep.mubr.bf16.mxu0 0
        %2984 = vmatmul.mubr.bf16.gmra.mrb[0].mxu0 %v2870
        %v2985 = vpop.f32.mrb[0].mxu0
        %v2986 = vadd.f32 %v1537, %v2985
        %v2987 = vpop.f32.mrb[0].mxu0
        %v2988 = vpop.f32.mrb[0].mxu0
        %v2989 = vadd.f32 %v1537, %v2988
        %v2990 = vpop.f32.mrb[0].mxu0
        %2991 = vmatprep.mubr.bf16.mxu0 0
        %2992 = vmatmul.mubr.bf16.gmra.mrb[0].mxu0 %v2871
        %v2993 = vpop.f32.mrb[0].mxu0
        %v2994 = vadd.f32 %v1537, %v2993
        %v2995 = vpop.f32.mrb[0].mxu0
        %v2996 = vpop.f32.mrb[0].mxu0
        %v2997 = vadd.f32 %v1537, %v2996
        %v2998 = vpop.f32.mrb[0].mxu0
        %2999 = vmatprep.mubr.bf16.mxu0 0
        %3000 = vmatmul.mubr.bf16.gmra.mrb[0].mxu0 %v2872
        %v3001 = vpop.f32.mrb[0].mxu0
        %v3002 = vadd.f32 %v1537, %v3001
        %v3003 = vpop.f32.mrb[0].mxu0
        %v3004 = vpop.f32.mrb[0].mxu0
        %v3005 = vadd.f32 %v1537, %v3004
        %v3006 = vpop.f32.mrb[0].mxu0
        %3007 = vmatprep.mubr.bf16.mxu0 0
        %3008 = vmatmul.mubr.bf16.gmra.mrb[0].mxu0 %v2873
        %v3009 = vpop.f32.mrb[0].mxu0
        %v3010 = vadd.f32 %v1537, %v3009
        %v3011 = vpop.f32.mrb[0].mxu0
        %v3012 = vpop.f32.mrb[0].mxu0
        %v3013 = vadd.f32 %v1537, %v3012
        %v3014 = vpop.f32.mrb[0].mxu0
        %3015 = vmatprep.mubr.bf16.mxu0 0
        %3016 = vmatmul.mubr.bf16.gmra.mrb[0].mxu0 %v2874
        %v3017 = vpop.f32.mrb[0].mxu0
        %v3018 = vadd.f32 %v1537, %v3017
        %v3019 = vpop.f32.mrb[0].mxu0
        %v3020 = vpop.f32.mrb[0].mxu0
        %v3021 = vadd.f32 %v1537, %v3020
        %v3022 = vpop.f32.mrb[0].mxu0
        %3023 = vmatprep.mubr.bf16.mxu0 0
        %3024 = vmatmul.mubr.bf16.gmra.mrb[0].mxu0 %v2875
        %v3025 = vpop.f32.mrb[0].mxu0
        %v3026 = vadd.f32 %v1537, %v3025
        %v3027 = vpop.f32.mrb[0].mxu0
        %v3028 = vpop.f32.mrb[0].mxu0
        %v3029 = vadd.f32 %v1537, %v3028
        %v3030 = vpop.f32.mrb[0].mxu0
        %3031 = vmatprep.mubr.bf16.mxu0 0
        %3032 = vmatmul.mubr.bf16.gmra.mrb[0].mxu0 %v2876
        %v3033 = vpop.f32.mrb[0].mxu0
        %v3034 = vadd.f32 %v1537, %v3033
        %v3035 = vpop.f32.mrb[0].mxu0
        %v3036 = vpop.f32.mrb[0].mxu0
        %v3037 = vadd.f32 %v1537, %v3036
        %v3038 = vpop.f32.mrb[0].mxu0
        %3039 = vmatprep.mubr.bf16.mxu0 0
        %3040 = vmatmul.mubr.bf16.gmra.mrb[0].mxu0 %v2877
        %v3041 = vpop.f32.mrb[0].mxu0
        %v3042 = vadd.f32 %v1537, %v3041
        %v3043 = vpop.f32.mrb[0].mxu0
        %v3044 = vpop.f32.mrb[0].mxu0
        %v3045 = vadd.f32 %v1537, %v3044
        %v3046 = vpop.f32.mrb[0].mxu0
        %3047 = vmatprep.mubr.bf16.mxu0 0
        %3048 = vmatmul.mubr.bf16.gmra.mrb[0].mxu0 %v2878
        %v3049 = vpop.f32.mrb[0].mxu0
        %v3050 = vadd.f32 %v1537, %v3049
        %v3051 = vpop.f32.mrb[0].mxu0
        %v3052 = vpop.f32.mrb[0].mxu0
        %v3053 = vadd.f32 %v1537, %v3052
        %v3054 = vpop.f32.mrb[0].mxu0
        %3055 = vmatprep.mubr.bf16.mxu0 0
        %3056 = vmatmul.mubr.bf16.gmra.mrb[0].mxu0 %v2879
        %v3057 = vpop.f32.mrb[0].mxu0
        %v3058 = vadd.f32 %v1537, %v3057
        %v3059 = vpop.f32.mrb[0].mxu0
        %v3060 = vpop.f32.mrb[0].mxu0
        %v3061 = vadd.f32 %v1537, %v3060
        %v3062 = vpop.f32.mrb[0].mxu0
        %3063 = vmatprep.mubr.bf16.mxu0 0
        %3064 = vmatmul.mubr.bf16.gmra.mrb[0].mxu0 %v2880
        %v3065 = vpop.f32.mrb[0].mxu0
        %v3066 = vadd.f32 %v1537, %v3065
        %v3067 = vpop.f32.mrb[0].mxu0
        %v3068 = vpop.f32.mrb[0].mxu0
        %v3069 = vadd.f32 %v1537, %v3068
        %v3070 = vpop.f32.mrb[0].mxu0
        %3071 = vmatprep.mubr.bf16.mxu0 0
        %3072 = vmatmul.mubr.bf16.gmra.mrb[0].mxu0 %v2881
        %v3073 = vpop.f32.mrb[0].mxu0
        %v3074 = vadd.f32 %v1537, %v3073
        %v3075 = vpop.f32.mrb[0].mxu0
        %v3076 = vpop.f32.mrb[0].mxu0
        %v3077 = vadd.f32 %v1537, %v3076
        %v3078 = vpop.f32.mrb[0].mxu0
        %3079 = vmatprep.mubr.bf16.mxu0 0
        %3080 = vmatmul.mubr.bf16.gmra.mrb[0].mxu0 %v2882
        %v3081 = vpop.f32.mrb[0].mxu0
        %v3082 = vadd.f32 %v1537, %v3081
        %v3083 = vpop.f32.mrb[0].mxu0
        %v3084 = vpop.f32.mrb[0].mxu0
        %v3085 = vadd.f32 %v1537, %v3084
        %v3086 = vpop.f32.mrb[0].mxu0
        %3087 = vmatprep.mubr.bf16.mxu0 0
        %3088 = vmatmul.mubr.bf16.gmra.mrb[0].mxu0 %v2883
        %v3089 = vpop.f32.mrb[0].mxu0
        %v3090 = vadd.f32 %v1537, %v3089
        %v3091 = vpop.f32.mrb[0].mxu0
        %v3092 = vpop.f32.mrb[0].mxu0
        %v3093 = vadd.f32 %v1537, %v3092
        %v3094 = vpop.f32.mrb[0].mxu0
        %3095 = vmatprep.mubr.bf16.mxu0 0
        %3096 = vmatmul.mubr.bf16.gmra.mrb[0].mxu0 %v2884
        %v3097 = vpop.f32.mrb[0].mxu0
        %v3098 = vadd.f32 %v1537, %v3097
        %v3099 = vpop.f32.mrb[0].mxu0
        %v3100 = vpop.f32.mrb[0].mxu0
        %v3101 = vadd.f32 %v1537, %v3100
        %v3102 = vpop.f32.mrb[0].mxu0
        %3103 = vmatprep.mubr.bf16.mxu0 0
        %3104 = vmatmul.mubr.bf16.gmra.mrb[0].mxu0 %v2885
        %v3105 = vpop.f32.mrb[0].mxu0
        %v3106 = vadd.f32 %v1537, %v3105
        %v3107 = vpop.f32.mrb[0].mxu0
        %v3108 = vpop.f32.mrb[0].mxu0
        %v3109 = vadd.f32 %v1537, %v3108
        %v3110 = vpop.f32.mrb[0].mxu0
        %3111 = vmatprep.mubr.bf16.mxu0 0
        %3112 = vmatmul.mubr.bf16.gmra.mrb[0].mxu0 %v2886
        %v3113 = vpop.f32.mrb[0].mxu0
        %v3114 = vadd.f32 %v1537, %v3113
        %v3115 = vpop.f32.mrb[0].mxu0
        %v3116 = vpop.f32.mrb[0].mxu0
        %v3117 = vadd.f32 %v1537, %v3116
        %v3118 = vpop.f32.mrb[0].mxu0
        %3119 = vmatprep.mubr.bf16.mxu0 0
        %3120 = vmatmul.mubr.bf16.gmra.mrb[0].mxu0 %v2887
        %v3121 = vpop.f32.mrb[0].mxu0
        %v3122 = vadd.f32 %v1537, %v3121
        %v3123 = vpop.f32.mrb[0].mxu0
        %v3124 = vpop.f32.mrb[0].mxu0
        %v3125 = vadd.f32 %v1537, %v3124
        %v3126 = vpop.f32.mrb[0].mxu0
        %3127 = vmatprep.mubr.bf16.mxu0 0
        %3128 = vmatmul.mubr.bf16.gmra.mrb[0].mxu0 %v2888
        %v3129 = vpop.f32.mrb[0].mxu0
        %v3130 = vadd.f32 %v1537, %v3129
        %v3131 = vpop.f32.mrb[0].mxu0
        %v3132 = vpop.f32.mrb[0].mxu0
        %v3133 = vadd.f32 %v1537, %v3132
        %v3134 = vpop.f32.mrb[0].mxu0
        %3135 = vmatprep.mubr.bf16.mxu0 0
        %3136 = vmatmul.mubr.bf16.gmra.mrb[0].mxu0 %v2889
        %v3137 = vpop.f32.mrb[0].mxu0
        %v3138 = vadd.f32 %v1537, %v3137
        %v3139 = vpop.f32.mrb[0].mxu0
        %v3140 = vpop.f32.mrb[0].mxu0
        %v3141 = vadd.f32 %v1537, %v3140
        %v3142 = vpop.f32.mrb[0].mxu0
        %3143 = vmatprep.mubr.bf16.mxu0 0
        %3144 = vmatmul.mubr.bf16.gmra.mrb[0].mxu0 %v2890
        %v3145 = vpop.f32.mrb[0].mxu0
        %v3146 = vadd.f32 %v1537, %v3145
        %v3147 = vpop.f32.mrb[0].mxu0
        %v3148 = vpop.f32.mrb[0].mxu0
        %v3149 = vadd.f32 %v1537, %v3148
        %v3150 = vpop.f32.mrb[0].mxu0
        %3151 = vmatprep.mubr.bf16.mxu0 0
        %3152 = vmatmul.mubr.bf16.gmra.mrb[0].mxu0 %v2891
        %v3153 = vpop.f32.mrb[0].mxu0
        %v3154 = vadd.f32 %v1537, %v3153
        %v3155 = vpop.f32.mrb[0].mxu0
        %v3156 = vpop.f32.mrb[0].mxu0
        %v3157 = vadd.f32 %v1537, %v3156
        %v3158 = vpop.f32.mrb[0].mxu0
        %3159 = vmatprep.mubr.bf16.mxu0 0
        %3160 = vmatmul.mubr.bf16.gmra.mrb[0].mxu0 %v2892
        %v3161 = vpop.f32.mrb[0].mxu0
        %v3162 = vadd.f32 %v1537, %v3161
        %v3163 = vpop.f32.mrb[0].mxu0
        %v3164 = vpop.f32.mrb[0].mxu0
        %v3165 = vadd.f32 %v1537, %v3164
        %v3166 = vpop.f32.mrb[0].mxu0
        %3167 = vmatprep.mubr.bf16.mxu0 0
        %3168 = vmatmul.mubr.bf16.gmra.mrb[0].mxu0 %v2893
        %v3169 = vpop.f32.mrb[0].mxu0
        %v3170 = vadd.f32 %v1537, %v3169
        %v3171 = vpop.f32.mrb[0].mxu0
        %v3172 = vpop.f32.mrb[0].mxu0
        %v3173 = vadd.f32 %v1537, %v3172
        %v3174 = vpop.f32.mrb[0].mxu0
        %3175 = vmatprep.mubr.bf16.mxu0 0
        %3176 = vmatmul.mubr.bf16.gmra.mrb[0].mxu0 %v2894
        %v3177 = vpop.f32.mrb[0].mxu0
        %v3178 = vadd.f32 %v1537, %v3177
        %v3179 = vpop.f32.mrb[0].mxu0
        %v3180 = vpop.f32.mrb[0].mxu0
        %v3181 = vadd.f32 %v1537, %v3180
        %v3182 = vpop.f32.mrb[0].mxu0
        %3183 = vdwg.mxu0
        %v3184 = vmax.f32 %v2930, 0.0
        %v3185 = vmax.f32 %v2933, 0.0
        %v3186 = vmax.f32 %v2938, 0.0
        %v3187 = vmax.f32 %v2941, 0.0
        %v3188 = vmax.f32 %v2946, 0.0
        %v3189 = vmax.f32 %v2949, 0.0
        %v3190 = vmax.f32 %v2954, 0.0
        %v3191 = vmax.f32 %v2957, 0.0
        %v3192 = vmax.f32 %v2962, 0.0
        %v3193 = vmax.f32 %v2965, 0.0
        %v3194 = vmax.f32 %v2970, 0.0
        %v3195 = vmax.f32 %v2973, 0.0
        %v3196 = vmax.f32 %v2978, 0.0
        %v3197 = vmax.f32 %v2981, 0.0
        %v3198 = vmax.f32 %v2986, 0.0
        %v3199 = vmax.f32 %v2989, 0.0
        %v3200 = vmax.f32 %v2994, 0.0
        %v3201 = vmax.f32 %v2997, 0.0
        %v3202 = vmax.f32 %v3002, 0.0
        %v3203 = vmax.f32 %v3005, 0.0
        %v3204 = vmax.f32 %v3010, 0.0
        %v3205 = vmax.f32 %v3013, 0.0
        %v3206 = vmax.f32 %v3018, 0.0
        %v3207 = vmax.f32 %v3021, 0.0
        %v3208 = vmax.f32 %v3026, 0.0
        %v3209 = vmax.f32 %v3029, 0.0
        %v3210 = vmax.f32 %v3034, 0.0
        %v3211 = vmax.f32 %v3037, 0.0
        %v3212 = vmax.f32 %v3042, 0.0
        %v3213 = vmax.f32 %v3045, 0.0
        %v3214 = vmax.f32 %v3050, 0.0
        %v3215 = vmax.f32 %v3053, 0.0
        %v3216 = vmax.f32 %v3058, 0.0
        %v3217 = vmax.f32 %v3061, 0.0
        %v3218 = vmax.f32 %v3066, 0.0
        %v3219 = vmax.f32 %v3069, 0.0
        %v3220 = vmax.f32 %v3074, 0.0
        %v3221 = vmax.f32 %v3077, 0.0
        %v3222 = vmax.f32 %v3082, 0.0
        %v3223 = vmax.f32 %v3085, 0.0
        %v3224 = vmax.f32 %v3090, 0.0
        %v3225 = vmax.f32 %v3093, 0.0
        %v3226 = vmax.f32 %v3098, 0.0
        %v3227 = vmax.f32 %v3101, 0.0
        %v3228 = vmax.f32 %v3106, 0.0
        %v3229 = vmax.f32 %v3109, 0.0
        %v3230 = vmax.f32 %v3114, 0.0
        %v3231 = vmax.f32 %v3117, 0.0
        %v3232 = vmax.f32 %v3122, 0.0
        %v3233 = vmax.f32 %v3125, 0.0
        %v3234 = vmax.f32 %v3130, 0.0
        %v3235 = vmax.f32 %v3133, 0.0
        %v3236 = vmax.f32 %v3138, 0.0
        %v3237 = vmax.f32 %v3141, 0.0
        %v3238 = vmax.f32 %v3146, 0.0
        %v3239 = vmax.f32 %v3149, 0.0
        %v3240 = vmax.f32 %v3154, 0.0
        %v3241 = vmax.f32 %v3157, 0.0
        %v3242 = vmax.f32 %v3162, 0.0
        %v3243 = vmax.f32 %v3165, 0.0
        %v3244 = vmax.f32 %v3170, 0.0
        %v3245 = vmax.f32 %v3173, 0.0
        %v3246 = vmax.f32 %v3178, 0.0
        %v3247 = vmax.f32 %v3181, 0.0
        %v3248 = vpack.c.bf16 %v3185, %v3184
        %v3249 = vpack.c.bf16 %v3187, %v3186
        %v3250 = vpack.c.bf16 %v3189, %v3188
        %v3251 = vpack.c.bf16 %v3191, %v3190
        %v3252 = vpack.c.bf16 %v3193, %v3192
        %v3253 = vpack.c.bf16 %v3195, %v3194
        %v3254 = vpack.c.bf16 %v3197, %v3196
        %v3255 = vpack.c.bf16 %v3199, %v3198
        %v3256 = vpack.c.bf16 %v3201, %v3200
        %v3257 = vpack.c.bf16 %v3203, %v3202
        %v3258 = vpack.c.bf16 %v3205, %v3204
        %v3259 = vpack.c.bf16 %v3207, %v3206
        %v3260 = vpack.c.bf16 %v3209, %v3208
        %v3261 = vpack.c.bf16 %v3211, %v3210
        %v3262 = vpack.c.bf16 %v3213, %v3212
        %v3263 = vpack.c.bf16 %v3215, %v3214
        %v3264 = vpack.c.bf16 %v3217, %v3216
        %v3265 = vpack.c.bf16 %v3219, %v3218
        %v3266 = vpack.c.bf16 %v3221, %v3220
        %v3267 = vpack.c.bf16 %v3223, %v3222
        %v3268 = vpack.c.bf16 %v3225, %v3224
        %v3269 = vpack.c.bf16 %v3227, %v3226
        %v3270 = vpack.c.bf16 %v3229, %v3228
        %v3271 = vpack.c.bf16 %v3231, %v3230
        %v3272 = vpack.c.bf16 %v3233, %v3232
        %v3273 = vpack.c.bf16 %v3235, %v3234
        %v3274 = vpack.c.bf16 %v3237, %v3236
        %v3275 = vpack.c.bf16 %v3239, %v3238
        %v3276 = vpack.c.bf16 %v3241, %v3240
        %v3277 = vpack.c.bf16 %v3243, %v3242
        %v3278 = vpack.c.bf16 %v3245, %v3244
        %v3279 = vpack.c.bf16 %v3247, %v3246
        %3280 = vmatprep.subr.bf16.mxu0 0
        %3281 = vmatpush1.bf16.msra.mxu0 %v2010
        %3282 = vmatprep.subr.bf16.mxu0 0
        %3283 = vmatpush1.bf16.msra.mxu0 %v2011
        %3284 = vmatprep.subr.bf16.mxu0 0
        %3285 = vmatpush1.bf16.msra.mxu0 %v2012
        %3286 = vmatprep.subr.bf16.mxu0 0
        %3287 = vmatpush1.bf16.msra.mxu0 %v2013
        %3288 = vmatprep.subr.bf16.mxu0 0
        %3289 = vmatpush1.bf16.msra.mxu0 %v2014
        %3290 = vmatprep.subr.bf16.mxu0 0
        %3291 = vmatpush1.bf16.msra.mxu0 %v2015
        %3292 = vmatprep.subr.bf16.mxu0 0
        %3293 = vmatpush1.bf16.msra.mxu0 %v2016
        %3294 = vmatprep.subr.bf16.mxu0 0
        %3295 = vmatpush1.bf16.msra.mxu0 %v2017
        %3296 = vmatprep.subr.bf16.mxu0 0
        %3297 = vmatpush1.bf16.msra.mxu0 0
        %3298 = vmatprep.subr.bf16.mxu0 0
        %3299 = vmatpush1.bf16.msra.mxu0 0
        %3300 = vmatprep.subr.bf16.mxu0 0
        %3301 = vmatpush1.bf16.msra.mxu0 0
        %3302 = vmatprep.subr.bf16.mxu0 0
        %3303 = vmatpush1.bf16.msra.mxu0 0
        %3304 = vmatprep.subr.bf16.mxu0 0
        %3305 = vmatpush1.bf16.msra.mxu0 0
        %3306 = vmatprep.subr.bf16.mxu0 0
        %3307 = vmatpush1.bf16.msra.mxu0 0
        %3308 = vmatprep.subr.bf16.mxu0 0
        %3309 = vmatpush1.bf16.msra.mxu0 0
        %3310 = vmatprep.subr.bf16.mxu0 0
        %3311 = vmatpush1.bf16.msra.mxu0 0
        %3312 = vmatprep.mubr.bf16.mxu0 0
        %3313 = vmatmul.mubr.bf16.gmra.mrb[0].mxu0 %v3248
        %v3314 = vpop.f32.mrb[0].mxu0
        %v3315 = vadd.f32 %v1976, %v3314
        %v3316 = vpop.f32.mrb[0].mxu0
        %v3317 = vpop.f32.mrb[0].mxu0
        %v3318 = vadd.f32 %v1976, %v3317
        %v3319 = vpop.f32.mrb[0].mxu0
        %3320 = vmatprep.mubr.bf16.mxu0 0
        %3321 = vmatmul.mubr.bf16.gmra.mrb[0].mxu0 %v3249
        %v3322 = vpop.f32.mrb[0].mxu0
        %v3323 = vadd.f32 %v1976, %v3322
        %v3324 = vpop.f32.mrb[0].mxu0
        %v3325 = vpop.f32.mrb[0].mxu0
        %v3326 = vadd.f32 %v1976, %v3325
        %v3327 = vpop.f32.mrb[0].mxu0
        %3328 = vmatprep.mubr.bf16.mxu0 0
        %3329 = vmatmul.mubr.bf16.gmra.mrb[0].mxu0 %v3250
        %v3330 = vpop.f32.mrb[0].mxu0
        %v3331 = vadd.f32 %v1976, %v3330
        %v3332 = vpop.f32.mrb[0].mxu0
        %v3333 = vpop.f32.mrb[0].mxu0
        %v3334 = vadd.f32 %v1976, %v3333
        %v3335 = vpop.f32.mrb[0].mxu0
        %3336 = vmatprep.mubr.bf16.mxu0 0
        %3337 = vmatmul.mubr.bf16.gmra.mrb[0].mxu0 %v3251
        %v3338 = vpop.f32.mrb[0].mxu0
        %v3339 = vadd.f32 %v1976, %v3338
        %v3340 = vpop.f32.mrb[0].mxu0
        %v3341 = vpop.f32.mrb[0].mxu0
        %v3342 = vadd.f32 %v1976, %v3341
        %v3343 = vpop.f32.mrb[0].mxu0
        %3344 = vmatprep.mubr.bf16.mxu0 0
        %3345 = vmatmul.mubr.bf16.gmra.mrb[0].mxu0 %v3252
        %v3346 = vpop.f32.mrb[0].mxu0
        %v3347 = vadd.f32 %v1976, %v3346
        %v3348 = vpop.f32.mrb[0].mxu0
        %v3349 = vpop.f32.mrb[0].mxu0
        %v3350 = vadd.f32 %v1976, %v3349
        %v3351 = vpop.f32.mrb[0].mxu0
        %3352 = vmatprep.mubr.bf16.mxu0 0
        %3353 = vmatmul.mubr.bf16.gmra.mrb[0].mxu0 %v3253
        %v3354 = vpop.f32.mrb[0].mxu0
        %v3355 = vadd.f32 %v1976, %v3354
        %v3356 = vpop.f32.mrb[0].mxu0
        %v3357 = vpop.f32.mrb[0].mxu0
        %v3358 = vadd.f32 %v1976, %v3357
        %v3359 = vpop.f32.mrb[0].mxu0
        %3360 = vmatprep.mubr.bf16.mxu0 0
        %3361 = vmatmul.mubr.bf16.gmra.mrb[0].mxu0 %v3254
        %v3362 = vpop.f32.mrb[0].mxu0
        %v3363 = vadd.f32 %v1976, %v3362
        %v3364 = vpop.f32.mrb[0].mxu0
        %v3365 = vpop.f32.mrb[0].mxu0
        %v3366 = vadd.f32 %v1976, %v3365
        %v3367 = vpop.f32.mrb[0].mxu0
        %3368 = vmatprep.mubr.bf16.mxu0 0
        %3369 = vmatmul.mubr.bf16.gmra.mrb[0].mxu0 %v3255
        %v3370 = vpop.f32.mrb[0].mxu0
        %v3371 = vadd.f32 %v1976, %v3370
        %v3372 = vpop.f32.mrb[0].mxu0
        %v3373 = vpop.f32.mrb[0].mxu0
        %v3374 = vadd.f32 %v1976, %v3373
        %v3375 = vpop.f32.mrb[0].mxu0
        %3376 = vmatprep.mubr.bf16.mxu0 0
        %3377 = vmatmul.mubr.bf16.gmra.mrb[0].mxu0 %v3256
        %v3378 = vpop.f32.mrb[0].mxu0
        %v3379 = vadd.f32 %v1976, %v3378
        %v3380 = vpop.f32.mrb[0].mxu0
        %v3381 = vpop.f32.mrb[0].mxu0
        %v3382 = vadd.f32 %v1976, %v3381
        %v3383 = vpop.f32.mrb[0].mxu0
        %3384 = vmatprep.mubr.bf16.mxu0 0
        %3385 = vmatmul.mubr.bf16.gmra.mrb[0].mxu0 %v3257
        %v3386 = vpop.f32.mrb[0].mxu0
        %v3387 = vadd.f32 %v1976, %v3386
        %v3388 = vpop.f32.mrb[0].mxu0
        %v3389 = vpop.f32.mrb[0].mxu0
        %v3390 = vadd.f32 %v1976, %v3389
        %v3391 = vpop.f32.mrb[0].mxu0
        %3392 = vmatprep.mubr.bf16.mxu0 0
        %3393 = vmatmul.mubr.bf16.gmra.mrb[0].mxu0 %v3258
        %v3394 = vpop.f32.mrb[0].mxu0
        %v3395 = vadd.f32 %v1976, %v3394
        %v3396 = vpop.f32.mrb[0].mxu0
        %v3397 = vpop.f32.mrb[0].mxu0
        %v3398 = vadd.f32 %v1976, %v3397
        %v3399 = vpop.f32.mrb[0].mxu0
        %3400 = vmatprep.mubr.bf16.mxu0 0
        %3401 = vmatmul.mubr.bf16.gmra.mrb[0].mxu0 %v3259
        %v3402 = vpop.f32.mrb[0].mxu0
        %v3403 = vadd.f32 %v1976, %v3402
        %v3404 = vpop.f32.mrb[0].mxu0
        %v3405 = vpop.f32.mrb[0].mxu0
        %v3406 = vadd.f32 %v1976, %v3405
        %v3407 = vpop.f32.mrb[0].mxu0
        %3408 = vmatprep.mubr.bf16.mxu0 0
        %3409 = vmatmul.mubr.bf16.gmra.mrb[0].mxu0 %v3260
        %v3410 = vpop.f32.mrb[0].mxu0
        %v3411 = vadd.f32 %v1976, %v3410
        %v3412 = vpop.f32.mrb[0].mxu0
        %v3413 = vpop.f32.mrb[0].mxu0
        %v3414 = vadd.f32 %v1976, %v3413
        %v3415 = vpop.f32.mrb[0].mxu0
        %3416 = vmatprep.mubr.bf16.mxu0 0
        %3417 = vmatmul.mubr.bf16.gmra.mrb[0].mxu0 %v3261
        %v3418 = vpop.f32.mrb[0].mxu0
        %v3419 = vadd.f32 %v1976, %v3418
        %v3420 = vpop.f32.mrb[0].mxu0
        %v3421 = vpop.f32.mrb[0].mxu0
        %v3422 = vadd.f32 %v1976, %v3421
        %v3423 = vpop.f32.mrb[0].mxu0
        %3424 = vmatprep.mubr.bf16.mxu0 0
        %3425 = vmatmul.mubr.bf16.gmra.mrb[0].mxu0 %v3262
        %v3426 = vpop.f32.mrb[0].mxu0
        %v3427 = vadd.f32 %v1976, %v3426
        %v3428 = vpop.f32.mrb[0].mxu0
        %v3429 = vpop.f32.mrb[0].mxu0
        %v3430 = vadd.f32 %v1976, %v3429
        %v3431 = vpop.f32.mrb[0].mxu0
        %3432 = vmatprep.mubr.bf16.mxu0 0
        %3433 = vmatmul.mubr.bf16.gmra.mrb[0].mxu0 %v3263
        %v3434 = vpop.f32.mrb[0].mxu0
        %v3435 = vadd.f32 %v1976, %v3434
        %v3436 = vpop.f32.mrb[0].mxu0
        %v3437 = vpop.f32.mrb[0].mxu0
        %v3438 = vadd.f32 %v1976, %v3437
        %v3439 = vpop.f32.mrb[0].mxu0
        %3440 = vmatprep.mubr.bf16.mxu0 0
        %3441 = vmatmul.mubr.bf16.gmra.mrb[0].mxu0 %v3264
        %v3442 = vpop.f32.mrb[0].mxu0
        %v3443 = vadd.f32 %v1976, %v3442
        %v3444 = vpop.f32.mrb[0].mxu0
        %v3445 = vpop.f32.mrb[0].mxu0
        %v3446 = vadd.f32 %v1976, %v3445
        %v3447 = vpop.f32.mrb[0].mxu0
        %3448 = vmatprep.mubr.bf16.mxu0 0
        %3449 = vmatmul.mubr.bf16.gmra.mrb[0].mxu0 %v3265
        %v3450 = vpop.f32.mrb[0].mxu0
        %v3451 = vadd.f32 %v1976, %v3450
        %v3452 = vpop.f32.mrb[0].mxu0
        %v3453 = vpop.f32.mrb[0].mxu0
        %v3454 = vadd.f32 %v1976, %v3453
        %v3455 = vpop.f32.mrb[0].mxu0
        %3456 = vmatprep.mubr.bf16.mxu0 0
        %3457 = vmatmul.mubr.bf16.gmra.mrb[0].mxu0 %v3266
        %v3458 = vpop.f32.mrb[0].mxu0
        %v3459 = vadd.f32 %v1976, %v3458
        %v3460 = vpop.f32.mrb[0].mxu0
        %v3461 = vpop.f32.mrb[0].mxu0
        %v3462 = vadd.f32 %v1976, %v3461
        %v3463 = vpop.f32.mrb[0].mxu0
        %3464 = vmatprep.mubr.bf16.mxu0 0
        %3465 = vmatmul.mubr.bf16.gmra.mrb[0].mxu0 %v3267
        %v3466 = vpop.f32.mrb[0].mxu0
        %v3467 = vadd.f32 %v1976, %v3466
        %v3468 = vpop.f32.mrb[0].mxu0
        %v3469 = vpop.f32.mrb[0].mxu0
        %v3470 = vadd.f32 %v1976, %v3469
        %v3471 = vpop.f32.mrb[0].mxu0
        %3472 = vmatprep.mubr.bf16.mxu0 0
        %3473 = vmatmul.mubr.bf16.gmra.mrb[0].mxu0 %v3268
        %v3474 = vpop.f32.mrb[0].mxu0
        %v3475 = vadd.f32 %v1976, %v3474
        %v3476 = vpop.f32.mrb[0].mxu0
        %v3477 = vpop.f32.mrb[0].mxu0
        %v3478 = vadd.f32 %v1976, %v3477
        %v3479 = vpop.f32.mrb[0].mxu0
        %3480 = vmatprep.mubr.bf16.mxu0 0
        %3481 = vmatmul.mubr.bf16.gmra.mrb[0].mxu0 %v3269
        %v3482 = vpop.f32.mrb[0].mxu0
        %v3483 = vadd.f32 %v1976, %v3482
        %v3484 = vpop.f32.mrb[0].mxu0
        %v3485 = vpop.f32.mrb[0].mxu0
        %v3486 = vadd.f32 %v1976, %v3485
        %v3487 = vpop.f32.mrb[0].mxu0
        %3488 = vmatprep.mubr.bf16.mxu0 0
        %3489 = vmatmul.mubr.bf16.gmra.mrb[0].mxu0 %v3270
        %v3490 = vpop.f32.mrb[0].mxu0
        %v3491 = vadd.f32 %v1976, %v3490
        %v3492 = vpop.f32.mrb[0].mxu0
        %v3493 = vpop.f32.mrb[0].mxu0
        %v3494 = vadd.f32 %v1976, %v3493
        %v3495 = vpop.f32.mrb[0].mxu0
        %3496 = vmatprep.mubr.bf16.mxu0 0
        %3497 = vmatmul.mubr.bf16.gmra.mrb[0].mxu0 %v3271
        %v3498 = vpop.f32.mrb[0].mxu0
        %v3499 = vadd.f32 %v1976, %v3498
        %v3500 = vpop.f32.mrb[0].mxu0
        %v3501 = vpop.f32.mrb[0].mxu0
        %v3502 = vadd.f32 %v1976, %v3501
        %v3503 = vpop.f32.mrb[0].mxu0
        %3504 = vmatprep.mubr.bf16.mxu0 0
        %3505 = vmatmul.mubr.bf16.gmra.mrb[0].mxu0 %v3272
        %v3506 = vpop.f32.mrb[0].mxu0
        %v3507 = vadd.f32 %v1976, %v3506
        %v3508 = vpop.f32.mrb[0].mxu0
        %v3509 = vpop.f32.mrb[0].mxu0
        %v3510 = vadd.f32 %v1976, %v3509
        %v3511 = vpop.f32.mrb[0].mxu0
        %3512 = vmatprep.mubr.bf16.mxu0 0
        %3513 = vmatmul.mubr.bf16.gmra.mrb[0].mxu0 %v3273
        %v3514 = vpop.f32.mrb[0].mxu0
        %v3515 = vadd.f32 %v1976, %v3514
        %v3516 = vpop.f32.mrb[0].mxu0
        %v3517 = vpop.f32.mrb[0].mxu0
        %v3518 = vadd.f32 %v1976, %v3517
        %v3519 = vpop.f32.mrb[0].mxu0
        %3520 = vmatprep.mubr.bf16.mxu0 0
        %3521 = vmatmul.mubr.bf16.gmra.mrb[0].mxu0 %v3274
        %v3522 = vpop.f32.mrb[0].mxu0
        %v3523 = vadd.f32 %v1976, %v3522
        %v3524 = vpop.f32.mrb[0].mxu0
        %v3525 = vpop.f32.mrb[0].mxu0
        %v3526 = vadd.f32 %v1976, %v3525
        %v3527 = vpop.f32.mrb[0].mxu0
        %3528 = vmatprep.mubr.bf16.mxu0 0
        %3529 = vmatmul.mubr.bf16.gmra.mrb[0].mxu0 %v3275
        %v3530 = vpop.f32.mrb[0].mxu0
        %v3531 = vadd.f32 %v1976, %v3530
        %v3532 = vpop.f32.mrb[0].mxu0
        %v3533 = vpop.f32.mrb[0].mxu0
        %v3534 = vadd.f32 %v1976, %v3533
        %v3535 = vpop.f32.mrb[0].mxu0
        %3536 = vmatprep.mubr.bf16.mxu0 0
        %3537 = vmatmul.mubr.bf16.gmra.mrb[0].mxu0 %v3276
        %v3538 = vpop.f32.mrb[0].mxu0
        %v3539 = vadd.f32 %v1976, %v3538
        %v3540 = vpop.f32.mrb[0].mxu0
        %v3541 = vpop.f32.mrb[0].mxu0
        %v3542 = vadd.f32 %v1976, %v3541
        %v3543 = vpop.f32.mrb[0].mxu0
        %3544 = vmatprep.mubr.bf16.mxu0 0
        %3545 = vmatmul.mubr.bf16.gmra.mrb[0].mxu0 %v3277
        %v3546 = vpop.f32.mrb[0].mxu0
        %v3547 = vadd.f32 %v1976, %v3546
        %v3548 = vpop.f32.mrb[0].mxu0
        %v3549 = vpop.f32.mrb[0].mxu0
        %v3550 = vadd.f32 %v1976, %v3549
        %v3551 = vpop.f32.mrb[0].mxu0
        %3552 = vmatprep.mubr.bf16.mxu0 0
        %3553 = vmatmul.mubr.bf16.gmra.mrb[0].mxu0 %v3278
        %v3554 = vpop.f32.mrb[0].mxu0
        %v3555 = vadd.f32 %v1976, %v3554
        %v3556 = vpop.f32.mrb[0].mxu0
        %v3557 = vpop.f32.mrb[0].mxu0
        %v3558 = vadd.f32 %v1976, %v3557
        %v3559 = vpop.f32.mrb[0].mxu0
        %3560 = vmatprep.mubr.bf16.mxu0 0
        %3561 = vmatmul.mubr.bf16.gmra.mrb[0].mxu0 %v3279
        %v3562 = vpop.f32.mrb[0].mxu0
        %v3563 = vadd.f32 %v1976, %v3562
        %v3564 = vpop.f32.mrb[0].mxu0
        %v3565 = vpop.f32.mrb[0].mxu0
        %v3566 = vadd.f32 %v1976, %v3565
        %v3567 = vpop.f32.mrb[0].mxu0
        %3568 = vdwg.mxu0
        %3569 = vst [vmem:[%s368] sm:$0xff] %v3315
        %3570 = vst [vmem:[%s368 + $0x8] sm:$0xff] %v3318
        %3571 = vst [vmem:[%s368 + $0x10] sm:$0xff] %v3323
        %3572 = vst [vmem:[%s368 + $0x18] sm:$0xff] %v3326
        %3573 = vst [vmem:[%s368 + $0x20] sm:$0xff] %v3331
        %3574 = vst [vmem:[%s368 + $0x28] sm:$0xff] %v3334
        %3575 = vst [vmem:[%s368 + $0x30] sm:$0xff] %v3339
        %3576 = vst [vmem:[%s368 + $0x38] sm:$0xff] %v3342
        %3577 = vst [vmem:[%s368 + $0x40] sm:$0xff] %v3347
        %3578 = vst [vmem:[%s368 + $0x48] sm:$0xff] %v3350
        %3579 = vst [vmem:[%s368 + $0x50] sm:$0xff] %v3355
        %3580 = vst [vmem:[%s368 + $0x58] sm:$0xff] %v3358
        %3581 = vst [vmem:[%s368 + $0x60] sm:$0xff] %v3363
        %3582 = vst [vmem:[%s368 + $0x68] sm:$0xff] %v3366
        %3583 = vst [vmem:[%s368 + $0x70] sm:$0xff] %v3371
        %3584 = vst [vmem:[%s368 + $0x78] sm:$0xff] %v3374
        %3585 = vst [vmem:[%s368 + $0x80] sm:$0xff] %v3379
        %3586 = vst [vmem:[%s368 + $0x88] sm:$0xff] %v3382
        %3587 = vst [vmem:[%s368 + $0x90] sm:$0xff] %v3387
        %3588 = vst [vmem:[%s368 + $0x98] sm:$0xff] %v3390
        %3589 = vst [vmem:[%s368 + $0xa0] sm:$0xff] %v3395
        %3590 = vst [vmem:[%s368 + $0xa8] sm:$0xff] %v3398
        %3591 = vst [vmem:[%s368 + $0xb0] sm:$0xff] %v3403
        %3592 = vst [vmem:[%s368 + $0xb8] sm:$0xff] %v3406
        %3593 = vst [vmem:[%s368 + $0xc0] sm:$0xff] %v3411
        %3594 = vst [vmem:[%s368 + $0xc8] sm:$0xff] %v3414
        %3595 = vst [vmem:[%s368 + $0xd0] sm:$0xff] %v3419
        %3596 = vst [vmem:[%s368 + $0xd8] sm:$0xff] %v3422
        %3597 = vst [vmem:[%s368 + $0xe0] sm:$0xff] %v3427
        %3598 = vst [vmem:[%s368 + $0xe8] sm:$0xff] %v3430
        %3599 = vst [vmem:[%s368 + $0xf0] sm:$0xff] %v3435
        %3600 = vst [vmem:[%s368 + $0xf8] sm:$0xff] %v3438
        %3601 = vst [vmem:[%s368 + $0x100] sm:$0xff] %v3443
        %3602 = vst [vmem:[%s368 + $0x108] sm:$0xff] %v3446
        %3603 = vst [vmem:[%s368 + $0x110] sm:$0xff] %v3451
        %3604 = vst [vmem:[%s368 + $0x118] sm:$0xff] %v3454
        %3605 = vst [vmem:[%s368 + $0x120] sm:$0xff] %v3459
        %3606 = vst [vmem:[%s368 + $0x128] sm:$0xff] %v3462
        %3607 = vst [vmem:[%s368 + $0x130] sm:$0xff] %v3467
        %3608 = vst [vmem:[%s368 + $0x138] sm:$0xff] %v3470
        %3609 = vst [vmem:[%s368 + $0x140] sm:$0xff] %v3475
        %3610 = vst [vmem:[%s368 + $0x148] sm:$0xff] %v3478
        %3611 = vst [vmem:[%s368 + $0x150] sm:$0xff] %v3483
        %3612 = vst [vmem:[%s368 + $0x158] sm:$0xff] %v3486
        %3613 = vst [vmem:[%s368 + $0x160] sm:$0xff] %v3491
        %3614 = vst [vmem:[%s368 + $0x168] sm:$0xff] %v3494
        %3615 = vst [vmem:[%s368 + $0x170] sm:$0xff] %v3499
        %3616 = vst [vmem:[%s368 + $0x178] sm:$0xff] %v3502
        %3617 = vst [vmem:[%s368 + $0x180] sm:$0xff] %v3507
        %3618 = vst [vmem:[%s368 + $0x188] sm:$0xff] %v3510
        %3619 = vst [vmem:[%s368 + $0x190] sm:$0xff] %v3515
        %3620 = vst [vmem:[%s368 + $0x198] sm:$0xff] %v3518
        %3621 = vst [vmem:[%s368 + $0x1a0] sm:$0xff] %v3523
        %3622 = vst [vmem:[%s368 + $0x1a8] sm:$0xff] %v3526
        %3623 = vst [vmem:[%s368 + $0x1b0] sm:$0xff] %v3531
        %3624 = vst [vmem:[%s368 + $0x1b8] sm:$0xff] %v3534
        %3625 = vst [vmem:[%s368 + $0x1c0] sm:$0xff] %v3539
        %3626 = vst [vmem:[%s368 + $0x1c8] sm:$0xff] %v3542
        %3627 = vst [vmem:[%s368 + $0x1d0] sm:$0xff] %v3547
        %3628 = vst [vmem:[%s368 + $0x1d8] sm:$0xff] %v3550
        %3629 = vst [vmem:[%s368 + $0x1e0] sm:$0xff] %v3555
        %3630 = vst [vmem:[%s368 + $0x1e8] sm:$0xff] %v3558
        %3631 = vst [vmem:[%s368 + $0x1f0] sm:$0xff] %v3563
        %3632 = vst [vmem:[%s368 + $0x1f8] sm:$0xff] %v3566
        %s3633 = sand.u32 %s194, 1
        %s3634 = scalar_lea.sflag [#allocation5], %s3633
        %s3635 = sand.u32 %s194, 1
        %s3636 = smul.addr %s3635, 512
        %s3637 = scalar_lea.vmem [#allocation11], %s3636
        // Predicated region
        $region65: #{tpu_custom_call.1} parent=47 // pred_check
          %p3638 = pneg %p204
        $region66: #{tpu_custom_call.1} parent=47 // pred_check_branch
          %3640 = sbr.rel (%p3638) target = $region68
        $region67: #{tpu_custom_call.1} parent=47 // pred_region
          %s3641 = smul.u32 4, %s29
          %s3643 = ssub.s32 8192, 8192
          %3644 = vsyncadd %s3634, %s3643
          %s3645 = smul.addr %s3641, 16
          %s3646 = smul.addr %s3645, 128
          %s3647 = scalar_lea.hbm %s7, %s3646
          %s3648 = sshll.u32 %s3637, 4
          %s3649 = int_to_ptr.vmem [resolvable:$true] %s3648
          %3654 = dma.vmem_to_hbm [thread:$0]  %s3649, 8192, %s3647, %s3634, 128, 128, 8
        $region68: #{tpu_custom_call.1} parent=47 // pred_fallthru
          _
      $region48: #{tpu_custom_call.1} parent=5 // pred_fallthru
        _
      %p3655 = scmp.le.s32.totalorder 2, %s24
      // Predicated region
      $region69: #{tpu_custom_call.1} parent=5 // pred_check
        %p3656 = pneg %p3655
      $region70: #{tpu_custom_call.1} parent=5 // pred_check_branch
        %3658 = sbr.rel (%p3656) target = $region72
      $region71: #{tpu_custom_call.1} parent=5 // pred_region
        %s3659 = ssub.s32 %s24, 2
        // Predicated region
        $region73: #{tpu_custom_call.1} parent=71 // pred_check
          %p3660 = pneg %p210
        $region74: #{tpu_custom_call.1} parent=71 // pred_check_branch
          %3662 = sbr.rel (%p3660) target = $region76
        $region75: #{tpu_custom_call.1} parent=71 // pred_region
          %s3663 = sand.u32 %s195, 1
          %s3664 = scalar_lea.sflag [#allocation5], %s3663
          %s3665 = sand.u32 %s195, 1
          %s3666 = smul.addr %s3665, 512
          %s3667 = scalar_lea.vmem [#allocation11], %s3666
          %3668 = dma.done %s3664, 8192
        $region76: #{tpu_custom_call.1} parent=71 // pred_fallthru
          _
      $region72: #{tpu_custom_call.1} parent=5 // pred_fallthru
        _
    $region6: #{tpu_custom_call.1} parent=1 // loop_footer
      %s28 = sadd.s32 1, %s24
    $region7: #{tpu_custom_call.1} parent=1 // loop_footer_branch
      %23 = sbr.rel target = $region3
    $region8: #{tpu_custom_call.1} parent=1 // loop_exit
      _
    %3669 = vsyncpa [#allocation4], 1
    %s3670 = scalar_lea.sflag [#allocation4], 1
    %3671 = vsyncpa %s3670, 1
    %3672 = vsyncpa [#allocation7], 1
    %s3673 = scalar_lea.sflag [#allocation7], 1
    %3674 = vsyncpa %s3673, 1
    %3675 = vsyncpa [#allocation10], 1
    %3676 = vsyncpa [#allocation5], 1
    %s3677 = scalar_lea.sflag [#allocation5], 1
    %3678 = vsyncpa %s3677, 1

</llo_original>
